<compile_context>
chip_gen: v7x
topology: tpu7x:2x2x1
jax: 0.10.0
libtpu: 0.0.40
codegen_flags: <defaults>
</compile_context>

<pallas_src>
import functools

import jax
import jax.numpy as jnp
import numpy as np
from jax.experimental import pallas as pl
from jax.experimental.pallas import tpu as pltpu


# ------------------------------- fused kernel --------------------------------

def _vit_fused_kernel(xp_ref, wpatch_ref, bpatch_ref, pos_ref,
                      head_mask_ref, win_mask_ref, seg_ones_ref,
                      ln1_g_ref, ln1_b_ref,
                      wq_ref, wk_ref, wv_ref, wproj_ref, bproj_ref,
                      ln2_g_ref, ln2_b_ref,
                      w1_ref, b1_ref, w2_ref, b2_ref,
                      norm_g_ref, norm_b_ref,
                      o_ref, *, depth, num_heads):
    f32 = jnp.float32
    bf16 = jnp.bfloat16

    def ln(x, g, b):
        mu = jnp.mean(x, axis=-1, keepdims=True)
        var = jnp.mean((x - mu) ** 2, axis=-1, keepdims=True)
        return (x - mu) * jax.lax.rsqrt(var + 1e-5) * g + b

    def mm(a, b):  # bf16 operands, f32 accumulation on the MXU
        return jnp.dot(a.astype(bf16), b.astype(bf16), preferred_element_type=f32)

    head_mask = head_mask_ref[...]   # (H*M, C): 1 where the column belongs to that head
    seg_ones = seg_ones_ref[...]     # (H*M, H*M): per-head segment-sum matrix

    # Patch embedding (Conv2d k=s=patch == per-patch matmul) + positional embedding.
    x = mm(xp_ref[...], wpatch_ref[...]) + bpatch_ref[...] + pos_ref[...]    # (M, C) f32

    for d in range(depth):
        # ---------------- shifted-window attention branch ----------------
        # Shift + window partition/reverse are folded into win_mask_ref[d], so
        # tokens stay in original order and no permutation matmuls are needed.
        xn = ln(x, ln1_g_ref[d], ln1_b_ref[d])
        q = mm(xn, wq_ref[d])                 # attention scale already folded into Wq
        k = mm(xn, wk_ref[d])
        v = mm(xn, wv_ref[d])
        # head-stacked K / V: row h*M + j carries head h of token j only.
        kst = jnp.concatenate([k] * num_heads, axis=0) * head_mask           # (H*M, C)
        vst = jnp.concatenate([v] * num_heads, axis=0) * head_mask           # (H*M, C)
        # all heads x all windows in one lane-dense score matmul
        s = jax.lax.dot_general(q.astype(bf16), kst.astype(bf16),
                                (((1,), (1,)), ((), ())),
                                preferred_element_type=f32)                   # (M, H*M)
        s = s + win_mask_ref[d]                       # 0 / -1e9 same-window mask
        s = s - jnp.max(s, axis=-1, keepdims=True)    # same shift per row -> softmax-exact
        p = jnp.exp(s)
        denom = jnp.dot(p, seg_ones, preferred_element_type=f32)              # per-head row sums
        a = p * pl.reciprocal(denom, approx=True)
        ctx = mm(a, vst)                                                      # (M, C)
        x = x + mm(ctx, wproj_ref[d]) + bproj_ref[d]  # residual on the pre-norm x

        # ---------------- MLP branch (torch: x = norm2(x); x = x + mlp(x)) ----
        xn2 = ln(x, ln2_g_ref[d], ln2_b_ref[d])
        h = jnp.maximum(mm(xn2, w1_ref[d]) + b1_ref[d], 0.0)
        x = xn2 + mm(h, w2_ref[d]) + b2_ref[d]

    o_ref[...] = ln(x, norm_g_ref[...], norm_b_ref[...])


# --------------------------- static constant builders ------------------------

def build_constants(B, Hp, Wp, C, num_heads, window_size, depth):
    # TODO(synk): H % ws != 0 padding path (unmasked zero-pad like the reference)
    #             is not implemented in the fused kernel.
    assert Hp % window_size == 0 and Wp % window_size == 0
    L = Hp * Wp
    M = B * L
    hd = C // num_heads
    HM = num_heads * M

    r = np.arange(HM)
    c = np.arange(C)
    head_mask = (r[:, None] // M == c[None, :] // hd).astype(np.float32)      # (HM, C)
    seg_ones = (r[:, None] // M == r[None, :] // M).astype(np.float32)        # (HM, HM)

    # Per-depth window masks in ORIGINAL token order: token i may attend token j
    # iff they land in the same window after the cyclic roll of that block.
    b_idx = np.arange(M) // L
    rr = (np.arange(M) % L) // Wp
    cc = (np.arange(M) % L) % Wp
    nWh, nWw = Hp // window_size, Wp // window_size
    win_masks = []
    for d in range(depth):
        shift = 0 if d % 2 == 0 else window_size // 2
        wi = ((rr - shift) % Hp) // window_size
        wj = ((cc - shift) % Wp) // window_size
        wid = (b_idx * nWh + wi) * nWw + wj                                   # unique per (b, window)
        same = wid[:, None] == wid[None, :]                                   # (M, M)
        win_masks.append(np.where(np.tile(same, (1, num_heads)),
                                  0.0, -1e9).astype(np.float32))              # (M, HM)
    win_mask = np.stack(win_masks)                                            # (depth, M, HM)

    return dict(head_mask=head_mask, win_mask=win_mask, seg_ones=seg_ones)


# ------------------------------ parameter packing -----------------------------

def pack_params(params, constants, B):
    blocks = params['blocks']
    bf16 = jnp.bfloat16

    def st(key_):
        return jnp.stack([blk[key_] for blk in blocks])

    E = params['patch_w'].shape[0]
    return {
        'wpatch': params['patch_w'].reshape(E, -1).T.astype(bf16),   # (Cin*p*p, E)
        'bpatch': params['patch_b'].reshape(1, E),
        'pos': jnp.tile(params['pos_embed'][0], (B, 1)),             # (B*L, E)
        'head_mask': jnp.asarray(constants['head_mask']),
        'win_mask': jnp.asarray(constants['win_mask']),
        'seg_ones': jnp.asarray(constants['seg_ones']),
        'ln1_g': st('ln1_g')[:, None, :], 'ln1_b': st('ln1_b')[:, None, :],
        'wq': st('wq').astype(bf16), 'wk': st('wk').astype(bf16),
        'wv': st('wv').astype(bf16),
        'wproj': st('wproj').astype(bf16), 'bproj': st('bproj')[:, None, :],
        'ln2_g': st('ln2_g')[:, None, :], 'ln2_b': st('ln2_b')[:, None, :],
        'w1': st('w1').astype(bf16), 'b1': st('b1')[:, None, :],
        'w2': st('w2').astype(bf16), 'b2': st('b2')[:, None, :],
        'norm_g': params['norm_g'].reshape(1, E),
        'norm_b': params['norm_b'].reshape(1, E),
    }


# ---------------------------------- wrapper -----------------------------------

def vision_transformer(x, packed, *, embed_dim, depth, num_heads, patch_size=32):
    B, Cin, H, W = x.shape
    Hp, Wp = H // patch_size, W // patch_size
    M = B * Hp * Wp

    # Patch extraction is pure layout plumbing -> wrapper (conv k=s=p == matmul).
    xp = x.reshape(B, Cin, Hp, patch_size, Wp, patch_size)
    xp = jnp.transpose(xp, (0, 2, 4, 1, 3, 5)).reshape(
        M, Cin * patch_size * patch_size).astype(jnp.bfloat16)

    operands = (
        xp, packed['wpatch'], packed['bpatch'], packed['pos'],
        packed['head_mask'], packed['win_mask'], packed['seg_ones'],
        packed['ln1_g'], packed['ln1_b'],
        packed['wq'], packed['wk'], packed['wv'], packed['wproj'], packed['bproj'],
        packed['ln2_g'], packed['ln2_b'],
        packed['w1'], packed['b1'], packed['w2'], packed['b2'],
        packed['norm_g'], packed['norm_b'],
    )
    out2d = pl.pallas_call(
        functools.partial(_vit_fused_kernel, depth=depth, num_heads=num_heads),
        out_shape=jax.ShapeDtypeStruct((M, embed_dim), jnp.float32),
        in_specs=[pl.BlockSpec(memory_space=pltpu.MemorySpace.VMEM)] * len(operands),
        out_specs=pl.BlockSpec(memory_space=pltpu.MemorySpace.VMEM),
    )(*operands)

    # NCHW output layout plumbing stays in the wrapper (kernel store stays dense).
    out = out2d.reshape(B, Hp * Wp, embed_dim)
    return jnp.transpose(out, (0, 2, 1)).reshape(B, embed_dim, Hp, Wp)


# --------------------------- deterministic parameters --------------------------

def init_params(key, in_channels, embed_dim, depth, num_heads, num_patches,
                patch_size=32, mlp_ratio=4.0):
    hd = embed_dim // num_heads
    scale = hd ** -0.5
    hidden = int(embed_dim * mlp_ratio)
    keys = jax.random.split(key, 4 + depth)

    def nrm(k, shape):
        return jax.random.normal(k, shape, jnp.float32) * 0.02

    params = {
        'patch_w': nrm(keys[0], (embed_dim, in_channels, patch_size, patch_size)),
        'patch_b': nrm(keys[1], (embed_dim,)),
        # torch module re-creates a zeros pos_embed when num_patches != 1024
        'pos_embed': jnp.zeros((1, num_patches, embed_dim), jnp.float32),
        'norm_g': jnp.ones((embed_dim,), jnp.float32),
        'norm_b': jnp.zeros((embed_dim,), jnp.float32),
        'blocks': [],
    }
    for i in range(depth):
        bk = jax.random.split(keys[4 + i], 8)
        wqkv = nrm(bk[0], (3 * embed_dim, embed_dim))        # torch layout (out, in)
        params['blocks'].append({
            'ln1_g': jnp.ones((embed_dim,), jnp.float32),
            'ln1_b': jnp.zeros((embed_dim,), jnp.float32),
            'ln2_g': jnp.ones((embed_dim,), jnp.float32),
            'ln2_b': jnp.zeros((embed_dim,), jnp.float32),
            'wq': wqkv[0:embed_dim].T * scale,               # scale folded into Wq
            'wk': wqkv[embed_dim:2 * embed_dim].T,
            'wv': wqkv[2 * embed_dim:3 * embed_dim].T,
            'wproj': nrm(bk[1], (embed_dim, embed_dim)).T,
            'bproj': nrm(bk[2], (embed_dim,)),
            'w1': nrm(bk[3], (hidden, embed_dim)).T,
            'b1': nrm(bk[4], (hidden,)),
            'w2': nrm(bk[5], (embed_dim, hidden)).T,
            'b2': nrm(bk[6], (embed_dim,)),
        })
    return params


# ------------------------------------ main -------------------------------------

if __name__ == "__main__":
    key = jax.random.PRNGKey(0)
    kx, kp = jax.random.split(key)

    B, Cin, H, W = 2, 4, 128, 128            # -> 4x4 patch grid, 16 tokens / image
    embed_dim, depth, num_heads = 32, 2, 4
    window_size, patch_size = 2, 32
    Hp, Wp = H // patch_size, W // patch_size

    x = jax.random.normal(kx, (B, Cin, H, W), jnp.float32)
    params = init_params(kp, Cin, embed_dim, depth, num_heads, Hp * Wp,
                         patch_size=patch_size, mlp_ratio=4.0)
    constants = build_constants(B, Hp, Wp, embed_dim, num_heads, window_size, depth)
    packed = pack_params(params, constants, B)

    fwd = jax.jit(functools.partial(
        vision_transformer, embed_dim=embed_dim, depth=depth,
        num_heads=num_heads, patch_size=patch_size))

    out = fwd(x, packed)
    jax.block_until_ready(out)
    assert out.shape == (B, embed_dim, Hp, Wp), out.shape
    assert bool(jnp.all(jnp.isfinite(out)))
    print("KERNEL_OK")
</pallas_src>

<mosaic_0001>
module attributes {stable_mosaic.version = 11 : i64} {
  func.func @_vit_fused_kernel(%arg0: memref<32x4096xbf16, #tpu.memory_space<vmem>>, %arg1: memref<4096x32xbf16, #tpu.memory_space<vmem>>, %arg2: memref<1x32xf32, #tpu.memory_space<vmem>>, %arg3: memref<32x32xf32, #tpu.memory_space<vmem>>, %arg4: memref<128x32xf32, #tpu.memory_space<vmem>>, %arg5: memref<2x32x128xf32, #tpu.memory_space<vmem>>, %arg6: memref<128x128xf32, #tpu.memory_space<vmem>>, %arg7: memref<2x1x32xf32, #tpu.memory_space<vmem>>, %arg8: memref<2x1x32xf32, #tpu.memory_space<vmem>>, %arg9: memref<2x32x32xbf16, #tpu.memory_space<vmem>>, %arg10: memref<2x32x32xbf16, #tpu.memory_space<vmem>>, %arg11: memref<2x32x32xbf16, #tpu.memory_space<vmem>>, %arg12: memref<2x32x32xbf16, #tpu.memory_space<vmem>>, %arg13: memref<2x1x32xf32, #tpu.memory_space<vmem>>, %arg14: memref<2x1x32xf32, #tpu.memory_space<vmem>>, %arg15: memref<2x1x32xf32, #tpu.memory_space<vmem>>, %arg16: memref<2x32x128xbf16, #tpu.memory_space<vmem>>, %arg17: memref<2x1x128xf32, #tpu.memory_space<vmem>>, %arg18: memref<2x128x32xbf16, #tpu.memory_space<vmem>>, %arg19: memref<2x1x32xf32, #tpu.memory_space<vmem>>, %arg20: memref<1x32xf32, #tpu.memory_space<vmem>>, %arg21: memref<1x32xf32, #tpu.memory_space<vmem>>, %arg22: memref<32x32xf32, #tpu.memory_space<vmem>>) attributes {dimension_semantics = [], scalar_prefetch = 0 : i64, scratch_operands = 0 : i64, tpu.core_type = #tpu.core_type<tc>} {
    %c0 = arith.constant 0 : index
    %c0_0 = arith.constant 0 : index
    %0 = vector.load %arg4[%c0, %c0_0] : memref<128x32xf32, #tpu.memory_space<vmem>>, vector<128x32xf32>
    %c0_1 = arith.constant 0 : index
    %c0_2 = arith.constant 0 : index
    %1 = vector.load %arg6[%c0_1, %c0_2] : memref<128x128xf32, #tpu.memory_space<vmem>>, vector<128x128xf32>
    %c0_3 = arith.constant 0 : index
    %c0_4 = arith.constant 0 : index
    %2 = vector.load %arg0[%c0_3, %c0_4] : memref<32x4096xbf16, #tpu.memory_space<vmem>>, vector<32x4096xbf16>
    %c0_5 = arith.constant 0 : index
    %c0_6 = arith.constant 0 : index
    %3 = vector.load %arg1[%c0_5, %c0_6] : memref<4096x32xbf16, #tpu.memory_space<vmem>>, vector<4096x32xbf16>
    %cst = arith.constant dense<0.000000e+00> : vector<32x32xf32>
    %4 = tpu.matmul %2, %3, %cst {dimension_numbers = #tpu.dot_dimension_numbers<[1], [0], [0], [1], [0, 0, 1, 1], [], []>} : vector<32x4096xbf16>, vector<4096x32xbf16>, vector<32x32xf32> -> vector<32x32xf32>
    %c0_7 = arith.constant 0 : index
    %c0_8 = arith.constant 0 : index
    %5 = vector.load %arg2[%c0_7, %c0_8] : memref<1x32xf32, #tpu.memory_space<vmem>>, vector<1x32xf32>
    %6 = vector.broadcast %5 : vector<1x32xf32> to vector<32x32xf32>
    %7 = arith.addf %4, %6 : vector<32x32xf32>
    %c0_9 = arith.constant 0 : index
    %c0_10 = arith.constant 0 : index
    %8 = vector.load %arg3[%c0_9, %c0_10] : memref<32x32xf32, #tpu.memory_space<vmem>>, vector<32x32xf32>
    %9 = arith.addf %7, %8 : vector<32x32xf32>
    %c0_11 = arith.constant 0 : index
    %c0_12 = arith.constant 0 : index
    %c0_13 = arith.constant 0 : index
    %10 = vector.load %arg7[%c0_11, %c0_12, %c0_13] : memref<2x1x32xf32, #tpu.memory_space<vmem>>, vector<1x1x32xf32>
    %11 = vector.shape_cast %10 : vector<1x1x32xf32> to vector<1x32xf32>
    %c0_14 = arith.constant 0 : index
    %c0_15 = arith.constant 0 : index
    %c0_16 = arith.constant 0 : index
    %12 = vector.load %arg8[%c0_14, %c0_15, %c0_16] : memref<2x1x32xf32, #tpu.memory_space<vmem>>, vector<1x1x32xf32>
    %13 = vector.shape_cast %12 : vector<1x1x32xf32> to vector<1x32xf32>
    %cst_17 = arith.constant dense<0.000000e+00> : vector<32xf32>
    %14 = vector.multi_reduction <add>, %9, %cst_17 [1] : vector<32x32xf32> to vector<32xf32>
    %15 = vector.shape_cast %14 : vector<32xf32> to vector<32x1xf32>
    %cst_18 = arith.constant 3.200000e+01 : f32
    %16 = vector.broadcast %cst_18 : f32 to vector<32x1xf32>
    %17 = arith.divf %15, %16 : vector<32x1xf32>
    %18 = vector.broadcast %17 : vector<32x1xf32> to vector<32x32xf32>
    %19 = arith.subf %9, %18 : vector<32x32xf32>
    %20 = arith.mulf %19, %19 : vector<32x32xf32>
    %cst_19 = arith.constant dense<0.000000e+00> : vector<32xf32>
    %21 = vector.multi_reduction <add>, %20, %cst_19 [1] : vector<32x32xf32> to vector<32xf32>
    %22 = vector.shape_cast %21 : vector<32xf32> to vector<32x1xf32>
    %cst_20 = arith.constant 3.200000e+01 : f32
    %23 = vector.broadcast %cst_20 : f32 to vector<32x1xf32>
    %24 = arith.divf %22, %23 : vector<32x1xf32>
    %25 = vector.broadcast %17 : vector<32x1xf32> to vector<32x32xf32>
    %26 = arith.subf %9, %25 : vector<32x32xf32>
    %cst_21 = arith.constant 9.99999974E-6 : f32
    %27 = vector.broadcast %cst_21 : f32 to vector<32x1xf32>
    %28 = arith.addf %24, %27 : vector<32x1xf32>
    %29 = math.rsqrt %28 : vector<32x1xf32>
    %30 = vector.broadcast %29 : vector<32x1xf32> to vector<32x32xf32>
    %31 = arith.mulf %26, %30 : vector<32x32xf32>
    %32 = vector.broadcast %11 : vector<1x32xf32> to vector<32x32xf32>
    %33 = arith.mulf %31, %32 : vector<32x32xf32>
    %34 = vector.broadcast %13 : vector<1x32xf32> to vector<32x32xf32>
    %35 = arith.addf %33, %34 : vector<32x32xf32>
    %c0_22 = arith.constant 0 : index
    %c0_23 = arith.constant 0 : index
    %c0_24 = arith.constant 0 : index
    %36 = vector.load %arg9[%c0_22, %c0_23, %c0_24] : memref<2x32x32xbf16, #tpu.memory_space<vmem>>, vector<1x32x32xbf16>
    %37 = vector.shape_cast %36 : vector<1x32x32xbf16> to vector<32x32xbf16>
    %38 = arith.truncf %35 : vector<32x32xf32> to vector<32x32xbf16>
    %cst_25 = arith.constant dense<0.000000e+00> : vector<32x32xf32>
    %39 = tpu.matmul %38, %37, %cst_25 {dimension_numbers = #tpu.dot_dimension_numbers<[1], [0], [0], [1], [0, 0, 1, 1], [], []>} : vector<32x32xbf16>, vector<32x32xbf16>, vector<32x32xf32> -> vector<32x32xf32>
    %c0_26 = arith.constant 0 : index
    %c0_27 = arith.constant 0 : index
    %c0_28 = arith.constant 0 : index
    %40 = vector.load %arg10[%c0_26, %c0_27, %c0_28] : memref<2x32x32xbf16, #tpu.memory_space<vmem>>, vector<1x32x32xbf16>
    %41 = vector.shape_cast %40 : vector<1x32x32xbf16> to vector<32x32xbf16>
    %42 = arith.truncf %35 : vector<32x32xf32> to vector<32x32xbf16>
    %cst_29 = arith.constant dense<0.000000e+00> : vector<32x32xf32>
    %43 = tpu.matmul %42, %41, %cst_29 {dimension_numbers = #tpu.dot_dimension_numbers<[1], [0], [0], [1], [0, 0, 1, 1], [], []>} : vector<32x32xbf16>, vector<32x32xbf16>, vector<32x32xf32> -> vector<32x32xf32>
    %c0_30 = arith.constant 0 : index
    %c0_31 = arith.constant 0 : index
    %c0_32 = arith.constant 0 : index
    %44 = vector.load %arg11[%c0_30, %c0_31, %c0_32] : memref<2x32x32xbf16, #tpu.memory_space<vmem>>, vector<1x32x32xbf16>
    %45 = vector.shape_cast %44 : vector<1x32x32xbf16> to vector<32x32xbf16>
    %46 = arith.truncf %35 : vector<32x32xf32> to vector<32x32xbf16>
    %cst_33 = arith.constant dense<0.000000e+00> : vector<32x32xf32>
    %47 = tpu.matmul %46, %45, %cst_33 {dimension_numbers = #tpu.dot_dimension_numbers<[1], [0], [0], [1], [0, 0, 1, 1], [], []>} : vector<32x32xbf16>, vector<32x32xbf16>, vector<32x32xf32> -> vector<32x32xf32>
    %48 = tpu.concatenate %43, %43, %43, %43 in 0 : vector<32x32xf32>, vector<32x32xf32>, vector<32x32xf32>, vector<32x32xf32> -> vector<128x32xf32>
    %49 = arith.mulf %48, %0 : vector<128x32xf32>
    %50 = tpu.concatenate %47, %47, %47, %47 in 0 : vector<32x32xf32>, vector<32x32xf32>, vector<32x32xf32>, vector<32x32xf32> -> vector<128x32xf32>
    %51 = arith.mulf %50, %0 : vector<128x32xf32>
    %52 = arith.truncf %39 : vector<32x32xf32> to vector<32x32xbf16>
    %53 = arith.truncf %49 : vector<128x32xf32> to vector<128x32xbf16>
    %cst_34 = arith.constant dense<0.000000e+00> : vector<32x128xf32>
    %54 = tpu.matmul %52, %53, %cst_34 {dimension_numbers = #tpu.dot_dimension_numbers<[1], [1], [0], [0], [0, 0, 1, 0], [], []>} : vector<32x32xbf16>, vector<128x32xbf16>, vector<32x128xf32> -> vector<32x128xf32>
    %c0_35 = arith.constant 0 : index
    %c0_36 = arith.constant 0 : index
    %c0_37 = arith.constant 0 : index
    %55 = vector.load %arg5[%c0_35, %c0_36, %c0_37] : memref<2x32x128xf32, #tpu.memory_space<vmem>>, vector<1x32x128xf32>
    %56 = vector.shape_cast %55 : vector<1x32x128xf32> to vector<32x128xf32>
    %57 = arith.addf %54, %56 : vector<32x128xf32>
    %cst_38 = arith.constant dense<0xFF800000> : vector<32xf32>
    %58 = vector.multi_reduction <maximumf>, %57, %cst_38 [1] : vector<32x128xf32> to vector<32xf32>
    %59 = vector.shape_cast %58 : vector<32xf32> to vector<32x1xf32>
    %60 = vector.broadcast %59 : vector<32x1xf32> to vector<32x128xf32>
    %61 = arith.subf %57, %60 : vector<32x128xf32>
    %62 = math.exp %61 : vector<32x128xf32>
    %cst_39 = arith.constant dense<0.000000e+00> : vector<32x128xf32>
    %63 = tpu.matmul %62, %1, %cst_39 {dimension_numbers = #tpu.dot_dimension_numbers<[1], [0], [0], [1], [0, 0, 1, 1], [], []>} : vector<32x128xf32>, vector<128x128xf32>, vector<32x128xf32> -> vector<32x128xf32>
    %64 = tpu.reciprocal %63 {approx = true} : vector<32x128xf32> -> vector<32x128xf32>
    %65 = arith.mulf %62, %64 : vector<32x128xf32>
    %66 = arith.truncf %65 : vector<32x128xf32> to vector<32x128xbf16>
    %67 = arith.truncf %51 : vector<128x32xf32> to vector<128x32xbf16>
    %cst_40 = arith.constant dense<0.000000e+00> : vector<32x32xf32>
    %68 = tpu.matmul %66, %67, %cst_40 {dimension_numbers = #tpu.dot_dimension_numbers<[1], [0], [0], [1], [0, 0, 1, 1], [], []>} : vector<32x128xbf16>, vector<128x32xbf16>, vector<32x32xf32> -> vector<32x32xf32>
    %c0_41 = arith.constant 0 : index
    %c0_42 = arith.constant 0 : index
    %c0_43 = arith.constant 0 : index
    %69 = vector.load %arg12[%c0_41, %c0_42, %c0_43] : memref<2x32x32xbf16, #tpu.memory_space<vmem>>, vector<1x32x32xbf16>
    %70 = vector.shape_cast %69 : vector<1x32x32xbf16> to vector<32x32xbf16>
    %71 = arith.truncf %68 : vector<32x32xf32> to vector<32x32xbf16>
    %cst_44 = arith.constant dense<0.000000e+00> : vector<32x32xf32>
    %72 = tpu.matmul %71, %70, %cst_44 {dimension_numbers = #tpu.dot_dimension_numbers<[1], [0], [0], [1], [0, 0, 1, 1], [], []>} : vector<32x32xbf16>, vector<32x32xbf16>, vector<32x32xf32> -> vector<32x32xf32>
    %73 = arith.addf %9, %72 : vector<32x32xf32>
    %c0_45 = arith.constant 0 : index
    %c0_46 = arith.constant 0 : index
    %c0_47 = arith.constant 0 : index
    %74 = vector.load %arg13[%c0_45, %c0_46, %c0_47] : memref<2x1x32xf32, #tpu.memory_space<vmem>>, vector<1x1x32xf32>
    %75 = vector.shape_cast %74 : vector<1x1x32xf32> to vector<1x32xf32>
    %76 = vector.broadcast %75 : vector<1x32xf32> to vector<32x32xf32>
    %77 = arith.addf %73, %76 : vector<32x32xf32>
    %c0_48 = arith.constant 0 : index
    %c0_49 = arith.constant 0 : index
    %c0_50 = arith.constant 0 : index
    %78 = vector.load %arg14[%c0_48, %c0_49, %c0_50] : memref<2x1x32xf32, #tpu.memory_space<vmem>>, vector<1x1x32xf32>
    %79 = vector.shape_cast %78 : vector<1x1x32xf32> to vector<1x32xf32>
    %c0_51 = arith.constant 0 : index
    %c0_52 = arith.constant 0 : index
    %c0_53 = arith.constant 0 : index
    %80 = vector.load %arg15[%c0_51, %c0_52, %c0_53] : memref<2x1x32xf32, #tpu.memory_space<vmem>>, vector<1x1x32xf32>
    %81 = vector.shape_cast %80 : vector<1x1x32xf32> to vector<1x32xf32>
    %cst_54 = arith.constant dense<0.000000e+00> : vector<32xf32>
    %82 = vector.multi_reduction <add>, %77, %cst_54 [1] : vector<32x32xf32> to vector<32xf32>
    %83 = vector.shape_cast %82 : vector<32xf32> to vector<32x1xf32>
    %cst_55 = arith.constant 3.200000e+01 : f32
    %84 = vector.broadcast %cst_55 : f32 to vector<32x1xf32>
    %85 = arith.divf %83, %84 : vector<32x1xf32>
    %86 = vector.broadcast %85 : vector<32x1xf32> to vector<32x32xf32>
    %87 = arith.subf %77, %86 : vector<32x32xf32>
    %88 = arith.mulf %87, %87 : vector<32x32xf32>
    %cst_56 = arith.constant dense<0.000000e+00> : vector<32xf32>
    %89 = vector.multi_reduction <add>, %88, %cst_56 [1] : vector<32x32xf32> to vector<32xf32>
    %90 = vector.shape_cast %89 : vector<32xf32> to vector<32x1xf32>
    %cst_57 = arith.constant 3.200000e+01 : f32
    %91 = vector.broadcast %cst_57 : f32 to vector<32x1xf32>
    %92 = arith.divf %90, %91 : vector<32x1xf32>
    %93 = vector.broadcast %85 : vector<32x1xf32> to vector<32x32xf32>
    %94 = arith.subf %77, %93 : vector<32x32xf32>
    %cst_58 = arith.constant 9.99999974E-6 : f32
    %95 = vector.broadcast %cst_58 : f32 to vector<32x1xf32>
    %96 = arith.addf %92, %95 : vector<32x1xf32>
    %97 = math.rsqrt %96 : vector<32x1xf32>
    %98 = vector.broadcast %97 : vector<32x1xf32> to vector<32x32xf32>
    %99 = arith.mulf %94, %98 : vector<32x32xf32>
    %100 = vector.broadcast %79 : vector<1x32xf32> to vector<32x32xf32>
    %101 = arith.mulf %99, %100 : vector<32x32xf32>
    %102 = vector.broadcast %81 : vector<1x32xf32> to vector<32x32xf32>
    %103 = arith.addf %101, %102 : vector<32x32xf32>
    %c0_59 = arith.constant 0 : index
    %c0_60 = arith.constant 0 : index
    %c0_61 = arith.constant 0 : index
    %104 = vector.load %arg16[%c0_59, %c0_60, %c0_61] : memref<2x32x128xbf16, #tpu.memory_space<vmem>>, vector<1x32x128xbf16>
    %105 = vector.shape_cast %104 : vector<1x32x128xbf16> to vector<32x128xbf16>
    %106 = arith.truncf %103 : vector<32x32xf32> to vector<32x32xbf16>
    %cst_62 = arith.constant dense<0.000000e+00> : vector<32x128xf32>
    %107 = tpu.matmul %106, %105, %cst_62 {dimension_numbers = #tpu.dot_dimension_numbers<[1], [0], [0], [1], [0, 0, 1, 1], [], []>} : vector<32x32xbf16>, vector<32x128xbf16>, vector<32x128xf32> -> vector<32x128xf32>
    %c0_63 = arith.constant 0 : index
    %c0_64 = arith.constant 0 : index
    %c0_65 = arith.constant 0 : index
    %108 = vector.load %arg17[%c0_63, %c0_64, %c0_65] : memref<2x1x128xf32, #tpu.memory_space<vmem>>, vector<1x1x128xf32>
    %109 = vector.shape_cast %108 : vector<1x1x128xf32> to vector<1x128xf32>
    %110 = vector.broadcast %109 : vector<1x128xf32> to vector<32x128xf32>
    %111 = arith.addf %107, %110 : vector<32x128xf32>
    %cst_66 = arith.constant 0.000000e+00 : f32
    %112 = vector.broadcast %cst_66 : f32 to vector<32x128xf32>
    %113 = arith.maximumf %111, %112 : vector<32x128xf32>
    %c0_67 = arith.constant 0 : index
    %c0_68 = arith.constant 0 : index
    %c0_69 = arith.constant 0 : index
    %114 = vector.load %arg18[%c0_67, %c0_68, %c0_69] : memref<2x128x32xbf16, #tpu.memory_space<vmem>>, vector<1x128x32xbf16>
    %115 = vector.shape_cast %114 : vector<1x128x32xbf16> to vector<128x32xbf16>
    %116 = arith.truncf %113 : vector<32x128xf32> to vector<32x128xbf16>
    %cst_70 = arith.constant dense<0.000000e+00> : vector<32x32xf32>
    %117 = tpu.matmul %116, %115, %cst_70 {dimension_numbers = #tpu.dot_dimension_numbers<[1], [0], [0], [1], [0, 0, 1, 1], [], []>} : vector<32x128xbf16>, vector<128x32xbf16>, vector<32x32xf32> -> vector<32x32xf32>
    %118 = arith.addf %103, %117 : vector<32x32xf32>
    %c0_71 = arith.constant 0 : index
    %c0_72 = arith.constant 0 : index
    %c0_73 = arith.constant 0 : index
    %119 = vector.load %arg19[%c0_71, %c0_72, %c0_73] : memref<2x1x32xf32, #tpu.memory_space<vmem>>, vector<1x1x32xf32>
    %120 = vector.shape_cast %119 : vector<1x1x32xf32> to vector<1x32xf32>
    %121 = vector.broadcast %120 : vector<1x32xf32> to vector<32x32xf32>
    %122 = arith.addf %118, %121 : vector<32x32xf32>
    %c1 = arith.constant 1 : index
    %c0_74 = arith.constant 0 : index
    %c0_75 = arith.constant 0 : index
    %123 = vector.load %arg7[%c1, %c0_74, %c0_75] : memref<2x1x32xf32, #tpu.memory_space<vmem>>, vector<1x1x32xf32>
    %124 = vector.shape_cast %123 : vector<1x1x32xf32> to vector<1x32xf32>
    %c1_76 = arith.constant 1 : index
    %c0_77 = arith.constant 0 : index
    %c0_78 = arith.constant 0 : index
    %125 = vector.load %arg8[%c1_76, %c0_77, %c0_78] : memref<2x1x32xf32, #tpu.memory_space<vmem>>, vector<1x1x32xf32>
    %126 = vector.shape_cast %125 : vector<1x1x32xf32> to vector<1x32xf32>
    %cst_79 = arith.constant dense<0.000000e+00> : vector<32xf32>
    %127 = vector.multi_reduction <add>, %122, %cst_79 [1] : vector<32x32xf32> to vector<32xf32>
    %128 = vector.shape_cast %127 : vector<32xf32> to vector<32x1xf32>
    %cst_80 = arith.constant 3.200000e+01 : f32
    %129 = vector.broadcast %cst_80 : f32 to vector<32x1xf32>
    %130 = arith.divf %128, %129 : vector<32x1xf32>
    %131 = vector.broadcast %130 : vector<32x1xf32> to vector<32x32xf32>
    %132 = arith.subf %122, %131 : vector<32x32xf32>
    %133 = arith.mulf %132, %132 : vector<32x32xf32>
    %cst_81 = arith.constant dense<0.000000e+00> : vector<32xf32>
    %134 = vector.multi_reduction <add>, %133, %cst_81 [1] : vector<32x32xf32> to vector<32xf32>
    %135 = vector.shape_cast %134 : vector<32xf32> to vector<32x1xf32>
    %cst_82 = arith.constant 3.200000e+01 : f32
    %136 = vector.broadcast %cst_82 : f32 to vector<32x1xf32>
    %137 = arith.divf %135, %136 : vector<32x1xf32>
    %138 = vector.broadcast %130 : vector<32x1xf32> to vector<32x32xf32>
    %139 = arith.subf %122, %138 : vector<32x32xf32>
    %cst_83 = arith.constant 9.99999974E-6 : f32
    %140 = vector.broadcast %cst_83 : f32 to vector<32x1xf32>
    %141 = arith.addf %137, %140 : vector<32x1xf32>
    %142 = math.rsqrt %141 : vector<32x1xf32>
    %143 = vector.broadcast %142 : vector<32x1xf32> to vector<32x32xf32>
    %144 = arith.mulf %139, %143 : vector<32x32xf32>
    %145 = vector.broadcast %124 : vector<1x32xf32> to vector<32x32xf32>
    %146 = arith.mulf %144, %145 : vector<32x32xf32>
    %147 = vector.broadcast %126 : vector<1x32xf32> to vector<32x32xf32>
    %148 = arith.addf %146, %147 : vector<32x32xf32>
    %c1_84 = arith.constant 1 : index
    %c0_85 = arith.constant 0 : index
    %c0_86 = arith.constant 0 : index
    %149 = vector.load %arg9[%c1_84, %c0_85, %c0_86] : memref<2x32x32xbf16, #tpu.memory_space<vmem>>, vector<1x32x32xbf16>
    %150 = vector.shape_cast %149 : vector<1x32x32xbf16> to vector<32x32xbf16>
    %151 = arith.truncf %148 : vector<32x32xf32> to vector<32x32xbf16>
    %cst_87 = arith.constant dense<0.000000e+00> : vector<32x32xf32>
    %152 = tpu.matmul %151, %150, %cst_87 {dimension_numbers = #tpu.dot_dimension_numbers<[1], [0], [0], [1], [0, 0, 1, 1], [], []>} : vector<32x32xbf16>, vector<32x32xbf16>, vector<32x32xf32> -> vector<32x32xf32>
    %c1_88 = arith.constant 1 : index
    %c0_89 = arith.constant 0 : index
    %c0_90 = arith.constant 0 : index
    %153 = vector.load %arg10[%c1_88, %c0_89, %c0_90] : memref<2x32x32xbf16, #tpu.memory_space<vmem>>, vector<1x32x32xbf16>
    %154 = vector.shape_cast %153 : vector<1x32x32xbf16> to vector<32x32xbf16>
    %155 = arith.truncf %148 : vector<32x32xf32> to vector<32x32xbf16>
    %cst_91 = arith.constant dense<0.000000e+00> : vector<32x32xf32>
    %156 = tpu.matmul %155, %154, %cst_91 {dimension_numbers = #tpu.dot_dimension_numbers<[1], [0], [0], [1], [0, 0, 1, 1], [], []>} : vector<32x32xbf16>, vector<32x32xbf16>, vector<32x32xf32> -> vector<32x32xf32>
    %c1_92 = arith.constant 1 : index
    %c0_93 = arith.constant 0 : index
    %c0_94 = arith.constant 0 : index
    %157 = vector.load %arg11[%c1_92, %c0_93, %c0_94] : memref<2x32x32xbf16, #tpu.memory_space<vmem>>, vector<1x32x32xbf16>
    %158 = vector.shape_cast %157 : vector<1x32x32xbf16> to vector<32x32xbf16>
    %159 = arith.truncf %148 : vector<32x32xf32> to vector<32x32xbf16>
    %cst_95 = arith.constant dense<0.000000e+00> : vector<32x32xf32>
    %160 = tpu.matmul %159, %158, %cst_95 {dimension_numbers = #tpu.dot_dimension_numbers<[1], [0], [0], [1], [0, 0, 1, 1], [], []>} : vector<32x32xbf16>, vector<32x32xbf16>, vector<32x32xf32> -> vector<32x32xf32>
    %161 = tpu.concatenate %156, %156, %156, %156 in 0 : vector<32x32xf32>, vector<32x32xf32>, vector<32x32xf32>, vector<32x32xf32> -> vector<128x32xf32>
    %162 = arith.mulf %161, %0 : vector<128x32xf32>
    %163 = tpu.concatenate %160, %160, %160, %160 in 0 : vector<32x32xf32>, vector<32x32xf32>, vector<32x32xf32>, vector<32x32xf32> -> vector<128x32xf32>
    %164 = arith.mulf %163, %0 : vector<128x32xf32>
    %165 = arith.truncf %152 : vector<32x32xf32> to vector<32x32xbf16>
    %166 = arith.truncf %162 : vector<128x32xf32> to vector<128x32xbf16>
    %cst_96 = arith.constant dense<0.000000e+00> : vector<32x128xf32>
    %167 = tpu.matmul %165, %166, %cst_96 {dimension_numbers = #tpu.dot_dimension_numbers<[1], [1], [0], [0], [0, 0, 1, 0], [], []>} : vector<32x32xbf16>, vector<128x32xbf16>, vector<32x128xf32> -> vector<32x128xf32>
    %c1_97 = arith.constant 1 : index
    %c0_98 = arith.constant 0 : index
    %c0_99 = arith.constant 0 : index
    %168 = vector.load %arg5[%c1_97, %c0_98, %c0_99] : memref<2x32x128xf32, #tpu.memory_space<vmem>>, vector<1x32x128xf32>
    %169 = vector.shape_cast %168 : vector<1x32x128xf32> to vector<32x128xf32>
    %170 = arith.addf %167, %169 : vector<32x128xf32>
    %cst_100 = arith.constant dense<0xFF800000> : vector<32xf32>
    %171 = vector.multi_reduction <maximumf>, %170, %cst_100 [1] : vector<32x128xf32> to vector<32xf32>
    %172 = vector.shape_cast %171 : vector<32xf32> to vector<32x1xf32>
    %173 = vector.broadcast %172 : vector<32x1xf32> to vector<32x128xf32>
    %174 = arith.subf %170, %173 : vector<32x128xf32>
    %175 = math.exp %174 : vector<32x128xf32>
    %cst_101 = arith.constant dense<0.000000e+00> : vector<32x128xf32>
    %176 = tpu.matmul %175, %1, %cst_101 {dimension_numbers = #tpu.dot_dimension_numbers<[1], [0], [0], [1], [0, 0, 1, 1], [], []>} : vector<32x128xf32>, vector<128x128xf32>, vector<32x128xf32> -> vector<32x128xf32>
    %177 = tpu.reciprocal %176 {approx = true} : vector<32x128xf32> -> vector<32x128xf32>
    %178 = arith.mulf %175, %177 : vector<32x128xf32>
    %179 = arith.truncf %178 : vector<32x128xf32> to vector<32x128xbf16>
    %180 = arith.truncf %164 : vector<128x32xf32> to vector<128x32xbf16>
    %cst_102 = arith.constant dense<0.000000e+00> : vector<32x32xf32>
    %181 = tpu.matmul %179, %180, %cst_102 {dimension_numbers = #tpu.dot_dimension_numbers<[1], [0], [0], [1], [0, 0, 1, 1], [], []>} : vector<32x128xbf16>, vector<128x32xbf16>, vector<32x32xf32> -> vector<32x32xf32>
    %c1_103 = arith.constant 1 : index
    %c0_104 = arith.constant 0 : index
    %c0_105 = arith.constant 0 : index
    %182 = vector.load %arg12[%c1_103, %c0_104, %c0_105] : memref<2x32x32xbf16, #tpu.memory_space<vmem>>, vector<1x32x32xbf16>
    %183 = vector.shape_cast %182 : vector<1x32x32xbf16> to vector<32x32xbf16>
    %184 = arith.truncf %181 : vector<32x32xf32> to vector<32x32xbf16>
    %cst_106 = arith.constant dense<0.000000e+00> : vector<32x32xf32>
    %185 = tpu.matmul %184, %183, %cst_106 {dimension_numbers = #tpu.dot_dimension_numbers<[1], [0], [0], [1], [0, 0, 1, 1], [], []>} : vector<32x32xbf16>, vector<32x32xbf16>, vector<32x32xf32> -> vector<32x32xf32>
    %186 = arith.addf %122, %185 : vector<32x32xf32>
    %c1_107 = arith.constant 1 : index
    %c0_108 = arith.constant 0 : index
    %c0_109 = arith.constant 0 : index
    %187 = vector.load %arg13[%c1_107, %c0_108, %c0_109] : memref<2x1x32xf32, #tpu.memory_space<vmem>>, vector<1x1x32xf32>
    %188 = vector.shape_cast %187 : vector<1x1x32xf32> to vector<1x32xf32>
    %189 = vector.broadcast %188 : vector<1x32xf32> to vector<32x32xf32>
    %190 = arith.addf %186, %189 : vector<32x32xf32>
    %c1_110 = arith.constant 1 : index
    %c0_111 = arith.constant 0 : index
    %c0_112 = arith.constant 0 : index
    %191 = vector.load %arg14[%c1_110, %c0_111, %c0_112] : memref<2x1x32xf32, #tpu.memory_space<vmem>>, vector<1x1x32xf32>
    %192 = vector.shape_cast %191 : vector<1x1x32xf32> to vector<1x32xf32>
    %c1_113 = arith.constant 1 : index
    %c0_114 = arith.constant 0 : index
    %c0_115 = arith.constant 0 : index
    %193 = vector.load %arg15[%c1_113, %c0_114, %c0_115] : memref<2x1x32xf32, #tpu.memory_space<vmem>>, vector<1x1x32xf32>
    %194 = vector.shape_cast %193 : vector<1x1x32xf32> to vector<1x32xf32>
    %cst_116 = arith.constant dense<0.000000e+00> : vector<32xf32>
    %195 = vector.multi_reduction <add>, %190, %cst_116 [1] : vector<32x32xf32> to vector<32xf32>
    %196 = vector.shape_cast %195 : vector<32xf32> to vector<32x1xf32>
    %cst_117 = arith.constant 3.200000e+01 : f32
    %197 = vector.broadcast %cst_117 : f32 to vector<32x1xf32>
    %198 = arith.divf %196, %197 : vector<32x1xf32>
    %199 = vector.broadcast %198 : vector<32x1xf32> to vector<32x32xf32>
    %200 = arith.subf %190, %199 : vector<32x32xf32>
    %201 = arith.mulf %200, %200 : vector<32x32xf32>
    %cst_118 = arith.constant dense<0.000000e+00> : vector<32xf32>
    %202 = vector.multi_reduction <add>, %201, %cst_118 [1] : vector<32x32xf32> to vector<32xf32>
    %203 = vector.shape_cast %202 : vector<32xf32> to vector<32x1xf32>
    %cst_119 = arith.constant 3.200000e+01 : f32
    %204 = vector.broadcast %cst_119 : f32 to vector<32x1xf32>
    %205 = arith.divf %203, %204 : vector<32x1xf32>
    %206 = vector.broadcast %198 : vector<32x1xf32> to vector<32x32xf32>
    %207 = arith.subf %190, %206 : vector<32x32xf32>
    %cst_120 = arith.constant 9.99999974E-6 : f32
    %208 = vector.broadcast %cst_120 : f32 to vector<32x1xf32>
    %209 = arith.addf %205, %208 : vector<32x1xf32>
    %210 = math.rsqrt %209 : vector<32x1xf32>
    %211 = vector.broadcast %210 : vector<32x1xf32> to vector<32x32xf32>
    %212 = arith.mulf %207, %211 : vector<32x32xf32>
    %213 = vector.broadcast %192 : vector<1x32xf32> to vector<32x32xf32>
    %214 = arith.mulf %212, %213 : vector<32x32xf32>
    %215 = vector.broadcast %194 : vector<1x32xf32> to vector<32x32xf32>
    %216 = arith.addf %214, %215 : vector<32x32xf32>
    %c1_121 = arith.constant 1 : index
    %c0_122 = arith.constant 0 : index
    %c0_123 = arith.constant 0 : index
    %217 = vector.load %arg16[%c1_121, %c0_122, %c0_123] : memref<2x32x128xbf16, #tpu.memory_space<vmem>>, vector<1x32x128xbf16>
    %218 = vector.shape_cast %217 : vector<1x32x128xbf16> to vector<32x128xbf16>
    %219 = arith.truncf %216 : vector<32x32xf32> to vector<32x32xbf16>
    %cst_124 = arith.constant dense<0.000000e+00> : vector<32x128xf32>
    %220 = tpu.matmul %219, %218, %cst_124 {dimension_numbers = #tpu.dot_dimension_numbers<[1], [0], [0], [1], [0, 0, 1, 1], [], []>} : vector<32x32xbf16>, vector<32x128xbf16>, vector<32x128xf32> -> vector<32x128xf32>
    %c1_125 = arith.constant 1 : index
    %c0_126 = arith.constant 0 : index
    %c0_127 = arith.constant 0 : index
    %221 = vector.load %arg17[%c1_125, %c0_126, %c0_127] : memref<2x1x128xf32, #tpu.memory_space<vmem>>, vector<1x1x128xf32>
    %222 = vector.shape_cast %221 : vector<1x1x128xf32> to vector<1x128xf32>
    %223 = vector.broadcast %222 : vector<1x128xf32> to vector<32x128xf32>
    %224 = arith.addf %220, %223 : vector<32x128xf32>
    %cst_128 = arith.constant 0.000000e+00 : f32
    %225 = vector.broadcast %cst_128 : f32 to vector<32x128xf32>
    %226 = arith.maximumf %224, %225 : vector<32x128xf32>
    %c1_129 = arith.constant 1 : index
    %c0_130 = arith.constant 0 : index
    %c0_131 = arith.constant 0 : index
    %227 = vector.load %arg18[%c1_129, %c0_130, %c0_131] : memref<2x128x32xbf16, #tpu.memory_space<vmem>>, vector<1x128x32xbf16>
    %228 = vector.shape_cast %227 : vector<1x128x32xbf16> to vector<128x32xbf16>
    %229 = arith.truncf %226 : vector<32x128xf32> to vector<32x128xbf16>
    %cst_132 = arith.constant dense<0.000000e+00> : vector<32x32xf32>
    %230 = tpu.matmul %229, %228, %cst_132 {dimension_numbers = #tpu.dot_dimension_numbers<[1], [0], [0], [1], [0, 0, 1, 1], [], []>} : vector<32x128xbf16>, vector<128x32xbf16>, vector<32x32xf32> -> vector<32x32xf32>
    %231 = arith.addf %216, %230 : vector<32x32xf32>
    %c1_133 = arith.constant 1 : index
    %c0_134 = arith.constant 0 : index
    %c0_135 = arith.constant 0 : index
    %232 = vector.load %arg19[%c1_133, %c0_134, %c0_135] : memref<2x1x32xf32, #tpu.memory_space<vmem>>, vector<1x1x32xf32>
    %233 = vector.shape_cast %232 : vector<1x1x32xf32> to vector<1x32xf32>
    %234 = vector.broadcast %233 : vector<1x32xf32> to vector<32x32xf32>
    %235 = arith.addf %231, %234 : vector<32x32xf32>
    %c0_136 = arith.constant 0 : index
    %c0_137 = arith.constant 0 : index
    %236 = vector.load %arg20[%c0_136, %c0_137] : memref<1x32xf32, #tpu.memory_space<vmem>>, vector<1x32xf32>
    %c0_138 = arith.constant 0 : index
    %c0_139 = arith.constant 0 : index
    %237 = vector.load %arg21[%c0_138, %c0_139] : memref<1x32xf32, #tpu.memory_space<vmem>>, vector<1x32xf32>
    %cst_140 = arith.constant dense<0.000000e+00> : vector<32xf32>
    %238 = vector.multi_reduction <add>, %235, %cst_140 [1] : vector<32x32xf32> to vector<32xf32>
    %239 = vector.shape_cast %238 : vector<32xf32> to vector<32x1xf32>
    %cst_141 = arith.constant 3.200000e+01 : f32
    %240 = vector.broadcast %cst_141 : f32 to vector<32x1xf32>
    %241 = arith.divf %239, %240 : vector<32x1xf32>
    %242 = vector.broadcast %241 : vector<32x1xf32> to vector<32x32xf32>
    %243 = arith.subf %235, %242 : vector<32x32xf32>
    %244 = arith.mulf %243, %243 : vector<32x32xf32>
    %cst_142 = arith.constant dense<0.000000e+00> : vector<32xf32>
    %245 = vector.multi_reduction <add>, %244, %cst_142 [1] : vector<32x32xf32> to vector<32xf32>
    %246 = vector.shape_cast %245 : vector<32xf32> to vector<32x1xf32>
    %cst_143 = arith.constant 3.200000e+01 : f32
    %247 = vector.broadcast %cst_143 : f32 to vector<32x1xf32>
    %248 = arith.divf %246, %247 : vector<32x1xf32>
    %249 = vector.broadcast %241 : vector<32x1xf32> to vector<32x32xf32>
    %250 = arith.subf %235, %249 : vector<32x32xf32>
    %cst_144 = arith.constant 9.99999974E-6 : f32
    %251 = vector.broadcast %cst_144 : f32 to vector<32x1xf32>
    %252 = arith.addf %248, %251 : vector<32x1xf32>
    %253 = math.rsqrt %252 : vector<32x1xf32>
    %254 = vector.broadcast %253 : vector<32x1xf32> to vector<32x32xf32>
    %255 = arith.mulf %250, %254 : vector<32x32xf32>
    %256 = vector.broadcast %236 : vector<1x32xf32> to vector<32x32xf32>
    %257 = arith.mulf %255, %256 : vector<32x32xf32>
    %258 = vector.broadcast %237 : vector<1x32xf32> to vector<32x32xf32>
    %259 = arith.addf %257, %258 : vector<32x32xf32>
    %c0_145 = arith.constant 0 : index
    %c0_146 = arith.constant 0 : index
    %260 = vector.load %arg22[%c0_145, %c0_146] : memref<32x32xf32, #tpu.memory_space<vmem>>, vector<32x32xf32>
    tpu.vector_store %arg22[%c0_145, %c0_146], %259 {strides = array<i32>} : memref<32x32xf32, #tpu.memory_space<vmem>>, vector<32x32xf32>,
    return
  }
}

</mosaic_0001>

<llo_original>
// kernel: vision_transformer.1
$region0: #{vision_transformer.1}
  #allocation0 [shape = 'u32[]', space=smem, size = 0x4, offset = 0x4, fixed_abs, tag = 'smem constant byte address 0x4 - core index']
  #allocation1 [shape = 'u32[144,128]{1,0:T(1,128)}', space=vmem, size = 0x12000, scoped, tag = 'internal scratch']
  %s0 = inlined_call_operand.vmem [shape: bf16[32,4096], index: 0, kind: input, shape index: {}]
  %s1 = inlined_call_operand.vmem [shape: bf16[4096,32], index: 1, kind: input, shape index: {}]
  %s2 = inlined_call_operand.vmem [shape: f32[1,32], index: 2, kind: input, shape index: {}]
  %s3 = inlined_call_operand.vmem [shape: f32[32,32], index: 3, kind: input, shape index: {}]
  %s4 = inlined_call_operand.vmem [shape: f32[128,32], index: 4, kind: input, shape index: {}]
  %s5 = inlined_call_operand.vmem [shape: f32[2,32,128], index: 5, kind: input, shape index: {}]
  %s6 = inlined_call_operand.vmem [shape: f32[128,128], index: 6, kind: input, shape index: {}]
  %s7 = inlined_call_operand.vmem [shape: f32[2,1,32], index: 7, kind: input, shape index: {}]
  %s8 = inlined_call_operand.vmem [shape: f32[2,1,32], index: 8, kind: input, shape index: {}]
  %s9 = inlined_call_operand.vmem [shape: bf16[2,32,32], index: 9, kind: input, shape index: {}]
  %s10 = inlined_call_operand.vmem [shape: bf16[2,32,32], index: 10, kind: input, shape index: {}]
  %s11 = inlined_call_operand.vmem [shape: bf16[2,32,32], index: 11, kind: input, shape index: {}]
  %s12 = inlined_call_operand.vmem [shape: bf16[2,32,32], index: 12, kind: input, shape index: {}]
  %s13 = inlined_call_operand.vmem [shape: f32[2,1,32], index: 13, kind: input, shape index: {}]
  %s14 = inlined_call_operand.vmem [shape: f32[2,1,32], index: 14, kind: input, shape index: {}]
  %s15 = inlined_call_operand.vmem [shape: f32[2,1,32], index: 15, kind: input, shape index: {}]
  %s16 = inlined_call_operand.vmem [shape: bf16[2,32,128], index: 16, kind: input, shape index: {}]
  %s17 = inlined_call_operand.vmem [shape: f32[2,1,128], index: 17, kind: input, shape index: {}]
  %s18 = inlined_call_operand.vmem [shape: bf16[2,128,32], index: 18, kind: input, shape index: {}]
  %s19 = inlined_call_operand.vmem [shape: f32[2,1,32], index: 19, kind: input, shape index: {}]
  %s20 = inlined_call_operand.vmem [shape: f32[1,32], index: 20, kind: input, shape index: {}]
  %s21 = inlined_call_operand.vmem [shape: f32[1,32], index: 21, kind: input, shape index: {}]
  %s22 = inlined_call_operand.hbm [shape: f32[32,32], index: 22, kind: output, shape index: {}]
  %s23 = sld [smem:[#allocation0]]
  $region98: #{vision_transformer.1} parent=0
    _
  %s25 = ssub.s32 1, %s23
  %s26 = scalar_select 0, %s25, %s23
  $region1: #{vision_transformer.1} parent=0
    #allocation2 [shape = 'u8[16384]{0}', space=vmem, size = 0x4000, scoped, tag = 'output window, operand 0, single buffered']
    #allocation3 [shape = 's32[1]{0}', space=sflag, size = 0x4, scoped, tag = 'scoped memory for vision_transformer.1']
    %27 = vsyncpa [#allocation3], 0
    // Predicated region
    $region2: #{vision_transformer.1} parent=1 // pred_check
      _
    $region3: #{vision_transformer.1} parent=1 // pred_check_branch
      %29 = sbr.rel (0) target = $region5
    $region4: #{vision_transformer.1} parent=1 // pred_region
      _
    $region5: #{vision_transformer.1} parent=1 // pred_fallthru
      _
    // Predicated region
    $region6: #{vision_transformer.1} parent=1 // pred_check
      _
    $region7: #{vision_transformer.1} parent=1 // pred_check_branch
      %31 = sbr.rel (0) target = $region9
    $region8: #{vision_transformer.1} parent=1 // pred_region
      _
    $region9: #{vision_transformer.1} parent=1 // pred_fallthru
      _
    // Predicated region
    $region10: #{vision_transformer.1} parent=1 // pred_check
      _
    $region11: #{vision_transformer.1} parent=1 // pred_check_branch
      %33 = sbr.rel (0) target = $region13
    $region12: #{vision_transformer.1} parent=1 // pred_region
      _
    $region13: #{vision_transformer.1} parent=1 // pred_fallthru
      _
    // Predicated region
    $region14: #{vision_transformer.1} parent=1 // pred_check
      _
    $region15: #{vision_transformer.1} parent=1 // pred_check_branch
      %35 = sbr.rel (0) target = $region17
    $region16: #{vision_transformer.1} parent=1 // pred_region
      _
    $region17: #{vision_transformer.1} parent=1 // pred_fallthru
      _
    // Predicated region
    $region18: #{vision_transformer.1} parent=1 // pred_check
      _
    $region19: #{vision_transformer.1} parent=1 // pred_check_branch
      %37 = sbr.rel (0) target = $region21
    $region20: #{vision_transformer.1} parent=1 // pred_region
      _
    $region21: #{vision_transformer.1} parent=1 // pred_fallthru
      _
    // Predicated region
    $region22: #{vision_transformer.1} parent=1 // pred_check
      _
    $region23: #{vision_transformer.1} parent=1 // pred_check_branch
      %39 = sbr.rel (0) target = $region25
    $region24: #{vision_transformer.1} parent=1 // pred_region
      _
    $region25: #{vision_transformer.1} parent=1 // pred_fallthru
      _
    // Predicated region
    $region26: #{vision_transformer.1} parent=1 // pred_check
      _
    $region27: #{vision_transformer.1} parent=1 // pred_check_branch
      %41 = sbr.rel (0) target = $region29
    $region28: #{vision_transformer.1} parent=1 // pred_region
      _
    $region29: #{vision_transformer.1} parent=1 // pred_fallthru
      _
    // Predicated region
    $region30: #{vision_transformer.1} parent=1 // pred_check
      _
    $region31: #{vision_transformer.1} parent=1 // pred_check_branch
      %43 = sbr.rel (0) target = $region33
    $region32: #{vision_transformer.1} parent=1 // pred_region
      _
    $region33: #{vision_transformer.1} parent=1 // pred_fallthru
      _
    // Predicated region
    $region34: #{vision_transformer.1} parent=1 // pred_check
      _
    $region35: #{vision_transformer.1} parent=1 // pred_check_branch
      %45 = sbr.rel (0) target = $region37
    $region36: #{vision_transformer.1} parent=1 // pred_region
      _
    $region37: #{vision_transformer.1} parent=1 // pred_fallthru
      _
    // Predicated region
    $region38: #{vision_transformer.1} parent=1 // pred_check
      _
    $region39: #{vision_transformer.1} parent=1 // pred_check_branch
      %47 = sbr.rel (0) target = $region41
    $region40: #{vision_transformer.1} parent=1 // pred_region
      _
    $region41: #{vision_transformer.1} parent=1 // pred_fallthru
      _
    // Predicated region
    $region42: #{vision_transformer.1} parent=1 // pred_check
      _
    $region43: #{vision_transformer.1} parent=1 // pred_check_branch
      %49 = sbr.rel (0) target = $region45
    $region44: #{vision_transformer.1} parent=1 // pred_region
      _
    $region45: #{vision_transformer.1} parent=1 // pred_fallthru
      _
    // Predicated region
    $region46: #{vision_transformer.1} parent=1 // pred_check
      _
    $region47: #{vision_transformer.1} parent=1 // pred_check_branch
      %51 = sbr.rel (0) target = $region49
    $region48: #{vision_transformer.1} parent=1 // pred_region
      _
    $region49: #{vision_transformer.1} parent=1 // pred_fallthru
      _
    // Predicated region
    $region50: #{vision_transformer.1} parent=1 // pred_check
      _
    $region51: #{vision_transformer.1} parent=1 // pred_check_branch
      %53 = sbr.rel (0) target = $region53
    $region52: #{vision_transformer.1} parent=1 // pred_region
      _
    $region53: #{vision_transformer.1} parent=1 // pred_fallthru
      _
    // Predicated region
    $region54: #{vision_transformer.1} parent=1 // pred_check
      _
    $region55: #{vision_transformer.1} parent=1 // pred_check_branch
      %55 = sbr.rel (0) target = $region57
    $region56: #{vision_transformer.1} parent=1 // pred_region
      _
    $region57: #{vision_transformer.1} parent=1 // pred_fallthru
      _
    // Predicated region
    $region58: #{vision_transformer.1} parent=1 // pred_check
      _
    $region59: #{vision_transformer.1} parent=1 // pred_check_branch
      %57 = sbr.rel (0) target = $region61
    $region60: #{vision_transformer.1} parent=1 // pred_region
      _
    $region61: #{vision_transformer.1} parent=1 // pred_fallthru
      _
    // Predicated region
    $region62: #{vision_transformer.1} parent=1 // pred_check
      _
    $region63: #{vision_transformer.1} parent=1 // pred_check_branch
      %59 = sbr.rel (0) target = $region65
    $region64: #{vision_transformer.1} parent=1 // pred_region
      _
    $region65: #{vision_transformer.1} parent=1 // pred_fallthru
      _
    // Predicated region
    $region66: #{vision_transformer.1} parent=1 // pred_check
      _
    $region67: #{vision_transformer.1} parent=1 // pred_check_branch
      %61 = sbr.rel (0) target = $region69
    $region68: #{vision_transformer.1} parent=1 // pred_region
      _
    $region69: #{vision_transformer.1} parent=1 // pred_fallthru
      _
    // Predicated region
    $region70: #{vision_transformer.1} parent=1 // pred_check
      _
    $region71: #{vision_transformer.1} parent=1 // pred_check_branch
      %63 = sbr.rel (0) target = $region73
    $region72: #{vision_transformer.1} parent=1 // pred_region
      _
    $region73: #{vision_transformer.1} parent=1 // pred_fallthru
      _
    // Predicated region
    $region74: #{vision_transformer.1} parent=1 // pred_check
      _
    $region75: #{vision_transformer.1} parent=1 // pred_check_branch
      %65 = sbr.rel (0) target = $region77
    $region76: #{vision_transformer.1} parent=1 // pred_region
      _
    $region77: #{vision_transformer.1} parent=1 // pred_fallthru
      _
    // Predicated region
    $region78: #{vision_transformer.1} parent=1 // pred_check
      _
    $region79: #{vision_transformer.1} parent=1 // pred_check_branch
      %67 = sbr.rel (0) target = $region81
    $region80: #{vision_transformer.1} parent=1 // pred_region
      _
    $region81: #{vision_transformer.1} parent=1 // pred_fallthru
      _
    // Predicated region
    $region82: #{vision_transformer.1} parent=1 // pred_check
      _
    $region83: #{vision_transformer.1} parent=1 // pred_check_branch
      %69 = sbr.rel (0) target = $region85
    $region84: #{vision_transformer.1} parent=1 // pred_region
      _
    $region85: #{vision_transformer.1} parent=1 // pred_fallthru
      _
    // Predicated region
    $region86: #{vision_transformer.1} parent=1 // pred_check
      _
    $region87: #{vision_transformer.1} parent=1 // pred_check_branch
      %71 = sbr.rel (0) target = $region89
    $region88: #{vision_transformer.1} parent=1 // pred_region
      _
    $region89: #{vision_transformer.1} parent=1 // pred_fallthru
      _
    %v73 = vld [vmem:[%s4] sm:$0xff]
    %v74 = vld [vmem:[%s4 + $0x8] sm:$0xff]
    %v75 = vld [vmem:[%s4 + $0x10] sm:$0xff]
    %v76 = vld [vmem:[%s4 + $0x18] sm:$0xff]
    %v77 = vld [vmem:[%s4 + $0x20] sm:$0xff]
    %v78 = vld [vmem:[%s4 + $0x28] sm:$0xff]
    %v79 = vld [vmem:[%s4 + $0x30] sm:$0xff]
    %v80 = vld [vmem:[%s4 + $0x38] sm:$0xff]
    %v81 = vld [vmem:[%s4 + $0x40] sm:$0xff]
    %v82 = vld [vmem:[%s4 + $0x48] sm:$0xff]
    %v83 = vld [vmem:[%s4 + $0x50] sm:$0xff]
    %v84 = vld [vmem:[%s4 + $0x58] sm:$0xff]
    %v85 = vld [vmem:[%s4 + $0x60] sm:$0xff]
    %v86 = vld [vmem:[%s4 + $0x68] sm:$0xff]
    %v87 = vld [vmem:[%s4 + $0x70] sm:$0xff]
    %v88 = vld [vmem:[%s4 + $0x78] sm:$0xff]
    %v89 = vld [vmem:[%s6] sm:$0xff]
    %v90 = vld [vmem:[%s6 + $0x8] sm:$0xff]
    %v91 = vld [vmem:[%s6 + $0x10] sm:$0xff]
    %v92 = vld [vmem:[%s6 + $0x18] sm:$0xff]
    %v93 = vld [vmem:[%s6 + $0x20] sm:$0xff]
    %v94 = vld [vmem:[%s6 + $0x28] sm:$0xff]
    %v95 = vld [vmem:[%s6 + $0x30] sm:$0xff]
    %v96 = vld [vmem:[%s6 + $0x38] sm:$0xff]
    %v97 = vld [vmem:[%s6 + $0x40] sm:$0xff]
    %v98 = vld [vmem:[%s6 + $0x48] sm:$0xff]
    %v99 = vld [vmem:[%s6 + $0x50] sm:$0xff]
    %v100 = vld [vmem:[%s6 + $0x58] sm:$0xff]
    %v101 = vld [vmem:[%s6 + $0x60] sm:$0xff]
    %v102 = vld [vmem:[%s6 + $0x68] sm:$0xff]
    %v103 = vld [vmem:[%s6 + $0x70] sm:$0xff]
    %v104 = vld [vmem:[%s6 + $0x78] sm:$0xff]
    %v105 = vld [vmem:[%s0] sm:$0xff]
    %v106 = vld [vmem:[%s0 + $0x8] sm:$0xff]
    %v107 = vld [vmem:[%s0 + $0x10] sm:$0xff]
    %v108 = vld [vmem:[%s0 + $0x18] sm:$0xff]
    %v109 = vld [vmem:[%s0 + $0x20] sm:$0xff]
    %v110 = vld [vmem:[%s0 + $0x28] sm:$0xff]
    %v111 = vld [vmem:[%s0 + $0x30] sm:$0xff]
    %v112 = vld [vmem:[%s0 + $0x38] sm:$0xff]
    %v113 = vld [vmem:[%s0 + $0x40] sm:$0xff]
    %v114 = vld [vmem:[%s0 + $0x48] sm:$0xff]
    %v115 = vld [vmem:[%s0 + $0x50] sm:$0xff]
    %v116 = vld [vmem:[%s0 + $0x58] sm:$0xff]
    %v117 = vld [vmem:[%s0 + $0x60] sm:$0xff]
    %v118 = vld [vmem:[%s0 + $0x68] sm:$0xff]
    %v119 = vld [vmem:[%s0 + $0x70] sm:$0xff]
    %v120 = vld [vmem:[%s0 + $0x78] sm:$0xff]
    %v121 = vld [vmem:[%s0 + $0x80] sm:$0xff]
    %v122 = vld [vmem:[%s0 + $0x88] sm:$0xff]
    %v123 = vld [vmem:[%s0 + $0x90] sm:$0xff]
    %v124 = vld [vmem:[%s0 + $0x98] sm:$0xff]
    %v125 = vld [vmem:[%s0 + $0xa0] sm:$0xff]
    %v126 = vld [vmem:[%s0 + $0xa8] sm:$0xff]
    %v127 = vld [vmem:[%s0 + $0xb0] sm:$0xff]
    %v128 = vld [vmem:[%s0 + $0xb8] sm:$0xff]
    %v129 = vld [vmem:[%s0 + $0xc0] sm:$0xff]
    %v130 = vld [vmem:[%s0 + $0xc8] sm:$0xff]
    %v131 = vld [vmem:[%s0 + $0xd0] sm:$0xff]
    %v132 = vld [vmem:[%s0 + $0xd8] sm:$0xff]
    %v133 = vld [vmem:[%s0 + $0xe0] sm:$0xff]
    %v134 = vld [vmem:[%s0 + $0xe8] sm:$0xff]
    %v135 = vld [vmem:[%s0 + $0xf0] sm:$0xff]
    %v136 = vld [vmem:[%s0 + $0xf8] sm:$0xff]
    %v137 = vld [vmem:[%s0 + $0x100] sm:$0xff]
    %v138 = vld [vmem:[%s0 + $0x108] sm:$0xff]
    %v139 = vld [vmem:[%s0 + $0x110] sm:$0xff]
    %v140 = vld [vmem:[%s0 + $0x118] sm:$0xff]
    %v141 = vld [vmem:[%s0 + $0x120] sm:$0xff]
    %v142 = vld [vmem:[%s0 + $0x128] sm:$0xff]
    %v143 = vld [vmem:[%s0 + $0x130] sm:$0xff]
    %v144 = vld [vmem:[%s0 + $0x138] sm:$0xff]
    %v145 = vld [vmem:[%s0 + $0x140] sm:$0xff]
    %v146 = vld [vmem:[%s0 + $0x148] sm:$0xff]
    %v147 = vld [vmem:[%s0 + $0x150] sm:$0xff]
    %v148 = vld [vmem:[%s0 + $0x158] sm:$0xff]
    %v149 = vld [vmem:[%s0 + $0x160] sm:$0xff]
    %v150 = vld [vmem:[%s0 + $0x168] sm:$0xff]
    %v151 = vld [vmem:[%s0 + $0x170] sm:$0xff]
    %v152 = vld [vmem:[%s0 + $0x178] sm:$0xff]
    %v153 = vld [vmem:[%s0 + $0x180] sm:$0xff]
    %v154 = vld [vmem:[%s0 + $0x188] sm:$0xff]
    %v155 = vld [vmem:[%s0 + $0x190] sm:$0xff]
    %v156 = vld [vmem:[%s0 + $0x198] sm:$0xff]
    %v157 = vld [vmem:[%s0 + $0x1a0] sm:$0xff]
    %v158 = vld [vmem:[%s0 + $0x1a8] sm:$0xff]
    %v159 = vld [vmem:[%s0 + $0x1b0] sm:$0xff]
    %v160 = vld [vmem:[%s0 + $0x1b8] sm:$0xff]
    %v161 = vld [vmem:[%s0 + $0x1c0] sm:$0xff]
    %v162 = vld [vmem:[%s0 + $0x1c8] sm:$0xff]
    %v163 = vld [vmem:[%s0 + $0x1d0] sm:$0xff]
    %v164 = vld [vmem:[%s0 + $0x1d8] sm:$0xff]
    %v165 = vld [vmem:[%s0 + $0x1e0] sm:$0xff]
    %v166 = vld [vmem:[%s0 + $0x1e8] sm:$0xff]
    %v167 = vld [vmem:[%s0 + $0x1f0] sm:$0xff]
    %v168 = vld [vmem:[%s0 + $0x1f8] sm:$0xff]
    %v169 = vld [vmem:[%s1] sm:$0xf]
    %v170 = vld [vmem:[%s1 + $0x4] sm:$0xf]
    %v171 = vld [vmem:[%s1 + $0x8] sm:$0xf]
    %v172 = vld [vmem:[%s1 + $0xc] sm:$0xf]
    %v173 = vld [vmem:[%s1 + $0x10] sm:$0xf]
    %v174 = vld [vmem:[%s1 + $0x14] sm:$0xf]
    %v175 = vld [vmem:[%s1 + $0x18] sm:$0xf]
    %v176 = vld [vmem:[%s1 + $0x1c] sm:$0xf]
    %v177 = vld [vmem:[%s1 + $0x20] sm:$0xf]
    %v178 = vld [vmem:[%s1 + $0x24] sm:$0xf]
    %v179 = vld [vmem:[%s1 + $0x28] sm:$0xf]
    %v180 = vld [vmem:[%s1 + $0x2c] sm:$0xf]
    %v181 = vld [vmem:[%s1 + $0x30] sm:$0xf]
    %v182 = vld [vmem:[%s1 + $0x34] sm:$0xf]
    %v183 = vld [vmem:[%s1 + $0x38] sm:$0xf]
    %v184 = vld [vmem:[%s1 + $0x3c] sm:$0xf]
    %v185 = vld [vmem:[%s1 + $0x40] sm:$0xf]
    %v186 = vld [vmem:[%s1 + $0x44] sm:$0xf]
    %v187 = vld [vmem:[%s1 + $0x48] sm:$0xf]
    %v188 = vld [vmem:[%s1 + $0x4c] sm:$0xf]
    %v189 = vld [vmem:[%s1 + $0x50] sm:$0xf]
    %v190 = vld [vmem:[%s1 + $0x54] sm:$0xf]
    %v191 = vld [vmem:[%s1 + $0x58] sm:$0xf]
    %v192 = vld [vmem:[%s1 + $0x5c] sm:$0xf]
    %v193 = vld [vmem:[%s1 + $0x60] sm:$0xf]
    %v194 = vld [vmem:[%s1 + $0x64] sm:$0xf]
    %v195 = vld [vmem:[%s1 + $0x68] sm:$0xf]
    %v196 = vld [vmem:[%s1 + $0x6c] sm:$0xf]
    %v197 = vld [vmem:[%s1 + $0x70] sm:$0xf]
    %v198 = vld [vmem:[%s1 + $0x74] sm:$0xf]
    %v199 = vld [vmem:[%s1 + $0x78] sm:$0xf]
    %v200 = vld [vmem:[%s1 + $0x7c] sm:$0xf]
    %v201 = vld [vmem:[%s1 + $0x80] sm:$0xf]
    %v202 = vld [vmem:[%s1 + $0x84] sm:$0xf]
    %v203 = vld [vmem:[%s1 + $0x88] sm:$0xf]
    %v204 = vld [vmem:[%s1 + $0x8c] sm:$0xf]
    %v205 = vld [vmem:[%s1 + $0x90] sm:$0xf]
    %v206 = vld [vmem:[%s1 + $0x94] sm:$0xf]
    %v207 = vld [vmem:[%s1 + $0x98] sm:$0xf]
    %v208 = vld [vmem:[%s1 + $0x9c] sm:$0xf]
    %v209 = vld [vmem:[%s1 + $0xa0] sm:$0xf]
    %v210 = vld [vmem:[%s1 + $0xa4] sm:$0xf]
    %v211 = vld [vmem:[%s1 + $0xa8] sm:$0xf]
    %v212 = vld [vmem:[%s1 + $0xac] sm:$0xf]
    %v213 = vld [vmem:[%s1 + $0xb0] sm:$0xf]
    %v214 = vld [vmem:[%s1 + $0xb4] sm:$0xf]
    %v215 = vld [vmem:[%s1 + $0xb8] sm:$0xf]
    %v216 = vld [vmem:[%s1 + $0xbc] sm:$0xf]
    %v217 = vld [vmem:[%s1 + $0xc0] sm:$0xf]
    %v218 = vld [vmem:[%s1 + $0xc4] sm:$0xf]
    %v219 = vld [vmem:[%s1 + $0xc8] sm:$0xf]
    %v220 = vld [vmem:[%s1 + $0xcc] sm:$0xf]
    %v221 = vld [vmem:[%s1 + $0xd0] sm:$0xf]
    %v222 = vld [vmem:[%s1 + $0xd4] sm:$0xf]
    %v223 = vld [vmem:[%s1 + $0xd8] sm:$0xf]
    %v224 = vld [vmem:[%s1 + $0xdc] sm:$0xf]
    %v225 = vld [vmem:[%s1 + $0xe0] sm:$0xf]
    %v226 = vld [vmem:[%s1 + $0xe4] sm:$0xf]
    %v227 = vld [vmem:[%s1 + $0xe8] sm:$0xf]
    %v228 = vld [vmem:[%s1 + $0xec] sm:$0xf]
    %v229 = vld [vmem:[%s1 + $0xf0] sm:$0xf]
    %v230 = vld [vmem:[%s1 + $0xf4] sm:$0xf]
    %v231 = vld [vmem:[%s1 + $0xf8] sm:$0xf]
    %v232 = vld [vmem:[%s1 + $0xfc] sm:$0xf]
    %v233 = vld [vmem:[%s1 + $0x100] sm:$0xf]
    %v234 = vld [vmem:[%s1 + $0x104] sm:$0xf]
    %v235 = vld [vmem:[%s1 + $0x108] sm:$0xf]
    %v236 = vld [vmem:[%s1 + $0x10c] sm:$0xf]
    %v237 = vld [vmem:[%s1 + $0x110] sm:$0xf]
    %v238 = vld [vmem:[%s1 + $0x114] sm:$0xf]
    %v239 = vld [vmem:[%s1 + $0x118] sm:$0xf]
    %v240 = vld [vmem:[%s1 + $0x11c] sm:$0xf]
    %v241 = vld [vmem:[%s1 + $0x120] sm:$0xf]
    %v242 = vld [vmem:[%s1 + $0x124] sm:$0xf]
    %v243 = vld [vmem:[%s1 + $0x128] sm:$0xf]
    %v244 = vld [vmem:[%s1 + $0x12c] sm:$0xf]
    %v245 = vld [vmem:[%s1 + $0x130] sm:$0xf]
    %v246 = vld [vmem:[%s1 + $0x134] sm:$0xf]
    %v247 = vld [vmem:[%s1 + $0x138] sm:$0xf]
    %v248 = vld [vmem:[%s1 + $0x13c] sm:$0xf]
    %v249 = vld [vmem:[%s1 + $0x140] sm:$0xf]
    %v250 = vld [vmem:[%s1 + $0x144] sm:$0xf]
    %v251 = vld [vmem:[%s1 + $0x148] sm:$0xf]
    %v252 = vld [vmem:[%s1 + $0x14c] sm:$0xf]
    %v253 = vld [vmem:[%s1 + $0x150] sm:$0xf]
    %v254 = vld [vmem:[%s1 + $0x154] sm:$0xf]
    %v255 = vld [vmem:[%s1 + $0x158] sm:$0xf]
    %v256 = vld [vmem:[%s1 + $0x15c] sm:$0xf]
    %v257 = vld [vmem:[%s1 + $0x160] sm:$0xf]
    %v258 = vld [vmem:[%s1 + $0x164] sm:$0xf]
    %v259 = vld [vmem:[%s1 + $0x168] sm:$0xf]
    %v260 = vld [vmem:[%s1 + $0x16c] sm:$0xf]
    %v261 = vld [vmem:[%s1 + $0x170] sm:$0xf]
    %v262 = vld [vmem:[%s1 + $0x174] sm:$0xf]
    %v263 = vld [vmem:[%s1 + $0x178] sm:$0xf]
    %v264 = vld [vmem:[%s1 + $0x17c] sm:$0xf]
    %v265 = vld [vmem:[%s1 + $0x180] sm:$0xf]
    %v266 = vld [vmem:[%s1 + $0x184] sm:$0xf]
    %v267 = vld [vmem:[%s1 + $0x188] sm:$0xf]
    %v268 = vld [vmem:[%s1 + $0x18c] sm:$0xf]
    %v269 = vld [vmem:[%s1 + $0x190] sm:$0xf]
    %v270 = vld [vmem:[%s1 + $0x194] sm:$0xf]
    %v271 = vld [vmem:[%s1 + $0x198] sm:$0xf]
    %v272 = vld [vmem:[%s1 + $0x19c] sm:$0xf]
    %v273 = vld [vmem:[%s1 + $0x1a0] sm:$0xf]
    %v274 = vld [vmem:[%s1 + $0x1a4] sm:$0xf]
    %v275 = vld [vmem:[%s1 + $0x1a8] sm:$0xf]
    %v276 = vld [vmem:[%s1 + $0x1ac] sm:$0xf]
    %v277 = vld [vmem:[%s1 + $0x1b0] sm:$0xf]
    %v278 = vld [vmem:[%s1 + $0x1b4] sm:$0xf]
    %v279 = vld [vmem:[%s1 + $0x1b8] sm:$0xf]
    %v280 = vld [vmem:[%s1 + $0x1bc] sm:$0xf]
    %v281 = vld [vmem:[%s1 + $0x1c0] sm:$0xf]
    %v282 = vld [vmem:[%s1 + $0x1c4] sm:$0xf]
    %v283 = vld [vmem:[%s1 + $0x1c8] sm:$0xf]
    %v284 = vld [vmem:[%s1 + $0x1cc] sm:$0xf]
    %v285 = vld [vmem:[%s1 + $0x1d0] sm:$0xf]
    %v286 = vld [vmem:[%s1 + $0x1d4] sm:$0xf]
    %v287 = vld [vmem:[%s1 + $0x1d8] sm:$0xf]
    %v288 = vld [vmem:[%s1 + $0x1dc] sm:$0xf]
    %v289 = vld [vmem:[%s1 + $0x1e0] sm:$0xf]
    %v290 = vld [vmem:[%s1 + $0x1e4] sm:$0xf]
    %v291 = vld [vmem:[%s1 + $0x1e8] sm:$0xf]
    %v292 = vld [vmem:[%s1 + $0x1ec] sm:$0xf]
    %v293 = vld [vmem:[%s1 + $0x1f0] sm:$0xf]
    %v294 = vld [vmem:[%s1 + $0x1f4] sm:$0xf]
    %v295 = vld [vmem:[%s1 + $0x1f8] sm:$0xf]
    %v296 = vld [vmem:[%s1 + $0x1fc] sm:$0xf]
    %v297 = vld [vmem:[%s1 + $0x200] sm:$0xf]
    %v298 = vld [vmem:[%s1 + $0x204] sm:$0xf]
    %v299 = vld [vmem:[%s1 + $0x208] sm:$0xf]
    %v300 = vld [vmem:[%s1 + $0x20c] sm:$0xf]
    %v301 = vld [vmem:[%s1 + $0x210] sm:$0xf]
    %v302 = vld [vmem:[%s1 + $0x214] sm:$0xf]
    %v303 = vld [vmem:[%s1 + $0x218] sm:$0xf]
    %v304 = vld [vmem:[%s1 + $0x21c] sm:$0xf]
    %v305 = vld [vmem:[%s1 + $0x220] sm:$0xf]
    %v306 = vld [vmem:[%s1 + $0x224] sm:$0xf]
    %v307 = vld [vmem:[%s1 + $0x228] sm:$0xf]
    %v308 = vld [vmem:[%s1 + $0x22c] sm:$0xf]
    %v309 = vld [vmem:[%s1 + $0x230] sm:$0xf]
    %v310 = vld [vmem:[%s1 + $0x234] sm:$0xf]
    %v311 = vld [vmem:[%s1 + $0x238] sm:$0xf]
    %v312 = vld [vmem:[%s1 + $0x23c] sm:$0xf]
    %v313 = vld [vmem:[%s1 + $0x240] sm:$0xf]
    %v314 = vld [vmem:[%s1 + $0x244] sm:$0xf]
    %v315 = vld [vmem:[%s1 + $0x248] sm:$0xf]
    %v316 = vld [vmem:[%s1 + $0x24c] sm:$0xf]
    %v317 = vld [vmem:[%s1 + $0x250] sm:$0xf]
    %v318 = vld [vmem:[%s1 + $0x254] sm:$0xf]
    %v319 = vld [vmem:[%s1 + $0x258] sm:$0xf]
    %v320 = vld [vmem:[%s1 + $0x25c] sm:$0xf]
    %v321 = vld [vmem:[%s1 + $0x260] sm:$0xf]
    %v322 = vld [vmem:[%s1 + $0x264] sm:$0xf]
    %v323 = vld [vmem:[%s1 + $0x268] sm:$0xf]
    %v324 = vld [vmem:[%s1 + $0x26c] sm:$0xf]
    %v325 = vld [vmem:[%s1 + $0x270] sm:$0xf]
    %v326 = vld [vmem:[%s1 + $0x274] sm:$0xf]
    %v327 = vld [vmem:[%s1 + $0x278] sm:$0xf]
    %v328 = vld [vmem:[%s1 + $0x27c] sm:$0xf]
    %v329 = vld [vmem:[%s1 + $0x280] sm:$0xf]
    %v330 = vld [vmem:[%s1 + $0x284] sm:$0xf]
    %v331 = vld [vmem:[%s1 + $0x288] sm:$0xf]
    %v332 = vld [vmem:[%s1 + $0x28c] sm:$0xf]
    %v333 = vld [vmem:[%s1 + $0x290] sm:$0xf]
    %v334 = vld [vmem:[%s1 + $0x294] sm:$0xf]
    %v335 = vld [vmem:[%s1 + $0x298] sm:$0xf]
    %v336 = vld [vmem:[%s1 + $0x29c] sm:$0xf]
    %v337 = vld [vmem:[%s1 + $0x2a0] sm:$0xf]
    %v338 = vld [vmem:[%s1 + $0x2a4] sm:$0xf]
    %v339 = vld [vmem:[%s1 + $0x2a8] sm:$0xf]
    %v340 = vld [vmem:[%s1 + $0x2ac] sm:$0xf]
    %v341 = vld [vmem:[%s1 + $0x2b0] sm:$0xf]
    %v342 = vld [vmem:[%s1 + $0x2b4] sm:$0xf]
    %v343 = vld [vmem:[%s1 + $0x2b8] sm:$0xf]
    %v344 = vld [vmem:[%s1 + $0x2bc] sm:$0xf]
    %v345 = vld [vmem:[%s1 + $0x2c0] sm:$0xf]
    %v346 = vld [vmem:[%s1 + $0x2c4] sm:$0xf]
    %v347 = vld [vmem:[%s1 + $0x2c8] sm:$0xf]
    %v348 = vld [vmem:[%s1 + $0x2cc] sm:$0xf]
    %v349 = vld [vmem:[%s1 + $0x2d0] sm:$0xf]
    %v350 = vld [vmem:[%s1 + $0x2d4] sm:$0xf]
    %v351 = vld [vmem:[%s1 + $0x2d8] sm:$0xf]
    %v352 = vld [vmem:[%s1 + $0x2dc] sm:$0xf]
    %v353 = vld [vmem:[%s1 + $0x2e0] sm:$0xf]
    %v354 = vld [vmem:[%s1 + $0x2e4] sm:$0xf]
    %v355 = vld [vmem:[%s1 + $0x2e8] sm:$0xf]
    %v356 = vld [vmem:[%s1 + $0x2ec] sm:$0xf]
    %v357 = vld [vmem:[%s1 + $0x2f0] sm:$0xf]
    %v358 = vld [vmem:[%s1 + $0x2f4] sm:$0xf]
    %v359 = vld [vmem:[%s1 + $0x2f8] sm:$0xf]
    %v360 = vld [vmem:[%s1 + $0x2fc] sm:$0xf]
    %v361 = vld [vmem:[%s1 + $0x300] sm:$0xf]
    %v362 = vld [vmem:[%s1 + $0x304] sm:$0xf]
    %v363 = vld [vmem:[%s1 + $0x308] sm:$0xf]
    %v364 = vld [vmem:[%s1 + $0x30c] sm:$0xf]
    %v365 = vld [vmem:[%s1 + $0x310] sm:$0xf]
    %v366 = vld [vmem:[%s1 + $0x314] sm:$0xf]
    %v367 = vld [vmem:[%s1 + $0x318] sm:$0xf]
    %v368 = vld [vmem:[%s1 + $0x31c] sm:$0xf]
    %v369 = vld [vmem:[%s1 + $0x320] sm:$0xf]
    %v370 = vld [vmem:[%s1 + $0x324] sm:$0xf]
    %v371 = vld [vmem:[%s1 + $0x328] sm:$0xf]
    %v372 = vld [vmem:[%s1 + $0x32c] sm:$0xf]
    %v373 = vld [vmem:[%s1 + $0x330] sm:$0xf]
    %v374 = vld [vmem:[%s1 + $0x334] sm:$0xf]
    %v375 = vld [vmem:[%s1 + $0x338] sm:$0xf]
    %v376 = vld [vmem:[%s1 + $0x33c] sm:$0xf]
    %v377 = vld [vmem:[%s1 + $0x340] sm:$0xf]
    %v378 = vld [vmem:[%s1 + $0x344] sm:$0xf]
    %v379 = vld [vmem:[%s1 + $0x348] sm:$0xf]
    %v380 = vld [vmem:[%s1 + $0x34c] sm:$0xf]
    %v381 = vld [vmem:[%s1 + $0x350] sm:$0xf]
    %v382 = vld [vmem:[%s1 + $0x354] sm:$0xf]
    %v383 = vld [vmem:[%s1 + $0x358] sm:$0xf]
    %v384 = vld [vmem:[%s1 + $0x35c] sm:$0xf]
    %v385 = vld [vmem:[%s1 + $0x360] sm:$0xf]
    %v386 = vld [vmem:[%s1 + $0x364] sm:$0xf]
    %v387 = vld [vmem:[%s1 + $0x368] sm:$0xf]
    %v388 = vld [vmem:[%s1 + $0x36c] sm:$0xf]
    %v389 = vld [vmem:[%s1 + $0x370] sm:$0xf]
    %v390 = vld [vmem:[%s1 + $0x374] sm:$0xf]
    %v391 = vld [vmem:[%s1 + $0x378] sm:$0xf]
    %v392 = vld [vmem:[%s1 + $0x37c] sm:$0xf]
    %v393 = vld [vmem:[%s1 + $0x380] sm:$0xf]
    %v394 = vld [vmem:[%s1 + $0x384] sm:$0xf]
    %v395 = vld [vmem:[%s1 + $0x388] sm:$0xf]
    %v396 = vld [vmem:[%s1 + $0x38c] sm:$0xf]
    %v397 = vld [vmem:[%s1 + $0x390] sm:$0xf]
    %v398 = vld [vmem:[%s1 + $0x394] sm:$0xf]
    %v399 = vld [vmem:[%s1 + $0x398] sm:$0xf]
    %v400 = vld [vmem:[%s1 + $0x39c] sm:$0xf]
    %v401 = vld [vmem:[%s1 + $0x3a0] sm:$0xf]
    %v402 = vld [vmem:[%s1 + $0x3a4] sm:$0xf]
    %v403 = vld [vmem:[%s1 + $0x3a8] sm:$0xf]
    %v404 = vld [vmem:[%s1 + $0x3ac] sm:$0xf]
    %v405 = vld [vmem:[%s1 + $0x3b0] sm:$0xf]
    %v406 = vld [vmem:[%s1 + $0x3b4] sm:$0xf]
    %v407 = vld [vmem:[%s1 + $0x3b8] sm:$0xf]
    %v408 = vld [vmem:[%s1 + $0x3bc] sm:$0xf]
    %v409 = vld [vmem:[%s1 + $0x3c0] sm:$0xf]
    %v410 = vld [vmem:[%s1 + $0x3c4] sm:$0xf]
    %v411 = vld [vmem:[%s1 + $0x3c8] sm:$0xf]
    %v412 = vld [vmem:[%s1 + $0x3cc] sm:$0xf]
    %v413 = vld [vmem:[%s1 + $0x3d0] sm:$0xf]
    %v414 = vld [vmem:[%s1 + $0x3d4] sm:$0xf]
    %v415 = vld [vmem:[%s1 + $0x3d8] sm:$0xf]
    %v416 = vld [vmem:[%s1 + $0x3dc] sm:$0xf]
    %v417 = vld [vmem:[%s1 + $0x3e0] sm:$0xf]
    %v418 = vld [vmem:[%s1 + $0x3e4] sm:$0xf]
    %v419 = vld [vmem:[%s1 + $0x3e8] sm:$0xf]
    %v420 = vld [vmem:[%s1 + $0x3ec] sm:$0xf]
    %v421 = vld [vmem:[%s1 + $0x3f0] sm:$0xf]
    %v422 = vld [vmem:[%s1 + $0x3f4] sm:$0xf]
    %v423 = vld [vmem:[%s1 + $0x3f8] sm:$0xf]
    %v424 = vld [vmem:[%s1 + $0x3fc] sm:$0xf]
    %v425 = vld [vmem:[%s1 + $0x400] sm:$0xf]
    %v426 = vld [vmem:[%s1 + $0x404] sm:$0xf]
    %v427 = vld [vmem:[%s1 + $0x408] sm:$0xf]
    %v428 = vld [vmem:[%s1 + $0x40c] sm:$0xf]
    %v429 = vld [vmem:[%s1 + $0x410] sm:$0xf]
    %v430 = vld [vmem:[%s1 + $0x414] sm:$0xf]
    %v431 = vld [vmem:[%s1 + $0x418] sm:$0xf]
    %v432 = vld [vmem:[%s1 + $0x41c] sm:$0xf]
    %v433 = vld [vmem:[%s1 + $0x420] sm:$0xf]
    %v434 = vld [vmem:[%s1 + $0x424] sm:$0xf]
    %v435 = vld [vmem:[%s1 + $0x428] sm:$0xf]
    %v436 = vld [vmem:[%s1 + $0x42c] sm:$0xf]
    %v437 = vld [vmem:[%s1 + $0x430] sm:$0xf]
    %v438 = vld [vmem:[%s1 + $0x434] sm:$0xf]
    %v439 = vld [vmem:[%s1 + $0x438] sm:$0xf]
    %v440 = vld [vmem:[%s1 + $0x43c] sm:$0xf]
    %v441 = vld [vmem:[%s1 + $0x440] sm:$0xf]
    %v442 = vld [vmem:[%s1 + $0x444] sm:$0xf]
    %v443 = vld [vmem:[%s1 + $0x448] sm:$0xf]
    %v444 = vld [vmem:[%s1 + $0x44c] sm:$0xf]
    %v445 = vld [vmem:[%s1 + $0x450] sm:$0xf]
    %v446 = vld [vmem:[%s1 + $0x454] sm:$0xf]
    %v447 = vld [vmem:[%s1 + $0x458] sm:$0xf]
    %v448 = vld [vmem:[%s1 + $0x45c] sm:$0xf]
    %v449 = vld [vmem:[%s1 + $0x460] sm:$0xf]
    %v450 = vld [vmem:[%s1 + $0x464] sm:$0xf]
    %v451 = vld [vmem:[%s1 + $0x468] sm:$0xf]
    %v452 = vld [vmem:[%s1 + $0x46c] sm:$0xf]
    %v453 = vld [vmem:[%s1 + $0x470] sm:$0xf]
    %v454 = vld [vmem:[%s1 + $0x474] sm:$0xf]
    %v455 = vld [vmem:[%s1 + $0x478] sm:$0xf]
    %v456 = vld [vmem:[%s1 + $0x47c] sm:$0xf]
    %v457 = vld [vmem:[%s1 + $0x480] sm:$0xf]
    %v458 = vld [vmem:[%s1 + $0x484] sm:$0xf]
    %v459 = vld [vmem:[%s1 + $0x488] sm:$0xf]
    %v460 = vld [vmem:[%s1 + $0x48c] sm:$0xf]
    %v461 = vld [vmem:[%s1 + $0x490] sm:$0xf]
    %v462 = vld [vmem:[%s1 + $0x494] sm:$0xf]
    %v463 = vld [vmem:[%s1 + $0x498] sm:$0xf]
    %v464 = vld [vmem:[%s1 + $0x49c] sm:$0xf]
    %v465 = vld [vmem:[%s1 + $0x4a0] sm:$0xf]
    %v466 = vld [vmem:[%s1 + $0x4a4] sm:$0xf]
    %v467 = vld [vmem:[%s1 + $0x4a8] sm:$0xf]
    %v468 = vld [vmem:[%s1 + $0x4ac] sm:$0xf]
    %v469 = vld [vmem:[%s1 + $0x4b0] sm:$0xf]
    %v470 = vld [vmem:[%s1 + $0x4b4] sm:$0xf]
    %v471 = vld [vmem:[%s1 + $0x4b8] sm:$0xf]
    %v472 = vld [vmem:[%s1 + $0x4bc] sm:$0xf]
    %v473 = vld [vmem:[%s1 + $0x4c0] sm:$0xf]
    %v474 = vld [vmem:[%s1 + $0x4c4] sm:$0xf]
    %v475 = vld [vmem:[%s1 + $0x4c8] sm:$0xf]
    %v476 = vld [vmem:[%s1 + $0x4cc] sm:$0xf]
    %v477 = vld [vmem:[%s1 + $0x4d0] sm:$0xf]
    %v478 = vld [vmem:[%s1 + $0x4d4] sm:$0xf]
    %v479 = vld [vmem:[%s1 + $0x4d8] sm:$0xf]
    %v480 = vld [vmem:[%s1 + $0x4dc] sm:$0xf]
    %v481 = vld [vmem:[%s1 + $0x4e0] sm:$0xf]
    %v482 = vld [vmem:[%s1 + $0x4e4] sm:$0xf]
    %v483 = vld [vmem:[%s1 + $0x4e8] sm:$0xf]
    %v484 = vld [vmem:[%s1 + $0x4ec] sm:$0xf]
    %v485 = vld [vmem:[%s1 + $0x4f0] sm:$0xf]
    %v486 = vld [vmem:[%s1 + $0x4f4] sm:$0xf]
    %v487 = vld [vmem:[%s1 + $0x4f8] sm:$0xf]
    %v488 = vld [vmem:[%s1 + $0x4fc] sm:$0xf]
    %v489 = vld [vmem:[%s1 + $0x500] sm:$0xf]
    %v490 = vld [vmem:[%s1 + $0x504] sm:$0xf]
    %v491 = vld [vmem:[%s1 + $0x508] sm:$0xf]
    %v492 = vld [vmem:[%s1 + $0x50c] sm:$0xf]
    %v493 = vld [vmem:[%s1 + $0x510] sm:$0xf]
    %v494 = vld [vmem:[%s1 + $0x514] sm:$0xf]
    %v495 = vld [vmem:[%s1 + $0x518] sm:$0xf]
    %v496 = vld [vmem:[%s1 + $0x51c] sm:$0xf]
    %v497 = vld [vmem:[%s1 + $0x520] sm:$0xf]
    %v498 = vld [vmem:[%s1 + $0x524] sm:$0xf]
    %v499 = vld [vmem:[%s1 + $0x528] sm:$0xf]
    %v500 = vld [vmem:[%s1 + $0x52c] sm:$0xf]
    %v501 = vld [vmem:[%s1 + $0x530] sm:$0xf]
    %v502 = vld [vmem:[%s1 + $0x534] sm:$0xf]
    %v503 = vld [vmem:[%s1 + $0x538] sm:$0xf]
    %v504 = vld [vmem:[%s1 + $0x53c] sm:$0xf]
    %v505 = vld [vmem:[%s1 + $0x540] sm:$0xf]
    %v506 = vld [vmem:[%s1 + $0x544] sm:$0xf]
    %v507 = vld [vmem:[%s1 + $0x548] sm:$0xf]
    %v508 = vld [vmem:[%s1 + $0x54c] sm:$0xf]
    %v509 = vld [vmem:[%s1 + $0x550] sm:$0xf]
    %v510 = vld [vmem:[%s1 + $0x554] sm:$0xf]
    %v511 = vld [vmem:[%s1 + $0x558] sm:$0xf]
    %v512 = vld [vmem:[%s1 + $0x55c] sm:$0xf]
    %v513 = vld [vmem:[%s1 + $0x560] sm:$0xf]
    %v514 = vld [vmem:[%s1 + $0x564] sm:$0xf]
    %v515 = vld [vmem:[%s1 + $0x568] sm:$0xf]
    %v516 = vld [vmem:[%s1 + $0x56c] sm:$0xf]
    %v517 = vld [vmem:[%s1 + $0x570] sm:$0xf]
    %v518 = vld [vmem:[%s1 + $0x574] sm:$0xf]
    %v519 = vld [vmem:[%s1 + $0x578] sm:$0xf]
    %v520 = vld [vmem:[%s1 + $0x57c] sm:$0xf]
    %v521 = vld [vmem:[%s1 + $0x580] sm:$0xf]
    %v522 = vld [vmem:[%s1 + $0x584] sm:$0xf]
    %v523 = vld [vmem:[%s1 + $0x588] sm:$0xf]
    %v524 = vld [vmem:[%s1 + $0x58c] sm:$0xf]
    %v525 = vld [vmem:[%s1 + $0x590] sm:$0xf]
    %v526 = vld [vmem:[%s1 + $0x594] sm:$0xf]
    %v527 = vld [vmem:[%s1 + $0x598] sm:$0xf]
    %v528 = vld [vmem:[%s1 + $0x59c] sm:$0xf]
    %v529 = vld [vmem:[%s1 + $0x5a0] sm:$0xf]
    %v530 = vld [vmem:[%s1 + $0x5a4] sm:$0xf]
    %v531 = vld [vmem:[%s1 + $0x5a8] sm:$0xf]
    %v532 = vld [vmem:[%s1 + $0x5ac] sm:$0xf]
    %v533 = vld [vmem:[%s1 + $0x5b0] sm:$0xf]
    %v534 = vld [vmem:[%s1 + $0x5b4] sm:$0xf]
    %v535 = vld [vmem:[%s1 + $0x5b8] sm:$0xf]
    %v536 = vld [vmem:[%s1 + $0x5bc] sm:$0xf]
    %v537 = vld [vmem:[%s1 + $0x5c0] sm:$0xf]
    %v538 = vld [vmem:[%s1 + $0x5c4] sm:$0xf]
    %v539 = vld [vmem:[%s1 + $0x5c8] sm:$0xf]
    %v540 = vld [vmem:[%s1 + $0x5cc] sm:$0xf]
    %v541 = vld [vmem:[%s1 + $0x5d0] sm:$0xf]
    %v542 = vld [vmem:[%s1 + $0x5d4] sm:$0xf]
    %v543 = vld [vmem:[%s1 + $0x5d8] sm:$0xf]
    %v544 = vld [vmem:[%s1 + $0x5dc] sm:$0xf]
    %v545 = vld [vmem:[%s1 + $0x5e0] sm:$0xf]
    %v546 = vld [vmem:[%s1 + $0x5e4] sm:$0xf]
    %v547 = vld [vmem:[%s1 + $0x5e8] sm:$0xf]
    %v548 = vld [vmem:[%s1 + $0x5ec] sm:$0xf]
    %v549 = vld [vmem:[%s1 + $0x5f0] sm:$0xf]
    %v550 = vld [vmem:[%s1 + $0x5f4] sm:$0xf]
    %v551 = vld [vmem:[%s1 + $0x5f8] sm:$0xf]
    %v552 = vld [vmem:[%s1 + $0x5fc] sm:$0xf]
    %v553 = vld [vmem:[%s1 + $0x600] sm:$0xf]
    %v554 = vld [vmem:[%s1 + $0x604] sm:$0xf]
    %v555 = vld [vmem:[%s1 + $0x608] sm:$0xf]
    %v556 = vld [vmem:[%s1 + $0x60c] sm:$0xf]
    %v557 = vld [vmem:[%s1 + $0x610] sm:$0xf]
    %v558 = vld [vmem:[%s1 + $0x614] sm:$0xf]
    %v559 = vld [vmem:[%s1 + $0x618] sm:$0xf]
    %v560 = vld [vmem:[%s1 + $0x61c] sm:$0xf]
    %v561 = vld [vmem:[%s1 + $0x620] sm:$0xf]
    %v562 = vld [vmem:[%s1 + $0x624] sm:$0xf]
    %v563 = vld [vmem:[%s1 + $0x628] sm:$0xf]
    %v564 = vld [vmem:[%s1 + $0x62c] sm:$0xf]
    %v565 = vld [vmem:[%s1 + $0x630] sm:$0xf]
    %v566 = vld [vmem:[%s1 + $0x634] sm:$0xf]
    %v567 = vld [vmem:[%s1 + $0x638] sm:$0xf]
    %v568 = vld [vmem:[%s1 + $0x63c] sm:$0xf]
    %v569 = vld [vmem:[%s1 + $0x640] sm:$0xf]
    %v570 = vld [vmem:[%s1 + $0x644] sm:$0xf]
    %v571 = vld [vmem:[%s1 + $0x648] sm:$0xf]
    %v572 = vld [vmem:[%s1 + $0x64c] sm:$0xf]
    %v573 = vld [vmem:[%s1 + $0x650] sm:$0xf]
    %v574 = vld [vmem:[%s1 + $0x654] sm:$0xf]
    %v575 = vld [vmem:[%s1 + $0x658] sm:$0xf]
    %v576 = vld [vmem:[%s1 + $0x65c] sm:$0xf]
    %v577 = vld [vmem:[%s1 + $0x660] sm:$0xf]
    %v578 = vld [vmem:[%s1 + $0x664] sm:$0xf]
    %v579 = vld [vmem:[%s1 + $0x668] sm:$0xf]
    %v580 = vld [vmem:[%s1 + $0x66c] sm:$0xf]
    %v581 = vld [vmem:[%s1 + $0x670] sm:$0xf]
    %v582 = vld [vmem:[%s1 + $0x674] sm:$0xf]
    %v583 = vld [vmem:[%s1 + $0x678] sm:$0xf]
    %v584 = vld [vmem:[%s1 + $0x67c] sm:$0xf]
    %v585 = vld [vmem:[%s1 + $0x680] sm:$0xf]
    %v586 = vld [vmem:[%s1 + $0x684] sm:$0xf]
    %v587 = vld [vmem:[%s1 + $0x688] sm:$0xf]
    %v588 = vld [vmem:[%s1 + $0x68c] sm:$0xf]
    %v589 = vld [vmem:[%s1 + $0x690] sm:$0xf]
    %v590 = vld [vmem:[%s1 + $0x694] sm:$0xf]
    %v591 = vld [vmem:[%s1 + $0x698] sm:$0xf]
    %v592 = vld [vmem:[%s1 + $0x69c] sm:$0xf]
    %v593 = vld [vmem:[%s1 + $0x6a0] sm:$0xf]
    %v594 = vld [vmem:[%s1 + $0x6a4] sm:$0xf]
    %v595 = vld [vmem:[%s1 + $0x6a8] sm:$0xf]
    %v596 = vld [vmem:[%s1 + $0x6ac] sm:$0xf]
    %v597 = vld [vmem:[%s1 + $0x6b0] sm:$0xf]
    %v598 = vld [vmem:[%s1 + $0x6b4] sm:$0xf]
    %v599 = vld [vmem:[%s1 + $0x6b8] sm:$0xf]
    %v600 = vld [vmem:[%s1 + $0x6bc] sm:$0xf]
    %v601 = vld [vmem:[%s1 + $0x6c0] sm:$0xf]
    %v602 = vld [vmem:[%s1 + $0x6c4] sm:$0xf]
    %v603 = vld [vmem:[%s1 + $0x6c8] sm:$0xf]
    %v604 = vld [vmem:[%s1 + $0x6cc] sm:$0xf]
    %v605 = vld [vmem:[%s1 + $0x6d0] sm:$0xf]
    %v606 = vld [vmem:[%s1 + $0x6d4] sm:$0xf]
    %v607 = vld [vmem:[%s1 + $0x6d8] sm:$0xf]
    %v608 = vld [vmem:[%s1 + $0x6dc] sm:$0xf]
    %v609 = vld [vmem:[%s1 + $0x6e0] sm:$0xf]
    %v610 = vld [vmem:[%s1 + $0x6e4] sm:$0xf]
    %v611 = vld [vmem:[%s1 + $0x6e8] sm:$0xf]
    %v612 = vld [vmem:[%s1 + $0x6ec] sm:$0xf]
    %v613 = vld [vmem:[%s1 + $0x6f0] sm:$0xf]
    %v614 = vld [vmem:[%s1 + $0x6f4] sm:$0xf]
    %v615 = vld [vmem:[%s1 + $0x6f8] sm:$0xf]
    %v616 = vld [vmem:[%s1 + $0x6fc] sm:$0xf]
    %v617 = vld [vmem:[%s1 + $0x700] sm:$0xf]
    %v618 = vld [vmem:[%s1 + $0x704] sm:$0xf]
    %v619 = vld [vmem:[%s1 + $0x708] sm:$0xf]
    %v620 = vld [vmem:[%s1 + $0x70c] sm:$0xf]
    %v621 = vld [vmem:[%s1 + $0x710] sm:$0xf]
    %v622 = vld [vmem:[%s1 + $0x714] sm:$0xf]
    %v623 = vld [vmem:[%s1 + $0x718] sm:$0xf]
    %v624 = vld [vmem:[%s1 + $0x71c] sm:$0xf]
    %v625 = vld [vmem:[%s1 + $0x720] sm:$0xf]
    %v626 = vld [vmem:[%s1 + $0x724] sm:$0xf]
    %v627 = vld [vmem:[%s1 + $0x728] sm:$0xf]
    %v628 = vld [vmem:[%s1 + $0x72c] sm:$0xf]
    %v629 = vld [vmem:[%s1 + $0x730] sm:$0xf]
    %v630 = vld [vmem:[%s1 + $0x734] sm:$0xf]
    %v631 = vld [vmem:[%s1 + $0x738] sm:$0xf]
    %v632 = vld [vmem:[%s1 + $0x73c] sm:$0xf]
    %v633 = vld [vmem:[%s1 + $0x740] sm:$0xf]
    %v634 = vld [vmem:[%s1 + $0x744] sm:$0xf]
    %v635 = vld [vmem:[%s1 + $0x748] sm:$0xf]
    %v636 = vld [vmem:[%s1 + $0x74c] sm:$0xf]
    %v637 = vld [vmem:[%s1 + $0x750] sm:$0xf]
    %v638 = vld [vmem:[%s1 + $0x754] sm:$0xf]
    %v639 = vld [vmem:[%s1 + $0x758] sm:$0xf]
    %v640 = vld [vmem:[%s1 + $0x75c] sm:$0xf]
    %v641 = vld [vmem:[%s1 + $0x760] sm:$0xf]
    %v642 = vld [vmem:[%s1 + $0x764] sm:$0xf]
    %v643 = vld [vmem:[%s1 + $0x768] sm:$0xf]
    %v644 = vld [vmem:[%s1 + $0x76c] sm:$0xf]
    %v645 = vld [vmem:[%s1 + $0x770] sm:$0xf]
    %v646 = vld [vmem:[%s1 + $0x774] sm:$0xf]
    %v647 = vld [vmem:[%s1 + $0x778] sm:$0xf]
    %v648 = vld [vmem:[%s1 + $0x77c] sm:$0xf]
    %v649 = vld [vmem:[%s1 + $0x780] sm:$0xf]
    %v650 = vld [vmem:[%s1 + $0x784] sm:$0xf]
    %v651 = vld [vmem:[%s1 + $0x788] sm:$0xf]
    %v652 = vld [vmem:[%s1 + $0x78c] sm:$0xf]
    %v653 = vld [vmem:[%s1 + $0x790] sm:$0xf]
    %v654 = vld [vmem:[%s1 + $0x794] sm:$0xf]
    %v655 = vld [vmem:[%s1 + $0x798] sm:$0xf]
    %v656 = vld [vmem:[%s1 + $0x79c] sm:$0xf]
    %v657 = vld [vmem:[%s1 + $0x7a0] sm:$0xf]
    %v658 = vld [vmem:[%s1 + $0x7a4] sm:$0xf]
    %v659 = vld [vmem:[%s1 + $0x7a8] sm:$0xf]
    %v660 = vld [vmem:[%s1 + $0x7ac] sm:$0xf]
    %v661 = vld [vmem:[%s1 + $0x7b0] sm:$0xf]
    %v662 = vld [vmem:[%s1 + $0x7b4] sm:$0xf]
    %v663 = vld [vmem:[%s1 + $0x7b8] sm:$0xf]
    %v664 = vld [vmem:[%s1 + $0x7bc] sm:$0xf]
    %v665 = vld [vmem:[%s1 + $0x7c0] sm:$0xf]
    %v666 = vld [vmem:[%s1 + $0x7c4] sm:$0xf]
    %v667 = vld [vmem:[%s1 + $0x7c8] sm:$0xf]
    %v668 = vld [vmem:[%s1 + $0x7cc] sm:$0xf]
    %v669 = vld [vmem:[%s1 + $0x7d0] sm:$0xf]
    %v670 = vld [vmem:[%s1 + $0x7d4] sm:$0xf]
    %v671 = vld [vmem:[%s1 + $0x7d8] sm:$0xf]
    %v672 = vld [vmem:[%s1 + $0x7dc] sm:$0xf]
    %v673 = vld [vmem:[%s1 + $0x7e0] sm:$0xf]
    %v674 = vld [vmem:[%s1 + $0x7e4] sm:$0xf]
    %v675 = vld [vmem:[%s1 + $0x7e8] sm:$0xf]
    %v676 = vld [vmem:[%s1 + $0x7ec] sm:$0xf]
    %v677 = vld [vmem:[%s1 + $0x7f0] sm:$0xf]
    %v678 = vld [vmem:[%s1 + $0x7f4] sm:$0xf]
    %v679 = vld [vmem:[%s1 + $0x7f8] sm:$0xf]
    %v680 = vld [vmem:[%s1 + $0x7fc] sm:$0xf]
    %v681 = vld [vmem:[%s2] sm:$0x1]
    %v683 = vlaneseq
    %v684 = vshrl.u32 %v683, 7
    %v685 = vsub.s32 0, %v684
    %v686 = vrot.slane %v681, %v685
    %v752 = vunpack.c.l.b16 %v105
    %v753 = vunpack.c.h.b16 %v105
    %v754 = vunpack.c.l.b16 %v106
    %v755 = vunpack.c.h.b16 %v106
    %v756 = vunpack.c.l.b16 %v107
    %v757 = vunpack.c.h.b16 %v107
    %v758 = vunpack.c.l.b16 %v108
    %v759 = vunpack.c.h.b16 %v108
    %v760 = vunpack.c.l.b16 %v109
    %v761 = vunpack.c.h.b16 %v109
    %v762 = vunpack.c.l.b16 %v110
    %v763 = vunpack.c.h.b16 %v110
    %v764 = vunpack.c.l.b16 %v111
    %v765 = vunpack.c.h.b16 %v111
    %v766 = vunpack.c.l.b16 %v112
    %v767 = vunpack.c.h.b16 %v112
    %v768 = vunpack.c.l.b16 %v113
    %v769 = vunpack.c.h.b16 %v113
    %v770 = vunpack.c.l.b16 %v114
    %v771 = vunpack.c.h.b16 %v114
    %v772 = vunpack.c.l.b16 %v115
    %v773 = vunpack.c.h.b16 %v115
    %v774 = vunpack.c.l.b16 %v116
    %v775 = vunpack.c.h.b16 %v116
    %v776 = vunpack.c.l.b16 %v117
    %v777 = vunpack.c.h.b16 %v117
    %v778 = vunpack.c.l.b16 %v118
    %v779 = vunpack.c.h.b16 %v118
    %v780 = vunpack.c.l.b16 %v119
    %v781 = vunpack.c.h.b16 %v119
    %v782 = vunpack.c.l.b16 %v120
    %v783 = vunpack.c.h.b16 %v120
    %v784 = vunpack.c.l.b16 %v121
    %v785 = vunpack.c.h.b16 %v121
    %v786 = vunpack.c.l.b16 %v122
    %v787 = vunpack.c.h.b16 %v122
    %v788 = vunpack.c.l.b16 %v123
    %v789 = vunpack.c.h.b16 %v123
    %v790 = vunpack.c.l.b16 %v124
    %v791 = vunpack.c.h.b16 %v124
    %v792 = vunpack.c.l.b16 %v125
    %v793 = vunpack.c.h.b16 %v125
    %v794 = vunpack.c.l.b16 %v126
    %v795 = vunpack.c.h.b16 %v126
    %v796 = vunpack.c.l.b16 %v127
    %v797 = vunpack.c.h.b16 %v127
    %v798 = vunpack.c.l.b16 %v128
    %v799 = vunpack.c.h.b16 %v128
    %v800 = vunpack.c.l.b16 %v129
    %v801 = vunpack.c.h.b16 %v129
    %v802 = vunpack.c.l.b16 %v130
    %v803 = vunpack.c.h.b16 %v130
    %v804 = vunpack.c.l.b16 %v131
    %v805 = vunpack.c.h.b16 %v131
    %v806 = vunpack.c.l.b16 %v132
    %v807 = vunpack.c.h.b16 %v132
    %v808 = vunpack.c.l.b16 %v133
    %v809 = vunpack.c.h.b16 %v133
    %v810 = vunpack.c.l.b16 %v134
    %v811 = vunpack.c.h.b16 %v134
    %v812 = vunpack.c.l.b16 %v135
    %v813 = vunpack.c.h.b16 %v135
    %v814 = vunpack.c.l.b16 %v136
    %v815 = vunpack.c.h.b16 %v136
    %v816 = vunpack.c.l.b16 %v137
    %v817 = vunpack.c.h.b16 %v137
    %v818 = vunpack.c.l.b16 %v138
    %v819 = vunpack.c.h.b16 %v138
    %v820 = vunpack.c.l.b16 %v139
    %v821 = vunpack.c.h.b16 %v139
    %v822 = vunpack.c.l.b16 %v140
    %v823 = vunpack.c.h.b16 %v140
    %v824 = vunpack.c.l.b16 %v141
    %v825 = vunpack.c.h.b16 %v141
    %v826 = vunpack.c.l.b16 %v142
    %v827 = vunpack.c.h.b16 %v142
    %v828 = vunpack.c.l.b16 %v143
    %v829 = vunpack.c.h.b16 %v143
    %v830 = vunpack.c.l.b16 %v144
    %v831 = vunpack.c.h.b16 %v144
    %v832 = vunpack.c.l.b16 %v145
    %v833 = vunpack.c.h.b16 %v145
    %v834 = vunpack.c.l.b16 %v146
    %v835 = vunpack.c.h.b16 %v146
    %v836 = vunpack.c.l.b16 %v147
    %v837 = vunpack.c.h.b16 %v147
    %v838 = vunpack.c.l.b16 %v148
    %v839 = vunpack.c.h.b16 %v148
    %v840 = vunpack.c.l.b16 %v149
    %v841 = vunpack.c.h.b16 %v149
    %v842 = vunpack.c.l.b16 %v150
    %v843 = vunpack.c.h.b16 %v150
    %v844 = vunpack.c.l.b16 %v151
    %v845 = vunpack.c.h.b16 %v151
    %v846 = vunpack.c.l.b16 %v152
    %v847 = vunpack.c.h.b16 %v152
    %v848 = vunpack.c.l.b16 %v153
    %v849 = vunpack.c.h.b16 %v153
    %v850 = vunpack.c.l.b16 %v154
    %v851 = vunpack.c.h.b16 %v154
    %v852 = vunpack.c.l.b16 %v155
    %v853 = vunpack.c.h.b16 %v155
    %v854 = vunpack.c.l.b16 %v156
    %v855 = vunpack.c.h.b16 %v156
    %v856 = vunpack.c.l.b16 %v157
    %v857 = vunpack.c.h.b16 %v157
    %v858 = vunpack.c.l.b16 %v158
    %v859 = vunpack.c.h.b16 %v158
    %v860 = vunpack.c.l.b16 %v159
    %v861 = vunpack.c.h.b16 %v159
    %v862 = vunpack.c.l.b16 %v160
    %v863 = vunpack.c.h.b16 %v160
    %v864 = vunpack.c.l.b16 %v161
    %v865 = vunpack.c.h.b16 %v161
    %v866 = vunpack.c.l.b16 %v162
    %v867 = vunpack.c.h.b16 %v162
    %v868 = vunpack.c.l.b16 %v163
    %v869 = vunpack.c.h.b16 %v163
    %v870 = vunpack.c.l.b16 %v164
    %v871 = vunpack.c.h.b16 %v164
    %v872 = vunpack.c.l.b16 %v165
    %v873 = vunpack.c.h.b16 %v165
    %v874 = vunpack.c.l.b16 %v166
    %v875 = vunpack.c.h.b16 %v166
    %v876 = vunpack.c.l.b16 %v167
    %v877 = vunpack.c.h.b16 %v167
    %v878 = vunpack.c.l.b16 %v168
    %v879 = vunpack.c.h.b16 %v168
    %v880 = vpack.c.b16 %v784, %v752
    %v881 = vpack.c.b16 %v785, %v753
    %v882 = vpack.c.b16 %v786, %v754
    %v883 = vpack.c.b16 %v787, %v755
    %v884 = vpack.c.b16 %v788, %v756
    %v885 = vpack.c.b16 %v789, %v757
    %v886 = vpack.c.b16 %v790, %v758
    %v887 = vpack.c.b16 %v791, %v759
    %v888 = vpack.c.b16 %v792, %v760
    %v889 = vpack.c.b16 %v793, %v761
    %v890 = vpack.c.b16 %v794, %v762
    %v891 = vpack.c.b16 %v795, %v763
    %v892 = vpack.c.b16 %v796, %v764
    %v893 = vpack.c.b16 %v797, %v765
    %v894 = vpack.c.b16 %v798, %v766
    %v895 = vpack.c.b16 %v799, %v767
    %v896 = vpack.c.b16 %v800, %v768
    %v897 = vpack.c.b16 %v801, %v769
    %v898 = vpack.c.b16 %v802, %v770
    %v899 = vpack.c.b16 %v803, %v771
    %v900 = vpack.c.b16 %v804, %v772
    %v901 = vpack.c.b16 %v805, %v773
    %v902 = vpack.c.b16 %v806, %v774
    %v903 = vpack.c.b16 %v807, %v775
    %v904 = vpack.c.b16 %v808, %v776
    %v905 = vpack.c.b16 %v809, %v777
    %v906 = vpack.c.b16 %v810, %v778
    %v907 = vpack.c.b16 %v811, %v779
    %v908 = vpack.c.b16 %v812, %v780
    %v909 = vpack.c.b16 %v813, %v781
    %v910 = vpack.c.b16 %v814, %v782
    %v911 = vpack.c.b16 %v815, %v783
    %v912 = vpack.c.b16 %v848, %v816
    %v913 = vpack.c.b16 %v849, %v817
    %v914 = vpack.c.b16 %v850, %v818
    %v915 = vpack.c.b16 %v851, %v819
    %v916 = vpack.c.b16 %v852, %v820
    %v917 = vpack.c.b16 %v853, %v821
    %v918 = vpack.c.b16 %v854, %v822
    %v919 = vpack.c.b16 %v855, %v823
    %v920 = vpack.c.b16 %v856, %v824
    %v921 = vpack.c.b16 %v857, %v825
    %v922 = vpack.c.b16 %v858, %v826
    %v923 = vpack.c.b16 %v859, %v827
    %v924 = vpack.c.b16 %v860, %v828
    %v925 = vpack.c.b16 %v861, %v829
    %v926 = vpack.c.b16 %v862, %v830
    %v927 = vpack.c.b16 %v863, %v831
    %v928 = vpack.c.b16 %v864, %v832
    %v929 = vpack.c.b16 %v865, %v833
    %v930 = vpack.c.b16 %v866, %v834
    %v931 = vpack.c.b16 %v867, %v835
    %v932 = vpack.c.b16 %v868, %v836
    %v933 = vpack.c.b16 %v869, %v837
    %v934 = vpack.c.b16 %v870, %v838
    %v935 = vpack.c.b16 %v871, %v839
    %v936 = vpack.c.b16 %v872, %v840
    %v937 = vpack.c.b16 %v873, %v841
    %v938 = vpack.c.b16 %v874, %v842
    %v939 = vpack.c.b16 %v875, %v843
    %v940 = vpack.c.b16 %v876, %v844
    %v941 = vpack.c.b16 %v877, %v845
    %v942 = vpack.c.b16 %v878, %v846
    %v943 = vpack.c.b16 %v879, %v847
    %v1520 = vunpack.c.l.b16 %v169
    %v1521 = vunpack.c.l.b16 %v170
    %v1522 = vunpack.c.l.b16 %v171
    %v1523 = vunpack.c.l.b16 %v172
    %v1524 = vunpack.c.l.b16 %v173
    %v1525 = vunpack.c.l.b16 %v174
    %v1526 = vunpack.c.l.b16 %v175
    %v1527 = vunpack.c.l.b16 %v176
    %v1528 = vunpack.c.l.b16 %v177
    %v1529 = vunpack.c.l.b16 %v178
    %v1530 = vunpack.c.l.b16 %v179
    %v1531 = vunpack.c.l.b16 %v180
    %v1532 = vunpack.c.l.b16 %v181
    %v1533 = vunpack.c.l.b16 %v182
    %v1534 = vunpack.c.l.b16 %v183
    %v1535 = vunpack.c.l.b16 %v184
    %v1536 = vunpack.c.l.b16 %v185
    %v1537 = vunpack.c.l.b16 %v186
    %v1538 = vunpack.c.l.b16 %v187
    %v1539 = vunpack.c.l.b16 %v188
    %v1540 = vunpack.c.l.b16 %v189
    %v1541 = vunpack.c.l.b16 %v190
    %v1542 = vunpack.c.l.b16 %v191
    %v1543 = vunpack.c.l.b16 %v192
    %v1544 = vunpack.c.l.b16 %v193
    %v1545 = vunpack.c.l.b16 %v194
    %v1546 = vunpack.c.l.b16 %v195
    %v1547 = vunpack.c.l.b16 %v196
    %v1548 = vunpack.c.l.b16 %v197
    %v1549 = vunpack.c.l.b16 %v198
    %v1550 = vunpack.c.l.b16 %v199
    %v1551 = vunpack.c.l.b16 %v200
    %v1552 = vunpack.c.l.b16 %v201
    %v1553 = vunpack.c.l.b16 %v202
    %v1554 = vunpack.c.l.b16 %v203
    %v1555 = vunpack.c.l.b16 %v204
    %v1556 = vunpack.c.l.b16 %v205
    %v1557 = vunpack.c.l.b16 %v206
    %v1558 = vunpack.c.l.b16 %v207
    %v1559 = vunpack.c.l.b16 %v208
    %v1560 = vunpack.c.l.b16 %v209
    %v1561 = vunpack.c.l.b16 %v210
    %v1562 = vunpack.c.l.b16 %v211
    %v1563 = vunpack.c.l.b16 %v212
    %v1564 = vunpack.c.l.b16 %v213
    %v1565 = vunpack.c.l.b16 %v214
    %v1566 = vunpack.c.l.b16 %v215
    %v1567 = vunpack.c.l.b16 %v216
    %v1568 = vunpack.c.l.b16 %v217
    %v1569 = vunpack.c.l.b16 %v218
    %v1570 = vunpack.c.l.b16 %v219
    %v1571 = vunpack.c.l.b16 %v220
    %v1572 = vunpack.c.l.b16 %v221
    %v1573 = vunpack.c.l.b16 %v222
    %v1574 = vunpack.c.l.b16 %v223
    %v1575 = vunpack.c.l.b16 %v224
    %v1576 = vunpack.c.l.b16 %v225
    %v1577 = vunpack.c.l.b16 %v226
    %v1578 = vunpack.c.l.b16 %v227
    %v1579 = vunpack.c.l.b16 %v228
    %v1580 = vunpack.c.l.b16 %v229
    %v1581 = vunpack.c.l.b16 %v230
    %v1582 = vunpack.c.l.b16 %v231
    %v1583 = vunpack.c.l.b16 %v232
    %v1584 = vunpack.c.l.b16 %v233
    %v1585 = vunpack.c.l.b16 %v234
    %v1586 = vunpack.c.l.b16 %v235
    %v1587 = vunpack.c.l.b16 %v236
    %v1588 = vunpack.c.l.b16 %v237
    %v1589 = vunpack.c.l.b16 %v238
    %v1590 = vunpack.c.l.b16 %v239
    %v1591 = vunpack.c.l.b16 %v240
    %v1592 = vunpack.c.l.b16 %v241
    %v1593 = vunpack.c.l.b16 %v242
    %v1594 = vunpack.c.l.b16 %v243
    %v1595 = vunpack.c.l.b16 %v244
    %v1596 = vunpack.c.l.b16 %v245
    %v1597 = vunpack.c.l.b16 %v246
    %v1598 = vunpack.c.l.b16 %v247
    %v1599 = vunpack.c.l.b16 %v248
    %v1600 = vunpack.c.l.b16 %v249
    %v1601 = vunpack.c.l.b16 %v250
    %v1602 = vunpack.c.l.b16 %v251
    %v1603 = vunpack.c.l.b16 %v252
    %v1604 = vunpack.c.l.b16 %v253
    %v1605 = vunpack.c.l.b16 %v254
    %v1606 = vunpack.c.l.b16 %v255
    %v1607 = vunpack.c.l.b16 %v256
    %v1608 = vunpack.c.l.b16 %v257
    %v1609 = vunpack.c.l.b16 %v258
    %v1610 = vunpack.c.l.b16 %v259
    %v1611 = vunpack.c.l.b16 %v260
    %v1612 = vunpack.c.l.b16 %v261
    %v1613 = vunpack.c.l.b16 %v262
    %v1614 = vunpack.c.l.b16 %v263
    %v1615 = vunpack.c.l.b16 %v264
    %v1616 = vunpack.c.l.b16 %v265
    %v1617 = vunpack.c.l.b16 %v266
    %v1618 = vunpack.c.l.b16 %v267
    %v1619 = vunpack.c.l.b16 %v268
    %v1620 = vunpack.c.l.b16 %v269
    %v1621 = vunpack.c.l.b16 %v270
    %v1622 = vunpack.c.l.b16 %v271
    %v1623 = vunpack.c.l.b16 %v272
    %v1624 = vunpack.c.l.b16 %v273
    %v1625 = vunpack.c.l.b16 %v274
    %v1626 = vunpack.c.l.b16 %v275
    %v1627 = vunpack.c.l.b16 %v276
    %v1628 = vunpack.c.l.b16 %v277
    %v1629 = vunpack.c.l.b16 %v278
    %v1630 = vunpack.c.l.b16 %v279
    %v1631 = vunpack.c.l.b16 %v280
    %v1632 = vunpack.c.l.b16 %v281
    %v1633 = vunpack.c.l.b16 %v282
    %v1634 = vunpack.c.l.b16 %v283
    %v1635 = vunpack.c.l.b16 %v284
    %v1636 = vunpack.c.l.b16 %v285
    %v1637 = vunpack.c.l.b16 %v286
    %v1638 = vunpack.c.l.b16 %v287
    %v1639 = vunpack.c.l.b16 %v288
    %v1640 = vunpack.c.l.b16 %v289
    %v1641 = vunpack.c.l.b16 %v290
    %v1642 = vunpack.c.l.b16 %v291
    %v1643 = vunpack.c.l.b16 %v292
    %v1644 = vunpack.c.l.b16 %v293
    %v1645 = vunpack.c.l.b16 %v294
    %v1646 = vunpack.c.l.b16 %v295
    %v1647 = vunpack.c.l.b16 %v296
    %v1648 = vunpack.c.l.b16 %v297
    %v1649 = vunpack.c.l.b16 %v298
    %v1650 = vunpack.c.l.b16 %v299
    %v1651 = vunpack.c.l.b16 %v300
    %v1652 = vunpack.c.l.b16 %v301
    %v1653 = vunpack.c.l.b16 %v302
    %v1654 = vunpack.c.l.b16 %v303
    %v1655 = vunpack.c.l.b16 %v304
    %v1656 = vunpack.c.l.b16 %v305
    %v1657 = vunpack.c.l.b16 %v306
    %v1658 = vunpack.c.l.b16 %v307
    %v1659 = vunpack.c.l.b16 %v308
    %v1660 = vunpack.c.l.b16 %v309
    %v1661 = vunpack.c.l.b16 %v310
    %v1662 = vunpack.c.l.b16 %v311
    %v1663 = vunpack.c.l.b16 %v312
    %v1664 = vunpack.c.l.b16 %v313
    %v1665 = vunpack.c.l.b16 %v314
    %v1666 = vunpack.c.l.b16 %v315
    %v1667 = vunpack.c.l.b16 %v316
    %v1668 = vunpack.c.l.b16 %v317
    %v1669 = vunpack.c.l.b16 %v318
    %v1670 = vunpack.c.l.b16 %v319
    %v1671 = vunpack.c.l.b16 %v320
    %v1672 = vunpack.c.l.b16 %v321
    %v1673 = vunpack.c.l.b16 %v322
    %v1674 = vunpack.c.l.b16 %v323
    %v1675 = vunpack.c.l.b16 %v324
    %v1676 = vunpack.c.l.b16 %v325
    %v1677 = vunpack.c.l.b16 %v326
    %v1678 = vunpack.c.l.b16 %v327
    %v1679 = vunpack.c.l.b16 %v328
    %v1680 = vunpack.c.l.b16 %v329
    %v1681 = vunpack.c.l.b16 %v330
    %v1682 = vunpack.c.l.b16 %v331
    %v1683 = vunpack.c.l.b16 %v332
    %v1684 = vunpack.c.l.b16 %v333
    %v1685 = vunpack.c.l.b16 %v334
    %v1686 = vunpack.c.l.b16 %v335
    %v1687 = vunpack.c.l.b16 %v336
    %v1688 = vunpack.c.l.b16 %v337
    %v1689 = vunpack.c.l.b16 %v338
    %v1690 = vunpack.c.l.b16 %v339
    %v1691 = vunpack.c.l.b16 %v340
    %v1692 = vunpack.c.l.b16 %v341
    %v1693 = vunpack.c.l.b16 %v342
    %v1694 = vunpack.c.l.b16 %v343
    %v1695 = vunpack.c.l.b16 %v344
    %v1696 = vunpack.c.l.b16 %v345
    %v1697 = vunpack.c.l.b16 %v346
    %v1698 = vunpack.c.l.b16 %v347
    %v1699 = vunpack.c.l.b16 %v348
    %v1700 = vunpack.c.l.b16 %v349
    %v1701 = vunpack.c.l.b16 %v350
    %v1702 = vunpack.c.l.b16 %v351
    %v1703 = vunpack.c.l.b16 %v352
    %v1704 = vunpack.c.l.b16 %v353
    %v1705 = vunpack.c.l.b16 %v354
    %v1706 = vunpack.c.l.b16 %v355
    %v1707 = vunpack.c.l.b16 %v356
    %v1708 = vunpack.c.l.b16 %v357
    %v1709 = vunpack.c.l.b16 %v358
    %v1710 = vunpack.c.l.b16 %v359
    %v1711 = vunpack.c.l.b16 %v360
    %v1712 = vunpack.c.l.b16 %v361
    %v1713 = vunpack.c.l.b16 %v362
    %v1714 = vunpack.c.l.b16 %v363
    %v1715 = vunpack.c.l.b16 %v364
    %v1716 = vunpack.c.l.b16 %v365
    %v1717 = vunpack.c.l.b16 %v366
    %v1718 = vunpack.c.l.b16 %v367
    %v1719 = vunpack.c.l.b16 %v368
    %v1720 = vunpack.c.l.b16 %v369
    %v1721 = vunpack.c.l.b16 %v370
    %v1722 = vunpack.c.l.b16 %v371
    %v1723 = vunpack.c.l.b16 %v372
    %v1724 = vunpack.c.l.b16 %v373
    %v1725 = vunpack.c.l.b16 %v374
    %v1726 = vunpack.c.l.b16 %v375
    %v1727 = vunpack.c.l.b16 %v376
    %v1728 = vunpack.c.l.b16 %v377
    %v1729 = vunpack.c.l.b16 %v378
    %v1730 = vunpack.c.l.b16 %v379
    %v1731 = vunpack.c.l.b16 %v380
    %v1732 = vunpack.c.l.b16 %v381
    %v1733 = vunpack.c.l.b16 %v382
    %v1734 = vunpack.c.l.b16 %v383
    %v1735 = vunpack.c.l.b16 %v384
    %v1736 = vunpack.c.l.b16 %v385
    %v1737 = vunpack.c.l.b16 %v386
    %v1738 = vunpack.c.l.b16 %v387
    %v1739 = vunpack.c.l.b16 %v388
    %v1740 = vunpack.c.l.b16 %v389
    %v1741 = vunpack.c.l.b16 %v390
    %v1742 = vunpack.c.l.b16 %v391
    %v1743 = vunpack.c.l.b16 %v392
    %v1744 = vunpack.c.l.b16 %v393
    %v1745 = vunpack.c.l.b16 %v394
    %v1746 = vunpack.c.l.b16 %v395
    %v1747 = vunpack.c.l.b16 %v396
    %v1748 = vunpack.c.l.b16 %v397
    %v1749 = vunpack.c.l.b16 %v398
    %v1750 = vunpack.c.l.b16 %v399
    %v1751 = vunpack.c.l.b16 %v400
    %v1752 = vunpack.c.l.b16 %v401
    %v1753 = vunpack.c.l.b16 %v402
    %v1754 = vunpack.c.l.b16 %v403
    %v1755 = vunpack.c.l.b16 %v404
    %v1756 = vunpack.c.l.b16 %v405
    %v1757 = vunpack.c.l.b16 %v406
    %v1758 = vunpack.c.l.b16 %v407
    %v1759 = vunpack.c.l.b16 %v408
    %v1760 = vunpack.c.l.b16 %v409
    %v1761 = vunpack.c.l.b16 %v410
    %v1762 = vunpack.c.l.b16 %v411
    %v1763 = vunpack.c.l.b16 %v412
    %v1764 = vunpack.c.l.b16 %v413
    %v1765 = vunpack.c.l.b16 %v414
    %v1766 = vunpack.c.l.b16 %v415
    %v1767 = vunpack.c.l.b16 %v416
    %v1768 = vunpack.c.l.b16 %v417
    %v1769 = vunpack.c.l.b16 %v418
    %v1770 = vunpack.c.l.b16 %v419
    %v1771 = vunpack.c.l.b16 %v420
    %v1772 = vunpack.c.l.b16 %v421
    %v1773 = vunpack.c.l.b16 %v422
    %v1774 = vunpack.c.l.b16 %v423
    %v1775 = vunpack.c.l.b16 %v424
    %v1776 = vunpack.c.l.b16 %v425
    %v1777 = vunpack.c.l.b16 %v426
    %v1778 = vunpack.c.l.b16 %v427
    %v1779 = vunpack.c.l.b16 %v428
    %v1780 = vunpack.c.l.b16 %v429
    %v1781 = vunpack.c.l.b16 %v430
    %v1782 = vunpack.c.l.b16 %v431
    %v1783 = vunpack.c.l.b16 %v432
    %v1784 = vunpack.c.l.b16 %v433
    %v1785 = vunpack.c.l.b16 %v434
    %v1786 = vunpack.c.l.b16 %v435
    %v1787 = vunpack.c.l.b16 %v436
    %v1788 = vunpack.c.l.b16 %v437
    %v1789 = vunpack.c.l.b16 %v438
    %v1790 = vunpack.c.l.b16 %v439
    %v1791 = vunpack.c.l.b16 %v440
    %v1792 = vunpack.c.l.b16 %v441
    %v1793 = vunpack.c.l.b16 %v442
    %v1794 = vunpack.c.l.b16 %v443
    %v1795 = vunpack.c.l.b16 %v444
    %v1796 = vunpack.c.l.b16 %v445
    %v1797 = vunpack.c.l.b16 %v446
    %v1798 = vunpack.c.l.b16 %v447
    %v1799 = vunpack.c.l.b16 %v448
    %v1800 = vunpack.c.l.b16 %v449
    %v1801 = vunpack.c.l.b16 %v450
    %v1802 = vunpack.c.l.b16 %v451
    %v1803 = vunpack.c.l.b16 %v452
    %v1804 = vunpack.c.l.b16 %v453
    %v1805 = vunpack.c.l.b16 %v454
    %v1806 = vunpack.c.l.b16 %v455
    %v1807 = vunpack.c.l.b16 %v456
    %v1808 = vunpack.c.l.b16 %v457
    %v1809 = vunpack.c.l.b16 %v458
    %v1810 = vunpack.c.l.b16 %v459
    %v1811 = vunpack.c.l.b16 %v460
    %v1812 = vunpack.c.l.b16 %v461
    %v1813 = vunpack.c.l.b16 %v462
    %v1814 = vunpack.c.l.b16 %v463
    %v1815 = vunpack.c.l.b16 %v464
    %v1816 = vunpack.c.l.b16 %v465
    %v1817 = vunpack.c.l.b16 %v466
    %v1818 = vunpack.c.l.b16 %v467
    %v1819 = vunpack.c.l.b16 %v468
    %v1820 = vunpack.c.l.b16 %v469
    %v1821 = vunpack.c.l.b16 %v470
    %v1822 = vunpack.c.l.b16 %v471
    %v1823 = vunpack.c.l.b16 %v472
    %v1824 = vunpack.c.l.b16 %v473
    %v1825 = vunpack.c.l.b16 %v474
    %v1826 = vunpack.c.l.b16 %v475
    %v1827 = vunpack.c.l.b16 %v476
    %v1828 = vunpack.c.l.b16 %v477
    %v1829 = vunpack.c.l.b16 %v478
    %v1830 = vunpack.c.l.b16 %v479
    %v1831 = vunpack.c.l.b16 %v480
    %v1832 = vunpack.c.l.b16 %v481
    %v1833 = vunpack.c.l.b16 %v482
    %v1834 = vunpack.c.l.b16 %v483
    %v1835 = vunpack.c.l.b16 %v484
    %v1836 = vunpack.c.l.b16 %v485
    %v1837 = vunpack.c.l.b16 %v486
    %v1838 = vunpack.c.l.b16 %v487
    %v1839 = vunpack.c.l.b16 %v488
    %v1840 = vunpack.c.l.b16 %v489
    %v1841 = vunpack.c.l.b16 %v490
    %v1842 = vunpack.c.l.b16 %v491
    %v1843 = vunpack.c.l.b16 %v492
    %v1844 = vunpack.c.l.b16 %v493
    %v1845 = vunpack.c.l.b16 %v494
    %v1846 = vunpack.c.l.b16 %v495
    %v1847 = vunpack.c.l.b16 %v496
    %v1848 = vunpack.c.l.b16 %v497
    %v1849 = vunpack.c.l.b16 %v498
    %v1850 = vunpack.c.l.b16 %v499
    %v1851 = vunpack.c.l.b16 %v500
    %v1852 = vunpack.c.l.b16 %v501
    %v1853 = vunpack.c.l.b16 %v502
    %v1854 = vunpack.c.l.b16 %v503
    %v1855 = vunpack.c.l.b16 %v504
    %v1856 = vunpack.c.l.b16 %v505
    %v1857 = vunpack.c.l.b16 %v506
    %v1858 = vunpack.c.l.b16 %v507
    %v1859 = vunpack.c.l.b16 %v508
    %v1860 = vunpack.c.l.b16 %v509
    %v1861 = vunpack.c.l.b16 %v510
    %v1862 = vunpack.c.l.b16 %v511
    %v1863 = vunpack.c.l.b16 %v512
    %v1864 = vunpack.c.l.b16 %v513
    %v1865 = vunpack.c.l.b16 %v514
    %v1866 = vunpack.c.l.b16 %v515
    %v1867 = vunpack.c.l.b16 %v516
    %v1868 = vunpack.c.l.b16 %v517
    %v1869 = vunpack.c.l.b16 %v518
    %v1870 = vunpack.c.l.b16 %v519
    %v1871 = vunpack.c.l.b16 %v520
    %v1872 = vunpack.c.l.b16 %v521
    %v1873 = vunpack.c.l.b16 %v522
    %v1874 = vunpack.c.l.b16 %v523
    %v1875 = vunpack.c.l.b16 %v524
    %v1876 = vunpack.c.l.b16 %v525
    %v1877 = vunpack.c.l.b16 %v526
    %v1878 = vunpack.c.l.b16 %v527
    %v1879 = vunpack.c.l.b16 %v528
    %v1880 = vunpack.c.l.b16 %v529
    %v1881 = vunpack.c.l.b16 %v530
    %v1882 = vunpack.c.l.b16 %v531
    %v1883 = vunpack.c.l.b16 %v532
    %v1884 = vunpack.c.l.b16 %v533
    %v1885 = vunpack.c.l.b16 %v534
    %v1886 = vunpack.c.l.b16 %v535
    %v1887 = vunpack.c.l.b16 %v536
    %v1888 = vunpack.c.l.b16 %v537
    %v1889 = vunpack.c.l.b16 %v538
    %v1890 = vunpack.c.l.b16 %v539
    %v1891 = vunpack.c.l.b16 %v540
    %v1892 = vunpack.c.l.b16 %v541
    %v1893 = vunpack.c.l.b16 %v542
    %v1894 = vunpack.c.l.b16 %v543
    %v1895 = vunpack.c.l.b16 %v544
    %v1896 = vunpack.c.l.b16 %v545
    %v1897 = vunpack.c.l.b16 %v546
    %v1898 = vunpack.c.l.b16 %v547
    %v1899 = vunpack.c.l.b16 %v548
    %v1900 = vunpack.c.l.b16 %v549
    %v1901 = vunpack.c.l.b16 %v550
    %v1902 = vunpack.c.l.b16 %v551
    %v1903 = vunpack.c.l.b16 %v552
    %v1904 = vunpack.c.l.b16 %v553
    %v1905 = vunpack.c.l.b16 %v554
    %v1906 = vunpack.c.l.b16 %v555
    %v1907 = vunpack.c.l.b16 %v556
    %v1908 = vunpack.c.l.b16 %v557
    %v1909 = vunpack.c.l.b16 %v558
    %v1910 = vunpack.c.l.b16 %v559
    %v1911 = vunpack.c.l.b16 %v560
    %v1912 = vunpack.c.l.b16 %v561
    %v1913 = vunpack.c.l.b16 %v562
    %v1914 = vunpack.c.l.b16 %v563
    %v1915 = vunpack.c.l.b16 %v564
    %v1916 = vunpack.c.l.b16 %v565
    %v1917 = vunpack.c.l.b16 %v566
    %v1918 = vunpack.c.l.b16 %v567
    %v1919 = vunpack.c.l.b16 %v568
    %v1920 = vunpack.c.l.b16 %v569
    %v1921 = vunpack.c.l.b16 %v570
    %v1922 = vunpack.c.l.b16 %v571
    %v1923 = vunpack.c.l.b16 %v572
    %v1924 = vunpack.c.l.b16 %v573
    %v1925 = vunpack.c.l.b16 %v574
    %v1926 = vunpack.c.l.b16 %v575
    %v1927 = vunpack.c.l.b16 %v576
    %v1928 = vunpack.c.l.b16 %v577
    %v1929 = vunpack.c.l.b16 %v578
    %v1930 = vunpack.c.l.b16 %v579
    %v1931 = vunpack.c.l.b16 %v580
    %v1932 = vunpack.c.l.b16 %v581
    %v1933 = vunpack.c.l.b16 %v582
    %v1934 = vunpack.c.l.b16 %v583
    %v1935 = vunpack.c.l.b16 %v584
    %v1936 = vunpack.c.l.b16 %v585
    %v1937 = vunpack.c.l.b16 %v586
    %v1938 = vunpack.c.l.b16 %v587
    %v1939 = vunpack.c.l.b16 %v588
    %v1940 = vunpack.c.l.b16 %v589
    %v1941 = vunpack.c.l.b16 %v590
    %v1942 = vunpack.c.l.b16 %v591
    %v1943 = vunpack.c.l.b16 %v592
    %v1944 = vunpack.c.l.b16 %v593
    %v1945 = vunpack.c.l.b16 %v594
    %v1946 = vunpack.c.l.b16 %v595
    %v1947 = vunpack.c.l.b16 %v596
    %v1948 = vunpack.c.l.b16 %v597
    %v1949 = vunpack.c.l.b16 %v598
    %v1950 = vunpack.c.l.b16 %v599
    %v1951 = vunpack.c.l.b16 %v600
    %v1952 = vunpack.c.l.b16 %v601
    %v1953 = vunpack.c.l.b16 %v602
    %v1954 = vunpack.c.l.b16 %v603
    %v1955 = vunpack.c.l.b16 %v604
    %v1956 = vunpack.c.l.b16 %v605
    %v1957 = vunpack.c.l.b16 %v606
    %v1958 = vunpack.c.l.b16 %v607
    %v1959 = vunpack.c.l.b16 %v608
    %v1960 = vunpack.c.l.b16 %v609
    %v1961 = vunpack.c.l.b16 %v610
    %v1962 = vunpack.c.l.b16 %v611
    %v1963 = vunpack.c.l.b16 %v612
    %v1964 = vunpack.c.l.b16 %v613
    %v1965 = vunpack.c.l.b16 %v614
    %v1966 = vunpack.c.l.b16 %v615
    %v1967 = vunpack.c.l.b16 %v616
    %v1968 = vunpack.c.l.b16 %v617
    %v1969 = vunpack.c.l.b16 %v618
    %v1970 = vunpack.c.l.b16 %v619
    %v1971 = vunpack.c.l.b16 %v620
    %v1972 = vunpack.c.l.b16 %v621
    %v1973 = vunpack.c.l.b16 %v622
    %v1974 = vunpack.c.l.b16 %v623
    %v1975 = vunpack.c.l.b16 %v624
    %v1976 = vunpack.c.l.b16 %v625
    %v1977 = vunpack.c.l.b16 %v626
    %v1978 = vunpack.c.l.b16 %v627
    %v1979 = vunpack.c.l.b16 %v628
    %v1980 = vunpack.c.l.b16 %v629
    %v1981 = vunpack.c.l.b16 %v630
    %v1982 = vunpack.c.l.b16 %v631
    %v1983 = vunpack.c.l.b16 %v632
    %v1984 = vunpack.c.l.b16 %v633
    %v1985 = vunpack.c.l.b16 %v634
    %v1986 = vunpack.c.l.b16 %v635
    %v1987 = vunpack.c.l.b16 %v636
    %v1988 = vunpack.c.l.b16 %v637
    %v1989 = vunpack.c.l.b16 %v638
    %v1990 = vunpack.c.l.b16 %v639
    %v1991 = vunpack.c.l.b16 %v640
    %v1992 = vunpack.c.l.b16 %v641
    %v1993 = vunpack.c.l.b16 %v642
    %v1994 = vunpack.c.l.b16 %v643
    %v1995 = vunpack.c.l.b16 %v644
    %v1996 = vunpack.c.l.b16 %v645
    %v1997 = vunpack.c.l.b16 %v646
    %v1998 = vunpack.c.l.b16 %v647
    %v1999 = vunpack.c.l.b16 %v648
    %v2000 = vunpack.c.l.b16 %v649
    %v2001 = vunpack.c.l.b16 %v650
    %v2002 = vunpack.c.l.b16 %v651
    %v2003 = vunpack.c.l.b16 %v652
    %v2004 = vunpack.c.l.b16 %v653
    %v2005 = vunpack.c.l.b16 %v654
    %v2006 = vunpack.c.l.b16 %v655
    %v2007 = vunpack.c.l.b16 %v656
    %v2008 = vunpack.c.l.b16 %v657
    %v2009 = vunpack.c.l.b16 %v658
    %v2010 = vunpack.c.l.b16 %v659
    %v2011 = vunpack.c.l.b16 %v660
    %v2012 = vunpack.c.l.b16 %v661
    %v2013 = vunpack.c.l.b16 %v662
    %v2014 = vunpack.c.l.b16 %v663
    %v2015 = vunpack.c.l.b16 %v664
    %v2016 = vunpack.c.l.b16 %v665
    %v2017 = vunpack.c.l.b16 %v666
    %v2018 = vunpack.c.l.b16 %v667
    %v2019 = vunpack.c.l.b16 %v668
    %v2020 = vunpack.c.l.b16 %v669
    %v2021 = vunpack.c.l.b16 %v670
    %v2022 = vunpack.c.l.b16 %v671
    %v2023 = vunpack.c.l.b16 %v672
    %v2024 = vunpack.c.l.b16 %v673
    %v2025 = vunpack.c.l.b16 %v674
    %v2026 = vunpack.c.l.b16 %v675
    %v2027 = vunpack.c.l.b16 %v676
    %v2028 = vunpack.c.l.b16 %v677
    %v2029 = vunpack.c.l.b16 %v678
    %v2030 = vunpack.c.l.b16 %v679
    %v2031 = vunpack.c.l.b16 %v680
    %v2032 = vpack.c.b16 %v1521, %v1520
    %v2033 = vpack.c.b16 %v1523, %v1522
    %v2034 = vpack.c.b16 %v1525, %v1524
    %v2035 = vpack.c.b16 %v1527, %v1526
    %v2036 = vpack.c.b16 %v1529, %v1528
    %v2037 = vpack.c.b16 %v1531, %v1530
    %v2038 = vpack.c.b16 %v1533, %v1532
    %v2039 = vpack.c.b16 %v1535, %v1534
    %v2040 = vpack.c.b16 %v1537, %v1536
    %v2041 = vpack.c.b16 %v1539, %v1538
    %v2042 = vpack.c.b16 %v1541, %v1540
    %v2043 = vpack.c.b16 %v1543, %v1542
    %v2044 = vpack.c.b16 %v1545, %v1544
    %v2045 = vpack.c.b16 %v1547, %v1546
    %v2046 = vpack.c.b16 %v1549, %v1548
    %v2047 = vpack.c.b16 %v1551, %v1550
    %v2048 = vpack.c.b16 %v1553, %v1552
    %v2049 = vpack.c.b16 %v1555, %v1554
    %v2050 = vpack.c.b16 %v1557, %v1556
    %v2051 = vpack.c.b16 %v1559, %v1558
    %v2052 = vpack.c.b16 %v1561, %v1560
    %v2053 = vpack.c.b16 %v1563, %v1562
    %v2054 = vpack.c.b16 %v1565, %v1564
    %v2055 = vpack.c.b16 %v1567, %v1566
    %v2056 = vpack.c.b16 %v1569, %v1568
    %v2057 = vpack.c.b16 %v1571, %v1570
    %v2058 = vpack.c.b16 %v1573, %v1572
    %v2059 = vpack.c.b16 %v1575, %v1574
    %v2060 = vpack.c.b16 %v1577, %v1576
    %v2061 = vpack.c.b16 %v1579, %v1578
    %v2062 = vpack.c.b16 %v1581, %v1580
    %v2063 = vpack.c.b16 %v1583, %v1582
    %v2064 = vpack.c.b16 %v1585, %v1584
    %v2065 = vpack.c.b16 %v1587, %v1586
    %v2066 = vpack.c.b16 %v1589, %v1588
    %v2067 = vpack.c.b16 %v1591, %v1590
    %v2068 = vpack.c.b16 %v1593, %v1592
    %v2069 = vpack.c.b16 %v1595, %v1594
    %v2070 = vpack.c.b16 %v1597, %v1596
    %v2071 = vpack.c.b16 %v1599, %v1598
    %v2072 = vpack.c.b16 %v1601, %v1600
    %v2073 = vpack.c.b16 %v1603, %v1602
    %v2074 = vpack.c.b16 %v1605, %v1604
    %v2075 = vpack.c.b16 %v1607, %v1606
    %v2076 = vpack.c.b16 %v1609, %v1608
    %v2077 = vpack.c.b16 %v1611, %v1610
    %v2078 = vpack.c.b16 %v1613, %v1612
    %v2079 = vpack.c.b16 %v1615, %v1614
    %v2080 = vpack.c.b16 %v1617, %v1616
    %v2081 = vpack.c.b16 %v1619, %v1618
    %v2082 = vpack.c.b16 %v1621, %v1620
    %v2083 = vpack.c.b16 %v1623, %v1622
    %v2084 = vpack.c.b16 %v1625, %v1624
    %v2085 = vpack.c.b16 %v1627, %v1626
    %v2086 = vpack.c.b16 %v1629, %v1628
    %v2087 = vpack.c.b16 %v1631, %v1630
    %v2088 = vpack.c.b16 %v1633, %v1632
    %v2089 = vpack.c.b16 %v1635, %v1634
    %v2090 = vpack.c.b16 %v1637, %v1636
    %v2091 = vpack.c.b16 %v1639, %v1638
    %v2092 = vpack.c.b16 %v1641, %v1640
    %v2093 = vpack.c.b16 %v1643, %v1642
    %v2094 = vpack.c.b16 %v1645, %v1644
    %v2095 = vpack.c.b16 %v1647, %v1646
    %v2096 = vpack.c.b16 %v1649, %v1648
    %v2097 = vpack.c.b16 %v1651, %v1650
    %v2098 = vpack.c.b16 %v1653, %v1652
    %v2099 = vpack.c.b16 %v1655, %v1654
    %v2100 = vpack.c.b16 %v1657, %v1656
    %v2101 = vpack.c.b16 %v1659, %v1658
    %v2102 = vpack.c.b16 %v1661, %v1660
    %v2103 = vpack.c.b16 %v1663, %v1662
    %v2104 = vpack.c.b16 %v1665, %v1664
    %v2105 = vpack.c.b16 %v1667, %v1666
    %v2106 = vpack.c.b16 %v1669, %v1668
    %v2107 = vpack.c.b16 %v1671, %v1670
    %v2108 = vpack.c.b16 %v1673, %v1672
    %v2109 = vpack.c.b16 %v1675, %v1674
    %v2110 = vpack.c.b16 %v1677, %v1676
    %v2111 = vpack.c.b16 %v1679, %v1678
    %v2112 = vpack.c.b16 %v1681, %v1680
    %v2113 = vpack.c.b16 %v1683, %v1682
    %v2114 = vpack.c.b16 %v1685, %v1684
    %v2115 = vpack.c.b16 %v1687, %v1686
    %v2116 = vpack.c.b16 %v1689, %v1688
    %v2117 = vpack.c.b16 %v1691, %v1690
    %v2118 = vpack.c.b16 %v1693, %v1692
    %v2119 = vpack.c.b16 %v1695, %v1694
    %v2120 = vpack.c.b16 %v1697, %v1696
    %v2121 = vpack.c.b16 %v1699, %v1698
    %v2122 = vpack.c.b16 %v1701, %v1700
    %v2123 = vpack.c.b16 %v1703, %v1702
    %v2124 = vpack.c.b16 %v1705, %v1704
    %v2125 = vpack.c.b16 %v1707, %v1706
    %v2126 = vpack.c.b16 %v1709, %v1708
    %v2127 = vpack.c.b16 %v1711, %v1710
    %v2128 = vpack.c.b16 %v1713, %v1712
    %v2129 = vpack.c.b16 %v1715, %v1714
    %v2130 = vpack.c.b16 %v1717, %v1716
    %v2131 = vpack.c.b16 %v1719, %v1718
    %v2132 = vpack.c.b16 %v1721, %v1720
    %v2133 = vpack.c.b16 %v1723, %v1722
    %v2134 = vpack.c.b16 %v1725, %v1724
    %v2135 = vpack.c.b16 %v1727, %v1726
    %v2136 = vpack.c.b16 %v1729, %v1728
    %v2137 = vpack.c.b16 %v1731, %v1730
    %v2138 = vpack.c.b16 %v1733, %v1732
    %v2139 = vpack.c.b16 %v1735, %v1734
    %v2140 = vpack.c.b16 %v1737, %v1736
    %v2141 = vpack.c.b16 %v1739, %v1738
    %v2142 = vpack.c.b16 %v1741, %v1740
    %v2143 = vpack.c.b16 %v1743, %v1742
    %v2144 = vpack.c.b16 %v1745, %v1744
    %v2145 = vpack.c.b16 %v1747, %v1746
    %v2146 = vpack.c.b16 %v1749, %v1748
    %v2147 = vpack.c.b16 %v1751, %v1750
    %v2148 = vpack.c.b16 %v1753, %v1752
    %v2149 = vpack.c.b16 %v1755, %v1754
    %v2150 = vpack.c.b16 %v1757, %v1756
    %v2151 = vpack.c.b16 %v1759, %v1758
    %v2152 = vpack.c.b16 %v1761, %v1760
    %v2153 = vpack.c.b16 %v1763, %v1762
    %v2154 = vpack.c.b16 %v1765, %v1764
    %v2155 = vpack.c.b16 %v1767, %v1766
    %v2156 = vpack.c.b16 %v1769, %v1768
    %v2157 = vpack.c.b16 %v1771, %v1770
    %v2158 = vpack.c.b16 %v1773, %v1772
    %v2159 = vpack.c.b16 %v1775, %v1774
    %v2160 = vpack.c.b16 %v1777, %v1776
    %v2161 = vpack.c.b16 %v1779, %v1778
    %v2162 = vpack.c.b16 %v1781, %v1780
    %v2163 = vpack.c.b16 %v1783, %v1782
    %v2164 = vpack.c.b16 %v1785, %v1784
    %v2165 = vpack.c.b16 %v1787, %v1786
    %v2166 = vpack.c.b16 %v1789, %v1788
    %v2167 = vpack.c.b16 %v1791, %v1790
    %v2168 = vpack.c.b16 %v1793, %v1792
    %v2169 = vpack.c.b16 %v1795, %v1794
    %v2170 = vpack.c.b16 %v1797, %v1796
    %v2171 = vpack.c.b16 %v1799, %v1798
    %v2172 = vpack.c.b16 %v1801, %v1800
    %v2173 = vpack.c.b16 %v1803, %v1802
    %v2174 = vpack.c.b16 %v1805, %v1804
    %v2175 = vpack.c.b16 %v1807, %v1806
    %v2176 = vpack.c.b16 %v1809, %v1808
    %v2177 = vpack.c.b16 %v1811, %v1810
    %v2178 = vpack.c.b16 %v1813, %v1812
    %v2179 = vpack.c.b16 %v1815, %v1814
    %v2180 = vpack.c.b16 %v1817, %v1816
    %v2181 = vpack.c.b16 %v1819, %v1818
    %v2182 = vpack.c.b16 %v1821, %v1820
    %v2183 = vpack.c.b16 %v1823, %v1822
    %v2184 = vpack.c.b16 %v1825, %v1824
    %v2185 = vpack.c.b16 %v1827, %v1826
    %v2186 = vpack.c.b16 %v1829, %v1828
    %v2187 = vpack.c.b16 %v1831, %v1830
    %v2188 = vpack.c.b16 %v1833, %v1832
    %v2189 = vpack.c.b16 %v1835, %v1834
    %v2190 = vpack.c.b16 %v1837, %v1836
    %v2191 = vpack.c.b16 %v1839, %v1838
    %v2192 = vpack.c.b16 %v1841, %v1840
    %v2193 = vpack.c.b16 %v1843, %v1842
    %v2194 = vpack.c.b16 %v1845, %v1844
    %v2195 = vpack.c.b16 %v1847, %v1846
    %v2196 = vpack.c.b16 %v1849, %v1848
    %v2197 = vpack.c.b16 %v1851, %v1850
    %v2198 = vpack.c.b16 %v1853, %v1852
    %v2199 = vpack.c.b16 %v1855, %v1854
    %v2200 = vpack.c.b16 %v1857, %v1856
    %v2201 = vpack.c.b16 %v1859, %v1858
    %v2202 = vpack.c.b16 %v1861, %v1860
    %v2203 = vpack.c.b16 %v1863, %v1862
    %v2204 = vpack.c.b16 %v1865, %v1864
    %v2205 = vpack.c.b16 %v1867, %v1866
    %v2206 = vpack.c.b16 %v1869, %v1868
    %v2207 = vpack.c.b16 %v1871, %v1870
    %v2208 = vpack.c.b16 %v1873, %v1872
    %v2209 = vpack.c.b16 %v1875, %v1874
    %v2210 = vpack.c.b16 %v1877, %v1876
    %v2211 = vpack.c.b16 %v1879, %v1878
    %v2212 = vpack.c.b16 %v1881, %v1880
    %v2213 = vpack.c.b16 %v1883, %v1882
    %v2214 = vpack.c.b16 %v1885, %v1884
    %v2215 = vpack.c.b16 %v1887, %v1886
    %v2216 = vpack.c.b16 %v1889, %v1888
    %v2217 = vpack.c.b16 %v1891, %v1890
    %v2218 = vpack.c.b16 %v1893, %v1892
    %v2219 = vpack.c.b16 %v1895, %v1894
    %v2220 = vpack.c.b16 %v1897, %v1896
    %v2221 = vpack.c.b16 %v1899, %v1898
    %v2222 = vpack.c.b16 %v1901, %v1900
    %v2223 = vpack.c.b16 %v1903, %v1902
    %v2224 = vpack.c.b16 %v1905, %v1904
    %v2225 = vpack.c.b16 %v1907, %v1906
    %v2226 = vpack.c.b16 %v1909, %v1908
    %v2227 = vpack.c.b16 %v1911, %v1910
    %v2228 = vpack.c.b16 %v1913, %v1912
    %v2229 = vpack.c.b16 %v1915, %v1914
    %v2230 = vpack.c.b16 %v1917, %v1916
    %v2231 = vpack.c.b16 %v1919, %v1918
    %v2232 = vpack.c.b16 %v1921, %v1920
    %v2233 = vpack.c.b16 %v1923, %v1922
    %v2234 = vpack.c.b16 %v1925, %v1924
    %v2235 = vpack.c.b16 %v1927, %v1926
    %v2236 = vpack.c.b16 %v1929, %v1928
    %v2237 = vpack.c.b16 %v1931, %v1930
    %v2238 = vpack.c.b16 %v1933, %v1932
    %v2239 = vpack.c.b16 %v1935, %v1934
    %v2240 = vpack.c.b16 %v1937, %v1936
    %v2241 = vpack.c.b16 %v1939, %v1938
    %v2242 = vpack.c.b16 %v1941, %v1940
    %v2243 = vpack.c.b16 %v1943, %v1942
    %v2244 = vpack.c.b16 %v1945, %v1944
    %v2245 = vpack.c.b16 %v1947, %v1946
    %v2246 = vpack.c.b16 %v1949, %v1948
    %v2247 = vpack.c.b16 %v1951, %v1950
    %v2248 = vpack.c.b16 %v1953, %v1952
    %v2249 = vpack.c.b16 %v1955, %v1954
    %v2250 = vpack.c.b16 %v1957, %v1956
    %v2251 = vpack.c.b16 %v1959, %v1958
    %v2252 = vpack.c.b16 %v1961, %v1960
    %v2253 = vpack.c.b16 %v1963, %v1962
    %v2254 = vpack.c.b16 %v1965, %v1964
    %v2255 = vpack.c.b16 %v1967, %v1966
    %v2256 = vpack.c.b16 %v1969, %v1968
    %v2257 = vpack.c.b16 %v1971, %v1970
    %v2258 = vpack.c.b16 %v1973, %v1972
    %v2259 = vpack.c.b16 %v1975, %v1974
    %v2260 = vpack.c.b16 %v1977, %v1976
    %v2261 = vpack.c.b16 %v1979, %v1978
    %v2262 = vpack.c.b16 %v1981, %v1980
    %v2263 = vpack.c.b16 %v1983, %v1982
    %v2264 = vpack.c.b16 %v1985, %v1984
    %v2265 = vpack.c.b16 %v1987, %v1986
    %v2266 = vpack.c.b16 %v1989, %v1988
    %v2267 = vpack.c.b16 %v1991, %v1990
    %v2268 = vpack.c.b16 %v1993, %v1992
    %v2269 = vpack.c.b16 %v1995, %v1994
    %v2270 = vpack.c.b16 %v1997, %v1996
    %v2271 = vpack.c.b16 %v1999, %v1998
    %v2272 = vpack.c.b16 %v2001, %v2000
    %v2273 = vpack.c.b16 %v2003, %v2002
    %v2274 = vpack.c.b16 %v2005, %v2004
    %v2275 = vpack.c.b16 %v2007, %v2006
    %v2276 = vpack.c.b16 %v2009, %v2008
    %v2277 = vpack.c.b16 %v2011, %v2010
    %v2278 = vpack.c.b16 %v2013, %v2012
    %v2279 = vpack.c.b16 %v2015, %v2014
    %v2280 = vpack.c.b16 %v2017, %v2016
    %v2281 = vpack.c.b16 %v2019, %v2018
    %v2282 = vpack.c.b16 %v2021, %v2020
    %v2283 = vpack.c.b16 %v2023, %v2022
    %v2284 = vpack.c.b16 %v2025, %v2024
    %v2285 = vpack.c.b16 %v2027, %v2026
    %v2286 = vpack.c.b16 %v2029, %v2028
    %v2287 = vpack.c.b16 %v2031, %v2030
    %2544 = vmatprep.subr.bf16.mxu0 0
    %2545 = vmatpush1.bf16.msra.mxu0 %v2032
    %2546 = vmatprep.subr.bf16.mxu0 0
    %2547 = vmatpush1.bf16.msra.mxu0 %v2033
    %2548 = vmatprep.subr.bf16.mxu0 0
    %2549 = vmatpush1.bf16.msra.mxu0 %v2034
    %2550 = vmatprep.subr.bf16.mxu0 0
    %2551 = vmatpush1.bf16.msra.mxu0 %v2035
    %2552 = vmatprep.subr.bf16.mxu0 0
    %2553 = vmatpush1.bf16.msra.mxu0 %v2036
    %2554 = vmatprep.subr.bf16.mxu0 0
    %2555 = vmatpush1.bf16.msra.mxu0 %v2037
    %2556 = vmatprep.subr.bf16.mxu0 0
    %2557 = vmatpush1.bf16.msra.mxu0 %v2038
    %2558 = vmatprep.subr.bf16.mxu0 0
    %2559 = vmatpush1.bf16.msra.mxu0 %v2039
    %2560 = vmatprep.subr.bf16.mxu0 0
    %2561 = vmatpush1.bf16.msra.mxu0 %v2040
    %2562 = vmatprep.subr.bf16.mxu0 0
    %2563 = vmatpush1.bf16.msra.mxu0 %v2041
    %2564 = vmatprep.subr.bf16.mxu0 0
    %2565 = vmatpush1.bf16.msra.mxu0 %v2042
    %2566 = vmatprep.subr.bf16.mxu0 0
    %2567 = vmatpush1.bf16.msra.mxu0 %v2043
    %2568 = vmatprep.subr.bf16.mxu0 0
    %2569 = vmatpush1.bf16.msra.mxu0 %v2044
    %2570 = vmatprep.subr.bf16.mxu0 0
    %2571 = vmatpush1.bf16.msra.mxu0 %v2045
    %2572 = vmatprep.subr.bf16.mxu0 0
    %2573 = vmatpush1.bf16.msra.mxu0 %v2046
    %2574 = vmatprep.subr.bf16.mxu0 0
    %2575 = vmatpush1.bf16.msra.mxu0 %v2047
    %2576 = vmatprep.mubr.bf16.mxu0 %v881
    %2577 = vmatmul.mubr.bf16.gmra.mrb[0].mxu0 %v880
    %v2578 = vpop.f32.mrb[0].mxu0
    %v2579 = vadd.f32 %v686, %v2578
    %v2580 = vpop.f32.mrb[0].mxu0
    %v2581 = vpop.f32.mrb[0].mxu0
    %v2582 = vadd.f32 %v686, %v2581
    %v2583 = vpop.f32.mrb[0].mxu0
    %2584 = vmatprep.mubr.bf16.mxu0 %v913
    %2585 = vmatmul.mubr.bf16.gmra.mrb[0].mxu0 %v912
    %v2586 = vpop.f32.mrb[0].mxu0
    %v2587 = vadd.f32 %v686, %v2586
    %v2588 = vpop.f32.mrb[0].mxu0
    %v2589 = vpop.f32.mrb[0].mxu0
    %v2590 = vadd.f32 %v686, %v2589
    %v2591 = vpop.f32.mrb[0].mxu0
    %2592 = vdwg.mxu0
    %2593 = vmatprep.subr.bf16.mxu0 0
    %2594 = vmatpush1.bf16.msra.mxu0 %v2048
    %2595 = vmatprep.subr.bf16.mxu0 0
    %2596 = vmatpush1.bf16.msra.mxu0 %v2049
    %2597 = vmatprep.subr.bf16.mxu0 0
    %2598 = vmatpush1.bf16.msra.mxu0 %v2050
    %2599 = vmatprep.subr.bf16.mxu0 0
    %2600 = vmatpush1.bf16.msra.mxu0 %v2051
    %2601 = vmatprep.subr.bf16.mxu0 0
    %2602 = vmatpush1.bf16.msra.mxu0 %v2052
    %2603 = vmatprep.subr.bf16.mxu0 0
    %2604 = vmatpush1.bf16.msra.mxu0 %v2053
    %2605 = vmatprep.subr.bf16.mxu0 0
    %2606 = vmatpush1.bf16.msra.mxu0 %v2054
    %2607 = vmatprep.subr.bf16.mxu0 0
    %2608 = vmatpush1.bf16.msra.mxu0 %v2055
    %2609 = vmatprep.subr.bf16.mxu0 0
    %2610 = vmatpush1.bf16.msra.mxu0 %v2056
    %2611 = vmatprep.subr.bf16.mxu0 0
    %2612 = vmatpush1.bf16.msra.mxu0 %v2057
    %2613 = vmatprep.subr.bf16.mxu0 0
    %2614 = vmatpush1.bf16.msra.mxu0 %v2058
    %2615 = vmatprep.subr.bf16.mxu0 0
    %2616 = vmatpush1.bf16.msra.mxu0 %v2059
    %2617 = vmatprep.subr.bf16.mxu0 0
    %2618 = vmatpush1.bf16.msra.mxu0 %v2060
    %2619 = vmatprep.subr.bf16.mxu0 0
    %2620 = vmatpush1.bf16.msra.mxu0 %v2061
    %2621 = vmatprep.subr.bf16.mxu0 0
    %2622 = vmatpush1.bf16.msra.mxu0 %v2062
    %2623 = vmatprep.subr.bf16.mxu0 0
    %2624 = vmatpush1.bf16.msra.mxu0 %v2063
    %2625 = vmatprep.mubr.bf16.mxu0 %v883
    %2626 = vmatmul.mubr.bf16.gmra.mrb[0].mxu0 %v882
    %v2627 = vpop.f32.mrb[0].mxu0
    %v2628 = vadd.f32 %v2579, %v2627
    %v2629 = vpop.f32.mrb[0].mxu0
    %v2630 = vpop.f32.mrb[0].mxu0
    %v2631 = vadd.f32 %v2582, %v2630
    %v2632 = vpop.f32.mrb[0].mxu0
    %2633 = vmatprep.mubr.bf16.mxu0 %v915
    %2634 = vmatmul.mubr.bf16.gmra.mrb[0].mxu0 %v914
    %v2635 = vpop.f32.mrb[0].mxu0
    %v2636 = vadd.f32 %v2587, %v2635
    %v2637 = vpop.f32.mrb[0].mxu0
    %v2638 = vpop.f32.mrb[0].mxu0
    %v2639 = vadd.f32 %v2590, %v2638
    %v2640 = vpop.f32.mrb[0].mxu0
    %2641 = vdwg.mxu0
    %2642 = vmatprep.subr.bf16.mxu0 0
    %2643 = vmatpush1.bf16.msra.mxu0 %v2064
    %2644 = vmatprep.subr.bf16.mxu0 0
    %2645 = vmatpush1.bf16.msra.mxu0 %v2065
    %2646 = vmatprep.subr.bf16.mxu0 0
    %2647 = vmatpush1.bf16.msra.mxu0 %v2066
    %2648 = vmatprep.subr.bf16.mxu0 0
    %2649 = vmatpush1.bf16.msra.mxu0 %v2067
    %2650 = vmatprep.subr.bf16.mxu0 0
    %2651 = vmatpush1.bf16.msra.mxu0 %v2068
    %2652 = vmatprep.subr.bf16.mxu0 0
    %2653 = vmatpush1.bf16.msra.mxu0 %v2069
    %2654 = vmatprep.subr.bf16.mxu0 0
    %2655 = vmatpush1.bf16.msra.mxu0 %v2070
    %2656 = vmatprep.subr.bf16.mxu0 0
    %2657 = vmatpush1.bf16.msra.mxu0 %v2071
    %2658 = vmatprep.subr.bf16.mxu0 0
    %2659 = vmatpush1.bf16.msra.mxu0 %v2072
    %2660 = vmatprep.subr.bf16.mxu0 0
    %2661 = vmatpush1.bf16.msra.mxu0 %v2073
    %2662 = vmatprep.subr.bf16.mxu0 0
    %2663 = vmatpush1.bf16.msra.mxu0 %v2074
    %2664 = vmatprep.subr.bf16.mxu0 0
    %2665 = vmatpush1.bf16.msra.mxu0 %v2075
    %2666 = vmatprep.subr.bf16.mxu0 0
    %2667 = vmatpush1.bf16.msra.mxu0 %v2076
    %2668 = vmatprep.subr.bf16.mxu0 0
    %2669 = vmatpush1.bf16.msra.mxu0 %v2077
    %2670 = vmatprep.subr.bf16.mxu0 0
    %2671 = vmatpush1.bf16.msra.mxu0 %v2078
    %2672 = vmatprep.subr.bf16.mxu0 0
    %2673 = vmatpush1.bf16.msra.mxu0 %v2079
    %2674 = vmatprep.mubr.bf16.mxu0 %v885
    %2675 = vmatmul.mubr.bf16.gmra.mrb[0].mxu0 %v884
    %v2676 = vpop.f32.mrb[0].mxu0
    %v2677 = vadd.f32 %v2628, %v2676
    %v2678 = vpop.f32.mrb[0].mxu0
    %v2679 = vpop.f32.mrb[0].mxu0
    %v2680 = vadd.f32 %v2631, %v2679
    %v2681 = vpop.f32.mrb[0].mxu0
    %2682 = vmatprep.mubr.bf16.mxu0 %v917
    %2683 = vmatmul.mubr.bf16.gmra.mrb[0].mxu0 %v916
    %v2684 = vpop.f32.mrb[0].mxu0
    %v2685 = vadd.f32 %v2636, %v2684
    %v2686 = vpop.f32.mrb[0].mxu0
    %v2687 = vpop.f32.mrb[0].mxu0
    %v2688 = vadd.f32 %v2639, %v2687
    %v2689 = vpop.f32.mrb[0].mxu0
    %2690 = vdwg.mxu0
    %2691 = vmatprep.subr.bf16.mxu0 0
    %2692 = vmatpush1.bf16.msra.mxu0 %v2080
    %2693 = vmatprep.subr.bf16.mxu0 0
    %2694 = vmatpush1.bf16.msra.mxu0 %v2081
    %2695 = vmatprep.subr.bf16.mxu0 0
    %2696 = vmatpush1.bf16.msra.mxu0 %v2082
    %2697 = vmatprep.subr.bf16.mxu0 0
    %2698 = vmatpush1.bf16.msra.mxu0 %v2083
    %2699 = vmatprep.subr.bf16.mxu0 0
    %2700 = vmatpush1.bf16.msra.mxu0 %v2084
    %2701 = vmatprep.subr.bf16.mxu0 0
    %2702 = vmatpush1.bf16.msra.mxu0 %v2085
    %2703 = vmatprep.subr.bf16.mxu0 0
    %2704 = vmatpush1.bf16.msra.mxu0 %v2086
    %2705 = vmatprep.subr.bf16.mxu0 0
    %2706 = vmatpush1.bf16.msra.mxu0 %v2087
    %2707 = vmatprep.subr.bf16.mxu0 0
    %2708 = vmatpush1.bf16.msra.mxu0 %v2088
    %2709 = vmatprep.subr.bf16.mxu0 0
    %2710 = vmatpush1.bf16.msra.mxu0 %v2089
    %2711 = vmatprep.subr.bf16.mxu0 0
    %2712 = vmatpush1.bf16.msra.mxu0 %v2090
    %2713 = vmatprep.subr.bf16.mxu0 0
    %2714 = vmatpush1.bf16.msra.mxu0 %v2091
    %2715 = vmatprep.subr.bf16.mxu0 0
    %2716 = vmatpush1.bf16.msra.mxu0 %v2092
    %2717 = vmatprep.subr.bf16.mxu0 0
    %2718 = vmatpush1.bf16.msra.mxu0 %v2093
    %2719 = vmatprep.subr.bf16.mxu0 0
    %2720 = vmatpush1.bf16.msra.mxu0 %v2094
    %2721 = vmatprep.subr.bf16.mxu0 0
    %2722 = vmatpush1.bf16.msra.mxu0 %v2095
    %2723 = vmatprep.mubr.bf16.mxu0 %v887
    %2724 = vmatmul.mubr.bf16.gmra.mrb[0].mxu0 %v886
    %v2725 = vpop.f32.mrb[0].mxu0
    %v2726 = vadd.f32 %v2677, %v2725
    %v2727 = vpop.f32.mrb[0].mxu0
    %v2728 = vpop.f32.mrb[0].mxu0
    %v2729 = vadd.f32 %v2680, %v2728
    %v2730 = vpop.f32.mrb[0].mxu0
    %2731 = vmatprep.mubr.bf16.mxu0 %v919
    %2732 = vmatmul.mubr.bf16.gmra.mrb[0].mxu0 %v918
    %v2733 = vpop.f32.mrb[0].mxu0
    %v2734 = vadd.f32 %v2685, %v2733
    %v2735 = vpop.f32.mrb[0].mxu0
    %v2736 = vpop.f32.mrb[0].mxu0
    %v2737 = vadd.f32 %v2688, %v2736
    %v2738 = vpop.f32.mrb[0].mxu0
    %2739 = vdwg.mxu0
    %2740 = vmatprep.subr.bf16.mxu0 0
    %2741 = vmatpush1.bf16.msra.mxu0 %v2096
    %2742 = vmatprep.subr.bf16.mxu0 0
    %2743 = vmatpush1.bf16.msra.mxu0 %v2097
    %2744 = vmatprep.subr.bf16.mxu0 0
    %2745 = vmatpush1.bf16.msra.mxu0 %v2098
    %2746 = vmatprep.subr.bf16.mxu0 0
    %2747 = vmatpush1.bf16.msra.mxu0 %v2099
    %2748 = vmatprep.subr.bf16.mxu0 0
    %2749 = vmatpush1.bf16.msra.mxu0 %v2100
    %2750 = vmatprep.subr.bf16.mxu0 0
    %2751 = vmatpush1.bf16.msra.mxu0 %v2101
    %2752 = vmatprep.subr.bf16.mxu0 0
    %2753 = vmatpush1.bf16.msra.mxu0 %v2102
    %2754 = vmatprep.subr.bf16.mxu0 0
    %2755 = vmatpush1.bf16.msra.mxu0 %v2103
    %2756 = vmatprep.subr.bf16.mxu0 0
    %2757 = vmatpush1.bf16.msra.mxu0 %v2104
    %2758 = vmatprep.subr.bf16.mxu0 0
    %2759 = vmatpush1.bf16.msra.mxu0 %v2105
    %2760 = vmatprep.subr.bf16.mxu0 0
    %2761 = vmatpush1.bf16.msra.mxu0 %v2106
    %2762 = vmatprep.subr.bf16.mxu0 0
    %2763 = vmatpush1.bf16.msra.mxu0 %v2107
    %2764 = vmatprep.subr.bf16.mxu0 0
    %2765 = vmatpush1.bf16.msra.mxu0 %v2108
    %2766 = vmatprep.subr.bf16.mxu0 0
    %2767 = vmatpush1.bf16.msra.mxu0 %v2109
    %2768 = vmatprep.subr.bf16.mxu0 0
    %2769 = vmatpush1.bf16.msra.mxu0 %v2110
    %2770 = vmatprep.subr.bf16.mxu0 0
    %2771 = vmatpush1.bf16.msra.mxu0 %v2111
    %2772 = vmatprep.mubr.bf16.mxu0 %v889
    %2773 = vmatmul.mubr.bf16.gmra.mrb[0].mxu0 %v888
    %v2774 = vpop.f32.mrb[0].mxu0
    %v2775 = vadd.f32 %v2726, %v2774
    %v2776 = vpop.f32.mrb[0].mxu0
    %v2777 = vpop.f32.mrb[0].mxu0
    %v2778 = vadd.f32 %v2729, %v2777
    %v2779 = vpop.f32.mrb[0].mxu0
    %2780 = vmatprep.mubr.bf16.mxu0 %v921
    %2781 = vmatmul.mubr.bf16.gmra.mrb[0].mxu0 %v920
    %v2782 = vpop.f32.mrb[0].mxu0
    %v2783 = vadd.f32 %v2734, %v2782
    %v2784 = vpop.f32.mrb[0].mxu0
    %v2785 = vpop.f32.mrb[0].mxu0
    %v2786 = vadd.f32 %v2737, %v2785
    %v2787 = vpop.f32.mrb[0].mxu0
    %2788 = vdwg.mxu0
    %2789 = vmatprep.subr.bf16.mxu0 0
    %2790 = vmatpush1.bf16.msra.mxu0 %v2112
    %2791 = vmatprep.subr.bf16.mxu0 0
    %2792 = vmatpush1.bf16.msra.mxu0 %v2113
    %2793 = vmatprep.subr.bf16.mxu0 0
    %2794 = vmatpush1.bf16.msra.mxu0 %v2114
    %2795 = vmatprep.subr.bf16.mxu0 0
    %2796 = vmatpush1.bf16.msra.mxu0 %v2115
    %2797 = vmatprep.subr.bf16.mxu0 0
    %2798 = vmatpush1.bf16.msra.mxu0 %v2116
    %2799 = vmatprep.subr.bf16.mxu0 0
    %2800 = vmatpush1.bf16.msra.mxu0 %v2117
    %2801 = vmatprep.subr.bf16.mxu0 0
    %2802 = vmatpush1.bf16.msra.mxu0 %v2118
    %2803 = vmatprep.subr.bf16.mxu0 0
    %2804 = vmatpush1.bf16.msra.mxu0 %v2119
    %2805 = vmatprep.subr.bf16.mxu0 0
    %2806 = vmatpush1.bf16.msra.mxu0 %v2120
    %2807 = vmatprep.subr.bf16.mxu0 0
    %2808 = vmatpush1.bf16.msra.mxu0 %v2121
    %2809 = vmatprep.subr.bf16.mxu0 0
    %2810 = vmatpush1.bf16.msra.mxu0 %v2122
    %2811 = vmatprep.subr.bf16.mxu0 0
    %2812 = vmatpush1.bf16.msra.mxu0 %v2123
    %2813 = vmatprep.subr.bf16.mxu0 0
    %2814 = vmatpush1.bf16.msra.mxu0 %v2124
    %2815 = vmatprep.subr.bf16.mxu0 0
    %2816 = vmatpush1.bf16.msra.mxu0 %v2125
    %2817 = vmatprep.subr.bf16.mxu0 0
    %2818 = vmatpush1.bf16.msra.mxu0 %v2126
    %2819 = vmatprep.subr.bf16.mxu0 0
    %2820 = vmatpush1.bf16.msra.mxu0 %v2127
    %2821 = vmatprep.mubr.bf16.mxu0 %v891
    %2822 = vmatmul.mubr.bf16.gmra.mrb[0].mxu0 %v890
    %v2823 = vpop.f32.mrb[0].mxu0
    %v2824 = vadd.f32 %v2775, %v2823
    %v2825 = vpop.f32.mrb[0].mxu0
    %v2826 = vpop.f32.mrb[0].mxu0
    %v2827 = vadd.f32 %v2778, %v2826
    %v2828 = vpop.f32.mrb[0].mxu0
    %2829 = vmatprep.mubr.bf16.mxu0 %v923
    %2830 = vmatmul.mubr.bf16.gmra.mrb[0].mxu0 %v922
    %v2831 = vpop.f32.mrb[0].mxu0
    %v2832 = vadd.f32 %v2783, %v2831
    %v2833 = vpop.f32.mrb[0].mxu0
    %v2834 = vpop.f32.mrb[0].mxu0
    %v2835 = vadd.f32 %v2786, %v2834
    %v2836 = vpop.f32.mrb[0].mxu0
    %2837 = vdwg.mxu0
    %2838 = vmatprep.subr.bf16.mxu0 0
    %2839 = vmatpush1.bf16.msra.mxu0 %v2128
    %2840 = vmatprep.subr.bf16.mxu0 0
    %2841 = vmatpush1.bf16.msra.mxu0 %v2129
    %2842 = vmatprep.subr.bf16.mxu0 0
    %2843 = vmatpush1.bf16.msra.mxu0 %v2130
    %2844 = vmatprep.subr.bf16.mxu0 0
    %2845 = vmatpush1.bf16.msra.mxu0 %v2131
    %2846 = vmatprep.subr.bf16.mxu0 0
    %2847 = vmatpush1.bf16.msra.mxu0 %v2132
    %2848 = vmatprep.subr.bf16.mxu0 0
    %2849 = vmatpush1.bf16.msra.mxu0 %v2133
    %2850 = vmatprep.subr.bf16.mxu0 0
    %2851 = vmatpush1.bf16.msra.mxu0 %v2134
    %2852 = vmatprep.subr.bf16.mxu0 0
    %2853 = vmatpush1.bf16.msra.mxu0 %v2135
    %2854 = vmatprep.subr.bf16.mxu0 0
    %2855 = vmatpush1.bf16.msra.mxu0 %v2136
    %2856 = vmatprep.subr.bf16.mxu0 0
    %2857 = vmatpush1.bf16.msra.mxu0 %v2137
    %2858 = vmatprep.subr.bf16.mxu0 0
    %2859 = vmatpush1.bf16.msra.mxu0 %v2138
    %2860 = vmatprep.subr.bf16.mxu0 0
    %2861 = vmatpush1.bf16.msra.mxu0 %v2139
    %2862 = vmatprep.subr.bf16.mxu0 0
    %2863 = vmatpush1.bf16.msra.mxu0 %v2140
    %2864 = vmatprep.subr.bf16.mxu0 0
    %2865 = vmatpush1.bf16.msra.mxu0 %v2141
    %2866 = vmatprep.subr.bf16.mxu0 0
    %2867 = vmatpush1.bf16.msra.mxu0 %v2142
    %2868 = vmatprep.subr.bf16.mxu0 0
    %2869 = vmatpush1.bf16.msra.mxu0 %v2143
    %2870 = vmatprep.mubr.bf16.mxu0 %v893
    %2871 = vmatmul.mubr.bf16.gmra.mrb[0].mxu0 %v892
    %v2872 = vpop.f32.mrb[0].mxu0
    %v2873 = vadd.f32 %v2824, %v2872
    %v2874 = vpop.f32.mrb[0].mxu0
    %v2875 = vpop.f32.mrb[0].mxu0
    %v2876 = vadd.f32 %v2827, %v2875
    %v2877 = vpop.f32.mrb[0].mxu0
    %2878 = vmatprep.mubr.bf16.mxu0 %v925
    %2879 = vmatmul.mubr.bf16.gmra.mrb[0].mxu0 %v924
    %v2880 = vpop.f32.mrb[0].mxu0
    %v2881 = vadd.f32 %v2832, %v2880
    %v2882 = vpop.f32.mrb[0].mxu0
    %v2883 = vpop.f32.mrb[0].mxu0
    %v2884 = vadd.f32 %v2835, %v2883
    %v2885 = vpop.f32.mrb[0].mxu0
    %2886 = vdwg.mxu0
    %2887 = vmatprep.subr.bf16.mxu0 0
    %2888 = vmatpush1.bf16.msra.mxu0 %v2144
    %2889 = vmatprep.subr.bf16.mxu0 0
    %2890 = vmatpush1.bf16.msra.mxu0 %v2145
    %2891 = vmatprep.subr.bf16.mxu0 0
    %2892 = vmatpush1.bf16.msra.mxu0 %v2146
    %2893 = vmatprep.subr.bf16.mxu0 0
    %2894 = vmatpush1.bf16.msra.mxu0 %v2147
    %2895 = vmatprep.subr.bf16.mxu0 0
    %2896 = vmatpush1.bf16.msra.mxu0 %v2148
    %2897 = vmatprep.subr.bf16.mxu0 0
    %2898 = vmatpush1.bf16.msra.mxu0 %v2149
    %2899 = vmatprep.subr.bf16.mxu0 0
    %2900 = vmatpush1.bf16.msra.mxu0 %v2150
    %2901 = vmatprep.subr.bf16.mxu0 0
    %2902 = vmatpush1.bf16.msra.mxu0 %v2151
    %2903 = vmatprep.subr.bf16.mxu0 0
    %2904 = vmatpush1.bf16.msra.mxu0 %v2152
    %2905 = vmatprep.subr.bf16.mxu0 0
    %2906 = vmatpush1.bf16.msra.mxu0 %v2153
    %2907 = vmatprep.subr.bf16.mxu0 0
    %2908 = vmatpush1.bf16.msra.mxu0 %v2154
    %2909 = vmatprep.subr.bf16.mxu0 0
    %2910 = vmatpush1.bf16.msra.mxu0 %v2155
    %2911 = vmatprep.subr.bf16.mxu0 0
    %2912 = vmatpush1.bf16.msra.mxu0 %v2156
    %2913 = vmatprep.subr.bf16.mxu0 0
    %2914 = vmatpush1.bf16.msra.mxu0 %v2157
    %2915 = vmatprep.subr.bf16.mxu0 0
    %2916 = vmatpush1.bf16.msra.mxu0 %v2158
    %2917 = vmatprep.subr.bf16.mxu0 0
    %2918 = vmatpush1.bf16.msra.mxu0 %v2159
    %2919 = vmatprep.mubr.bf16.mxu0 %v895
    %2920 = vmatmul.mubr.bf16.gmra.mrb[0].mxu0 %v894
    %v2921 = vpop.f32.mrb[0].mxu0
    %v2922 = vadd.f32 %v2873, %v2921
    %v2923 = vpop.f32.mrb[0].mxu0
    %v2924 = vpop.f32.mrb[0].mxu0
    %v2925 = vadd.f32 %v2876, %v2924
    %v2926 = vpop.f32.mrb[0].mxu0
    %2927 = vmatprep.mubr.bf16.mxu0 %v927
    %2928 = vmatmul.mubr.bf16.gmra.mrb[0].mxu0 %v926
    %v2929 = vpop.f32.mrb[0].mxu0
    %v2930 = vadd.f32 %v2881, %v2929
    %v2931 = vpop.f32.mrb[0].mxu0
    %v2932 = vpop.f32.mrb[0].mxu0
    %v2933 = vadd.f32 %v2884, %v2932
    %v2934 = vpop.f32.mrb[0].mxu0
    %2935 = vdwg.mxu0
    %2936 = vmatprep.subr.bf16.mxu0 0
    %2937 = vmatpush1.bf16.msra.mxu0 %v2160
    %2938 = vmatprep.subr.bf16.mxu0 0
    %2939 = vmatpush1.bf16.msra.mxu0 %v2161
    %2940 = vmatprep.subr.bf16.mxu0 0
    %2941 = vmatpush1.bf16.msra.mxu0 %v2162
    %2942 = vmatprep.subr.bf16.mxu0 0
    %2943 = vmatpush1.bf16.msra.mxu0 %v2163
    %2944 = vmatprep.subr.bf16.mxu0 0
    %2945 = vmatpush1.bf16.msra.mxu0 %v2164
    %2946 = vmatprep.subr.bf16.mxu0 0
    %2947 = vmatpush1.bf16.msra.mxu0 %v2165
    %2948 = vmatprep.subr.bf16.mxu0 0
    %2949 = vmatpush1.bf16.msra.mxu0 %v2166
    %2950 = vmatprep.subr.bf16.mxu0 0
    %2951 = vmatpush1.bf16.msra.mxu0 %v2167
    %2952 = vmatprep.subr.bf16.mxu0 0
    %2953 = vmatpush1.bf16.msra.mxu0 %v2168
    %2954 = vmatprep.subr.bf16.mxu0 0
    %2955 = vmatpush1.bf16.msra.mxu0 %v2169
    %2956 = vmatprep.subr.bf16.mxu0 0
    %2957 = vmatpush1.bf16.msra.mxu0 %v2170
    %2958 = vmatprep.subr.bf16.mxu0 0
    %2959 = vmatpush1.bf16.msra.mxu0 %v2171
    %2960 = vmatprep.subr.bf16.mxu0 0
    %2961 = vmatpush1.bf16.msra.mxu0 %v2172
    %2962 = vmatprep.subr.bf16.mxu0 0
    %2963 = vmatpush1.bf16.msra.mxu0 %v2173
    %2964 = vmatprep.subr.bf16.mxu0 0
    %2965 = vmatpush1.bf16.msra.mxu0 %v2174
    %2966 = vmatprep.subr.bf16.mxu0 0
    %2967 = vmatpush1.bf16.msra.mxu0 %v2175
    %2968 = vmatprep.mubr.bf16.mxu0 %v897
    %2969 = vmatmul.mubr.bf16.gmra.mrb[0].mxu0 %v896
    %v2970 = vpop.f32.mrb[0].mxu0
    %v2971 = vadd.f32 %v2922, %v2970
    %v2972 = vpop.f32.mrb[0].mxu0
    %v2973 = vpop.f32.mrb[0].mxu0
    %v2974 = vadd.f32 %v2925, %v2973
    %v2975 = vpop.f32.mrb[0].mxu0
    %2976 = vmatprep.mubr.bf16.mxu0 %v929
    %2977 = vmatmul.mubr.bf16.gmra.mrb[0].mxu0 %v928
    %v2978 = vpop.f32.mrb[0].mxu0
    %v2979 = vadd.f32 %v2930, %v2978
    %v2980 = vpop.f32.mrb[0].mxu0
    %v2981 = vpop.f32.mrb[0].mxu0
    %v2982 = vadd.f32 %v2933, %v2981
    %v2983 = vpop.f32.mrb[0].mxu0
    %2984 = vdwg.mxu0
    %2985 = vmatprep.subr.bf16.mxu0 0
    %2986 = vmatpush1.bf16.msra.mxu0 %v2176
    %2987 = vmatprep.subr.bf16.mxu0 0
    %2988 = vmatpush1.bf16.msra.mxu0 %v2177
    %2989 = vmatprep.subr.bf16.mxu0 0
    %2990 = vmatpush1.bf16.msra.mxu0 %v2178
    %2991 = vmatprep.subr.bf16.mxu0 0
    %2992 = vmatpush1.bf16.msra.mxu0 %v2179
    %2993 = vmatprep.subr.bf16.mxu0 0
    %2994 = vmatpush1.bf16.msra.mxu0 %v2180
    %2995 = vmatprep.subr.bf16.mxu0 0
    %2996 = vmatpush1.bf16.msra.mxu0 %v2181
    %2997 = vmatprep.subr.bf16.mxu0 0
    %2998 = vmatpush1.bf16.msra.mxu0 %v2182
    %2999 = vmatprep.subr.bf16.mxu0 0
    %3000 = vmatpush1.bf16.msra.mxu0 %v2183
    %3001 = vmatprep.subr.bf16.mxu0 0
    %3002 = vmatpush1.bf16.msra.mxu0 %v2184
    %3003 = vmatprep.subr.bf16.mxu0 0
    %3004 = vmatpush1.bf16.msra.mxu0 %v2185
    %3005 = vmatprep.subr.bf16.mxu0 0
    %3006 = vmatpush1.bf16.msra.mxu0 %v2186
    %3007 = vmatprep.subr.bf16.mxu0 0
    %3008 = vmatpush1.bf16.msra.mxu0 %v2187
    %3009 = vmatprep.subr.bf16.mxu0 0
    %3010 = vmatpush1.bf16.msra.mxu0 %v2188
    %3011 = vmatprep.subr.bf16.mxu0 0
    %3012 = vmatpush1.bf16.msra.mxu0 %v2189
    %3013 = vmatprep.subr.bf16.mxu0 0
    %3014 = vmatpush1.bf16.msra.mxu0 %v2190
    %3015 = vmatprep.subr.bf16.mxu0 0
    %3016 = vmatpush1.bf16.msra.mxu0 %v2191
    %3017 = vmatprep.mubr.bf16.mxu0 %v899
    %3018 = vmatmul.mubr.bf16.gmra.mrb[0].mxu0 %v898
    %v3019 = vpop.f32.mrb[0].mxu0
    %v3020 = vadd.f32 %v2971, %v3019
    %v3021 = vpop.f32.mrb[0].mxu0
    %v3022 = vpop.f32.mrb[0].mxu0
    %v3023 = vadd.f32 %v2974, %v3022
    %v3024 = vpop.f32.mrb[0].mxu0
    %3025 = vmatprep.mubr.bf16.mxu0 %v931
    %3026 = vmatmul.mubr.bf16.gmra.mrb[0].mxu0 %v930
    %v3027 = vpop.f32.mrb[0].mxu0
    %v3028 = vadd.f32 %v2979, %v3027
    %v3029 = vpop.f32.mrb[0].mxu0
    %v3030 = vpop.f32.mrb[0].mxu0
    %v3031 = vadd.f32 %v2982, %v3030
    %v3032 = vpop.f32.mrb[0].mxu0
    %3033 = vdwg.mxu0
    %3034 = vmatprep.subr.bf16.mxu0 0
    %3035 = vmatpush1.bf16.msra.mxu0 %v2192
    %3036 = vmatprep.subr.bf16.mxu0 0
    %3037 = vmatpush1.bf16.msra.mxu0 %v2193
    %3038 = vmatprep.subr.bf16.mxu0 0
    %3039 = vmatpush1.bf16.msra.mxu0 %v2194
    %3040 = vmatprep.subr.bf16.mxu0 0
    %3041 = vmatpush1.bf16.msra.mxu0 %v2195
    %3042 = vmatprep.subr.bf16.mxu0 0
    %3043 = vmatpush1.bf16.msra.mxu0 %v2196
    %3044 = vmatprep.subr.bf16.mxu0 0
    %3045 = vmatpush1.bf16.msra.mxu0 %v2197
    %3046 = vmatprep.subr.bf16.mxu0 0
    %3047 = vmatpush1.bf16.msra.mxu0 %v2198
    %3048 = vmatprep.subr.bf16.mxu0 0
    %3049 = vmatpush1.bf16.msra.mxu0 %v2199
    %3050 = vmatprep.subr.bf16.mxu0 0
    %3051 = vmatpush1.bf16.msra.mxu0 %v2200
    %3052 = vmatprep.subr.bf16.mxu0 0
    %3053 = vmatpush1.bf16.msra.mxu0 %v2201
    %3054 = vmatprep.subr.bf16.mxu0 0
    %3055 = vmatpush1.bf16.msra.mxu0 %v2202
    %3056 = vmatprep.subr.bf16.mxu0 0
    %3057 = vmatpush1.bf16.msra.mxu0 %v2203
    %3058 = vmatprep.subr.bf16.mxu0 0
    %3059 = vmatpush1.bf16.msra.mxu0 %v2204
    %3060 = vmatprep.subr.bf16.mxu0 0
    %3061 = vmatpush1.bf16.msra.mxu0 %v2205
    %3062 = vmatprep.subr.bf16.mxu0 0
    %3063 = vmatpush1.bf16.msra.mxu0 %v2206
    %3064 = vmatprep.subr.bf16.mxu0 0
    %3065 = vmatpush1.bf16.msra.mxu0 %v2207
    %3066 = vmatprep.mubr.bf16.mxu0 %v901
    %3067 = vmatmul.mubr.bf16.gmra.mrb[0].mxu0 %v900
    %v3068 = vpop.f32.mrb[0].mxu0
    %v3069 = vadd.f32 %v3020, %v3068
    %v3070 = vpop.f32.mrb[0].mxu0
    %v3071 = vpop.f32.mrb[0].mxu0
    %v3072 = vadd.f32 %v3023, %v3071
    %v3073 = vpop.f32.mrb[0].mxu0
    %3074 = vmatprep.mubr.bf16.mxu0 %v933
    %3075 = vmatmul.mubr.bf16.gmra.mrb[0].mxu0 %v932
    %v3076 = vpop.f32.mrb[0].mxu0
    %v3077 = vadd.f32 %v3028, %v3076
    %v3078 = vpop.f32.mrb[0].mxu0
    %v3079 = vpop.f32.mrb[0].mxu0
    %v3080 = vadd.f32 %v3031, %v3079
    %v3081 = vpop.f32.mrb[0].mxu0
    %3082 = vdwg.mxu0
    %3083 = vmatprep.subr.bf16.mxu0 0
    %3084 = vmatpush1.bf16.msra.mxu0 %v2208
    %3085 = vmatprep.subr.bf16.mxu0 0
    %3086 = vmatpush1.bf16.msra.mxu0 %v2209
    %3087 = vmatprep.subr.bf16.mxu0 0
    %3088 = vmatpush1.bf16.msra.mxu0 %v2210
    %3089 = vmatprep.subr.bf16.mxu0 0
    %3090 = vmatpush1.bf16.msra.mxu0 %v2211
    %3091 = vmatprep.subr.bf16.mxu0 0
    %3092 = vmatpush1.bf16.msra.mxu0 %v2212
    %3093 = vmatprep.subr.bf16.mxu0 0
    %3094 = vmatpush1.bf16.msra.mxu0 %v2213
    %3095 = vmatprep.subr.bf16.mxu0 0
    %3096 = vmatpush1.bf16.msra.mxu0 %v2214
    %3097 = vmatprep.subr.bf16.mxu0 0
    %3098 = vmatpush1.bf16.msra.mxu0 %v2215
    %3099 = vmatprep.subr.bf16.mxu0 0
    %3100 = vmatpush1.bf16.msra.mxu0 %v2216
    %3101 = vmatprep.subr.bf16.mxu0 0
    %3102 = vmatpush1.bf16.msra.mxu0 %v2217
    %3103 = vmatprep.subr.bf16.mxu0 0
    %3104 = vmatpush1.bf16.msra.mxu0 %v2218
    %3105 = vmatprep.subr.bf16.mxu0 0
    %3106 = vmatpush1.bf16.msra.mxu0 %v2219
    %3107 = vmatprep.subr.bf16.mxu0 0
    %3108 = vmatpush1.bf16.msra.mxu0 %v2220
    %3109 = vmatprep.subr.bf16.mxu0 0
    %3110 = vmatpush1.bf16.msra.mxu0 %v2221
    %3111 = vmatprep.subr.bf16.mxu0 0
    %3112 = vmatpush1.bf16.msra.mxu0 %v2222
    %3113 = vmatprep.subr.bf16.mxu0 0
    %3114 = vmatpush1.bf16.msra.mxu0 %v2223
    %3115 = vmatprep.mubr.bf16.mxu0 %v903
    %3116 = vmatmul.mubr.bf16.gmra.mrb[0].mxu0 %v902
    %v3117 = vpop.f32.mrb[0].mxu0
    %v3118 = vadd.f32 %v3069, %v3117
    %v3119 = vpop.f32.mrb[0].mxu0
    %v3120 = vpop.f32.mrb[0].mxu0
    %v3121 = vadd.f32 %v3072, %v3120
    %v3122 = vpop.f32.mrb[0].mxu0
    %3123 = vmatprep.mubr.bf16.mxu0 %v935
    %3124 = vmatmul.mubr.bf16.gmra.mrb[0].mxu0 %v934
    %v3125 = vpop.f32.mrb[0].mxu0
    %v3126 = vadd.f32 %v3077, %v3125
    %v3127 = vpop.f32.mrb[0].mxu0
    %v3128 = vpop.f32.mrb[0].mxu0
    %v3129 = vadd.f32 %v3080, %v3128
    %v3130 = vpop.f32.mrb[0].mxu0
    %3131 = vdwg.mxu0
    %3132 = vmatprep.subr.bf16.mxu0 0
    %3133 = vmatpush1.bf16.msra.mxu0 %v2224
    %3134 = vmatprep.subr.bf16.mxu0 0
    %3135 = vmatpush1.bf16.msra.mxu0 %v2225
    %3136 = vmatprep.subr.bf16.mxu0 0
    %3137 = vmatpush1.bf16.msra.mxu0 %v2226
    %3138 = vmatprep.subr.bf16.mxu0 0
    %3139 = vmatpush1.bf16.msra.mxu0 %v2227
    %3140 = vmatprep.subr.bf16.mxu0 0
    %3141 = vmatpush1.bf16.msra.mxu0 %v2228
    %3142 = vmatprep.subr.bf16.mxu0 0
    %3143 = vmatpush1.bf16.msra.mxu0 %v2229
    %3144 = vmatprep.subr.bf16.mxu0 0
    %3145 = vmatpush1.bf16.msra.mxu0 %v2230
    %3146 = vmatprep.subr.bf16.mxu0 0
    %3147 = vmatpush1.bf16.msra.mxu0 %v2231
    %3148 = vmatprep.subr.bf16.mxu0 0
    %3149 = vmatpush1.bf16.msra.mxu0 %v2232
    %3150 = vmatprep.subr.bf16.mxu0 0
    %3151 = vmatpush1.bf16.msra.mxu0 %v2233
    %3152 = vmatprep.subr.bf16.mxu0 0
    %3153 = vmatpush1.bf16.msra.mxu0 %v2234
    %3154 = vmatprep.subr.bf16.mxu0 0
    %3155 = vmatpush1.bf16.msra.mxu0 %v2235
    %3156 = vmatprep.subr.bf16.mxu0 0
    %3157 = vmatpush1.bf16.msra.mxu0 %v2236
    %3158 = vmatprep.subr.bf16.mxu0 0
    %3159 = vmatpush1.bf16.msra.mxu0 %v2237
    %3160 = vmatprep.subr.bf16.mxu0 0
    %3161 = vmatpush1.bf16.msra.mxu0 %v2238
    %3162 = vmatprep.subr.bf16.mxu0 0
    %3163 = vmatpush1.bf16.msra.mxu0 %v2239
    %3164 = vmatprep.mubr.bf16.mxu0 %v905
    %3165 = vmatmul.mubr.bf16.gmra.mrb[0].mxu0 %v904
    %v3166 = vpop.f32.mrb[0].mxu0
    %v3167 = vadd.f32 %v3118, %v3166
    %v3168 = vpop.f32.mrb[0].mxu0
    %v3169 = vpop.f32.mrb[0].mxu0
    %v3170 = vadd.f32 %v3121, %v3169
    %v3171 = vpop.f32.mrb[0].mxu0
    %3172 = vmatprep.mubr.bf16.mxu0 %v937
    %3173 = vmatmul.mubr.bf16.gmra.mrb[0].mxu0 %v936
    %v3174 = vpop.f32.mrb[0].mxu0
    %v3175 = vadd.f32 %v3126, %v3174
    %v3176 = vpop.f32.mrb[0].mxu0
    %v3177 = vpop.f32.mrb[0].mxu0
    %v3178 = vadd.f32 %v3129, %v3177
    %v3179 = vpop.f32.mrb[0].mxu0
    %3180 = vdwg.mxu0
    %3181 = vmatprep.subr.bf16.mxu0 0
    %3182 = vmatpush1.bf16.msra.mxu0 %v2240
    %3183 = vmatprep.subr.bf16.mxu0 0
    %3184 = vmatpush1.bf16.msra.mxu0 %v2241
    %3185 = vmatprep.subr.bf16.mxu0 0
    %3186 = vmatpush1.bf16.msra.mxu0 %v2242
    %3187 = vmatprep.subr.bf16.mxu0 0
    %3188 = vmatpush1.bf16.msra.mxu0 %v2243
    %3189 = vmatprep.subr.bf16.mxu0 0
    %3190 = vmatpush1.bf16.msra.mxu0 %v2244
    %3191 = vmatprep.subr.bf16.mxu0 0
    %3192 = vmatpush1.bf16.msra.mxu0 %v2245
    %3193 = vmatprep.subr.bf16.mxu0 0
    %3194 = vmatpush1.bf16.msra.mxu0 %v2246
    %3195 = vmatprep.subr.bf16.mxu0 0
    %3196 = vmatpush1.bf16.msra.mxu0 %v2247
    %3197 = vmatprep.subr.bf16.mxu0 0
    %3198 = vmatpush1.bf16.msra.mxu0 %v2248
    %3199 = vmatprep.subr.bf16.mxu0 0
    %3200 = vmatpush1.bf16.msra.mxu0 %v2249
    %3201 = vmatprep.subr.bf16.mxu0 0
    %3202 = vmatpush1.bf16.msra.mxu0 %v2250
    %3203 = vmatprep.subr.bf16.mxu0 0
    %3204 = vmatpush1.bf16.msra.mxu0 %v2251
    %3205 = vmatprep.subr.bf16.mxu0 0
    %3206 = vmatpush1.bf16.msra.mxu0 %v2252
    %3207 = vmatprep.subr.bf16.mxu0 0
    %3208 = vmatpush1.bf16.msra.mxu0 %v2253
    %3209 = vmatprep.subr.bf16.mxu0 0
    %3210 = vmatpush1.bf16.msra.mxu0 %v2254
    %3211 = vmatprep.subr.bf16.mxu0 0
    %3212 = vmatpush1.bf16.msra.mxu0 %v2255
    %3213 = vmatprep.mubr.bf16.mxu0 %v907
    %3214 = vmatmul.mubr.bf16.gmra.mrb[0].mxu0 %v906
    %v3215 = vpop.f32.mrb[0].mxu0
    %v3216 = vadd.f32 %v3167, %v3215
    %v3217 = vpop.f32.mrb[0].mxu0
    %v3218 = vpop.f32.mrb[0].mxu0
    %v3219 = vadd.f32 %v3170, %v3218
    %v3220 = vpop.f32.mrb[0].mxu0
    %3221 = vmatprep.mubr.bf16.mxu0 %v939
    %3222 = vmatmul.mubr.bf16.gmra.mrb[0].mxu0 %v938
    %v3223 = vpop.f32.mrb[0].mxu0
    %v3224 = vadd.f32 %v3175, %v3223
    %v3225 = vpop.f32.mrb[0].mxu0
    %v3226 = vpop.f32.mrb[0].mxu0
    %v3227 = vadd.f32 %v3178, %v3226
    %v3228 = vpop.f32.mrb[0].mxu0
    %3229 = vdwg.mxu0
    %3230 = vmatprep.subr.bf16.mxu0 0
    %3231 = vmatpush1.bf16.msra.mxu0 %v2256
    %3232 = vmatprep.subr.bf16.mxu0 0
    %3233 = vmatpush1.bf16.msra.mxu0 %v2257
    %3234 = vmatprep.subr.bf16.mxu0 0
    %3235 = vmatpush1.bf16.msra.mxu0 %v2258
    %3236 = vmatprep.subr.bf16.mxu0 0
    %3237 = vmatpush1.bf16.msra.mxu0 %v2259
    %3238 = vmatprep.subr.bf16.mxu0 0
    %3239 = vmatpush1.bf16.msra.mxu0 %v2260
    %3240 = vmatprep.subr.bf16.mxu0 0
    %3241 = vmatpush1.bf16.msra.mxu0 %v2261
    %3242 = vmatprep.subr.bf16.mxu0 0
    %3243 = vmatpush1.bf16.msra.mxu0 %v2262
    %3244 = vmatprep.subr.bf16.mxu0 0
    %3245 = vmatpush1.bf16.msra.mxu0 %v2263
    %3246 = vmatprep.subr.bf16.mxu0 0
    %3247 = vmatpush1.bf16.msra.mxu0 %v2264
    %3248 = vmatprep.subr.bf16.mxu0 0
    %3249 = vmatpush1.bf16.msra.mxu0 %v2265
    %3250 = vmatprep.subr.bf16.mxu0 0
    %3251 = vmatpush1.bf16.msra.mxu0 %v2266
    %3252 = vmatprep.subr.bf16.mxu0 0
    %3253 = vmatpush1.bf16.msra.mxu0 %v2267
    %3254 = vmatprep.subr.bf16.mxu0 0
    %3255 = vmatpush1.bf16.msra.mxu0 %v2268
    %3256 = vmatprep.subr.bf16.mxu0 0
    %3257 = vmatpush1.bf16.msra.mxu0 %v2269
    %3258 = vmatprep.subr.bf16.mxu0 0
    %3259 = vmatpush1.bf16.msra.mxu0 %v2270
    %3260 = vmatprep.subr.bf16.mxu0 0
    %3261 = vmatpush1.bf16.msra.mxu0 %v2271
    %3262 = vmatprep.mubr.bf16.mxu0 %v909
    %3263 = vmatmul.mubr.bf16.gmra.mrb[0].mxu0 %v908
    %v3264 = vpop.f32.mrb[0].mxu0
    %v3265 = vadd.f32 %v3216, %v3264
    %v3266 = vpop.f32.mrb[0].mxu0
    %v3267 = vpop.f32.mrb[0].mxu0
    %v3268 = vadd.f32 %v3219, %v3267
    %v3269 = vpop.f32.mrb[0].mxu0
    %3270 = vmatprep.mubr.bf16.mxu0 %v941
    %3271 = vmatmul.mubr.bf16.gmra.mrb[0].mxu0 %v940
    %v3272 = vpop.f32.mrb[0].mxu0
    %v3273 = vadd.f32 %v3224, %v3272
    %v3274 = vpop.f32.mrb[0].mxu0
    %v3275 = vpop.f32.mrb[0].mxu0
    %v3276 = vadd.f32 %v3227, %v3275
    %v3277 = vpop.f32.mrb[0].mxu0
    %3278 = vdwg.mxu0
    %3279 = vmatprep.subr.bf16.mxu0 0
    %3280 = vmatpush1.bf16.msra.mxu0 %v2272
    %3281 = vmatprep.subr.bf16.mxu0 0
    %3282 = vmatpush1.bf16.msra.mxu0 %v2273
    %3283 = vmatprep.subr.bf16.mxu0 0
    %3284 = vmatpush1.bf16.msra.mxu0 %v2274
    %3285 = vmatprep.subr.bf16.mxu0 0
    %3286 = vmatpush1.bf16.msra.mxu0 %v2275
    %3287 = vmatprep.subr.bf16.mxu0 0
    %3288 = vmatpush1.bf16.msra.mxu0 %v2276
    %3289 = vmatprep.subr.bf16.mxu0 0
    %3290 = vmatpush1.bf16.msra.mxu0 %v2277
    %3291 = vmatprep.subr.bf16.mxu0 0
    %3292 = vmatpush1.bf16.msra.mxu0 %v2278
    %3293 = vmatprep.subr.bf16.mxu0 0
    %3294 = vmatpush1.bf16.msra.mxu0 %v2279
    %3295 = vmatprep.subr.bf16.mxu0 0
    %3296 = vmatpush1.bf16.msra.mxu0 %v2280
    %3297 = vmatprep.subr.bf16.mxu0 0
    %3298 = vmatpush1.bf16.msra.mxu0 %v2281
    %3299 = vmatprep.subr.bf16.mxu0 0
    %3300 = vmatpush1.bf16.msra.mxu0 %v2282
    %3301 = vmatprep.subr.bf16.mxu0 0
    %3302 = vmatpush1.bf16.msra.mxu0 %v2283
    %3303 = vmatprep.subr.bf16.mxu0 0
    %3304 = vmatpush1.bf16.msra.mxu0 %v2284
    %3305 = vmatprep.subr.bf16.mxu0 0
    %3306 = vmatpush1.bf16.msra.mxu0 %v2285
    %3307 = vmatprep.subr.bf16.mxu0 0
    %3308 = vmatpush1.bf16.msra.mxu0 %v2286
    %3309 = vmatprep.subr.bf16.mxu0 0
    %3310 = vmatpush1.bf16.msra.mxu0 %v2287
    %3311 = vmatprep.mubr.bf16.mxu0 %v911
    %3312 = vmatmul.mubr.bf16.gmra.mrb[0].mxu0 %v910
    %v3313 = vpop.f32.mrb[0].mxu0
    %v3314 = vadd.f32 %v3265, %v3313
    %v3315 = vpop.f32.mrb[0].mxu0
    %v3316 = vpop.f32.mrb[0].mxu0
    %v3317 = vadd.f32 %v3268, %v3316
    %v3318 = vpop.f32.mrb[0].mxu0
    %3319 = vmatprep.mubr.bf16.mxu0 %v943
    %3320 = vmatmul.mubr.bf16.gmra.mrb[0].mxu0 %v942
    %v3321 = vpop.f32.mrb[0].mxu0
    %v3322 = vadd.f32 %v3273, %v3321
    %v3323 = vpop.f32.mrb[0].mxu0
    %v3324 = vpop.f32.mrb[0].mxu0
    %v3325 = vadd.f32 %v3276, %v3324
    %v3326 = vpop.f32.mrb[0].mxu0
    %3327 = vdwg.mxu0
    %v3328 = vld [vmem:[%s3] sm:$0xff]
    %v3329 = vld [vmem:[%s3 + $0x8] sm:$0xff]
    %v3330 = vld [vmem:[%s3 + $0x10] sm:$0xff]
    %v3331 = vld [vmem:[%s3 + $0x18] sm:$0xff]
    %v3332 = vadd.f32 %v3314, %v3328
    %v3333 = vadd.f32 %v3317, %v3329
    %v3334 = vadd.f32 %v3322, %v3330
    %v3335 = vadd.f32 %v3325, %v3331
    %v3336 = vld [vmem:[%s7] sm:$0x1]
    %v3337 = vld [vmem:[%s8] sm:$0x1]
    %vm3338 = vcmask 261120
    %v3339 = vsel %vm3338, %v3332, 0.0
    %3340 = vadd.xlane.f32.xlu0 %v3339
    %v3341 = vpop.xlane.xlu0 %3340
    %v3342 = vsel %vm3338, %v3333, 0.0
    %3343 = vadd.xlane.f32.xlu0 %v3342
    %v3344 = vpop.xlane.xlu0 %3343
    %v3345 = vsel %vm3338, %v3334, 0.0
    %3346 = vadd.xlane.f32.xlu0 %v3345
    %v3347 = vpop.xlane.xlu0 %3346
    %v3348 = vsel %vm3338, %v3335, 0.0
    %3349 = vadd.xlane.f32.xlu0 %v3348
    %v3350 = vpop.xlane.xlu0 %3349
    %v3351 = vrcp.pop 32.0
    %v3352 = vmul.f32 %v3341, %v3351
    %v3353 = vmul.f32 %v3344, %v3351
    %v3354 = vmul.f32 %v3347, %v3351
    %v3355 = vmul.f32 %v3350, %v3351
    %v3356 = vsub.f32 %v3332, %v3352
    %v3357 = vsub.f32 %v3333, %v3353
    %v3358 = vsub.f32 %v3334, %v3354
    %v3359 = vsub.f32 %v3335, %v3355
    %v3360 = vmul.f32 %v3356, %v3356
    %v3361 = vmul.f32 %v3357, %v3357
    %v3362 = vmul.f32 %v3358, %v3358
    %v3363 = vmul.f32 %v3359, %v3359
    %v3364 = vsel %vm3338, %v3360, 0.0
    %3365 = vadd.xlane.f32.xlu0 %v3364
    %v3366 = vpop.xlane.xlu0 %3365
    %v3367 = vsel %vm3338, %v3361, 0.0
    %3368 = vadd.xlane.f32.xlu0 %v3367
    %v3369 = vpop.xlane.xlu0 %3368
    %v3370 = vsel %vm3338, %v3362, 0.0
    %3371 = vadd.xlane.f32.xlu0 %v3370
    %v3372 = vpop.xlane.xlu0 %3371
    %v3373 = vsel %vm3338, %v3363, 0.0
    %3374 = vadd.xlane.f32.xlu0 %v3373
    %v3375 = vpop.xlane.xlu0 %3374
    %v3376 = vmul.f32 %v3366, %v3351
    %v3377 = vmul.f32 %v3369, %v3351
    %v3378 = vmul.f32 %v3372, %v3351
    %v3379 = vmul.f32 %v3375, %v3351
    %v3380 = vadd.f32 %v3376, 1e-05
    %v3381 = vadd.f32 %v3377, 1e-05
    %v3382 = vadd.f32 %v3378, 1e-05
    %v3383 = vadd.f32 %v3379, 1e-05
    %v3384 = vrsqrt.pop %v3380
    %v3385 = vrsqrt.pop %v3381
    %v3386 = vrsqrt.pop %v3382
    %v3387 = vrsqrt.pop %v3383
    %v3388 = vmul.f32 %v3356, %v3384
    %v3389 = vmul.f32 %v3357, %v3385
    %v3390 = vmul.f32 %v3358, %v3386
    %v3391 = vmul.f32 %v3359, %v3387
    %v3393 = vlaneseq
    %v3394 = vshrl.u32 %v3393, 7
    %v3395 = vsub.s32 0, %v3394
    %v3396 = vrot.slane %v3336, %v3395
    %v3398 = vmul.f32 %v3388, %v3396
    %v3399 = vmul.f32 %v3389, %v3396
    %v3400 = vmul.f32 %v3390, %v3396
    %v3401 = vmul.f32 %v3391, %v3396
    %v3403 = vlaneseq
    %v3404 = vshrl.u32 %v3403, 7
    %v3405 = vsub.s32 0, %v3404
    %v3406 = vrot.slane %v3337, %v3405
    %v3408 = vadd.f32 %v3398, %v3406
    %v3409 = vadd.f32 %v3399, %v3406
    %v3410 = vadd.f32 %v3400, %v3406
    %v3411 = vadd.f32 %v3401, %v3406
    %v3412 = vld [vmem:[%s9] sm:$0xf]
    %v3413 = vld [vmem:[%s9 + $0x4] sm:$0xf]
    %v3414 = vld [vmem:[%s9 + $0x8] sm:$0xf]
    %v3415 = vld [vmem:[%s9 + $0xc] sm:$0xf]
    %v3416 = vpack.c.bf16 %v3409, %v3408
    %v3417 = vpack.c.bf16 %v3411, %v3410
    %v3422 = vunpack.c.l.b16 %v3412
    %v3423 = vunpack.c.l.b16 %v3413
    %v3424 = vunpack.c.l.b16 %v3414
    %v3425 = vunpack.c.l.b16 %v3415
    %v3426 = vpack.c.b16 %v3423, %v3422
    %v3427 = vpack.c.b16 %v3425, %v3424
    %v3431 = vsel %vm3338, %v3416, 0
    %v3434 = vsel %vm3338, %v3417, 0
    %3436 = vmatprep.subr.bf16.mxu0 0
    %3437 = vmatpush1.bf16.msra.mxu0 %v3426
    %3438 = vmatprep.subr.bf16.mxu0 0
    %3439 = vmatpush1.bf16.msra.mxu0 %v3427
    %3440 = vmatprep.subr.bf16.mxu0 0
    %3441 = vmatpush1.bf16.msra.mxu0 0
    %3442 = vmatprep.subr.bf16.mxu0 0
    %3443 = vmatpush1.bf16.msra.mxu0 0
    %3444 = vmatprep.subr.bf16.mxu0 0
    %3445 = vmatpush1.bf16.msra.mxu0 0
    %3446 = vmatprep.subr.bf16.mxu0 0
    %3447 = vmatpush1.bf16.msra.mxu0 0
    %3448 = vmatprep.subr.bf16.mxu0 0
    %3449 = vmatpush1.bf16.msra.mxu0 0
    %3450 = vmatprep.subr.bf16.mxu0 0
    %3451 = vmatpush1.bf16.msra.mxu0 0
    %3452 = vmatprep.subr.bf16.mxu0 0
    %3453 = vmatpush1.bf16.msra.mxu0 0
    %3454 = vmatprep.subr.bf16.mxu0 0
    %3455 = vmatpush1.bf16.msra.mxu0 0
    %3456 = vmatprep.subr.bf16.mxu0 0
    %3457 = vmatpush1.bf16.msra.mxu0 0
    %3458 = vmatprep.subr.bf16.mxu0 0
    %3459 = vmatpush1.bf16.msra.mxu0 0
    %3460 = vmatprep.subr.bf16.mxu0 0
    %3461 = vmatpush1.bf16.msra.mxu0 0
    %3462 = vmatprep.subr.bf16.mxu0 0
    %3463 = vmatpush1.bf16.msra.mxu0 0
    %3464 = vmatprep.subr.bf16.mxu0 0
    %3465 = vmatpush1.bf16.msra.mxu0 0
    %3466 = vmatprep.subr.bf16.mxu0 0
    %3467 = vmatpush1.bf16.msra.mxu0 0
    %3468 = vmatprep.mubr.bf16.mxu0 0
    %3469 = vmatmul.mubr.bf16.gmra.mrb[0].mxu0 %v3431
    %v3470 = vpop.f32.mrb[0].mxu0
    %v3471 = vadd.f32 0.0, %v3470
    %v3472 = vpop.f32.mrb[0].mxu0
    %v3473 = vpop.f32.mrb[0].mxu0
    %v3474 = vadd.f32 0.0, %v3473
    %v3475 = vpop.f32.mrb[0].mxu0
    %3476 = vmatprep.mubr.bf16.mxu0 0
    %3477 = vmatmul.mubr.bf16.gmra.mrb[0].mxu0 %v3434
    %v3478 = vpop.f32.mrb[0].mxu0
    %v3479 = vadd.f32 0.0, %v3478
    %v3480 = vpop.f32.mrb[0].mxu0
    %v3481 = vpop.f32.mrb[0].mxu0
    %v3482 = vadd.f32 0.0, %v3481
    %v3483 = vpop.f32.mrb[0].mxu0
    %3484 = vdwg.mxu0
    %v3485 = vld [vmem:[%s10] sm:$0xf]
    %v3486 = vld [vmem:[%s10 + $0x4] sm:$0xf]
    %v3487 = vld [vmem:[%s10 + $0x8] sm:$0xf]
    %v3488 = vld [vmem:[%s10 + $0xc] sm:$0xf]
    %v3493 = vunpack.c.l.b16 %v3485
    %v3494 = vunpack.c.l.b16 %v3486
    %v3495 = vunpack.c.l.b16 %v3487
    %v3496 = vunpack.c.l.b16 %v3488
    %v3497 = vpack.c.b16 %v3494, %v3493
    %v3498 = vpack.c.b16 %v3496, %v3495
    %3501 = vmatprep.subr.bf16.mxu0 0
    %3502 = vmatpush1.bf16.msra.mxu0 %v3497
    %3503 = vmatprep.subr.bf16.mxu0 0
    %3504 = vmatpush1.bf16.msra.mxu0 %v3498
    %3505 = vmatprep.subr.bf16.mxu0 0
    %3506 = vmatpush1.bf16.msra.mxu0 0
    %3507 = vmatprep.subr.bf16.mxu0 0
    %3508 = vmatpush1.bf16.msra.mxu0 0
    %3509 = vmatprep.subr.bf16.mxu0 0
    %3510 = vmatpush1.bf16.msra.mxu0 0
    %3511 = vmatprep.subr.bf16.mxu0 0
    %3512 = vmatpush1.bf16.msra.mxu0 0
    %3513 = vmatprep.subr.bf16.mxu0 0
    %3514 = vmatpush1.bf16.msra.mxu0 0
    %3515 = vmatprep.subr.bf16.mxu0 0
    %3516 = vmatpush1.bf16.msra.mxu0 0
    %3517 = vmatprep.subr.bf16.mxu0 0
    %3518 = vmatpush1.bf16.msra.mxu0 0
    %3519 = vmatprep.subr.bf16.mxu0 0
    %3520 = vmatpush1.bf16.msra.mxu0 0
    %3521 = vmatprep.subr.bf16.mxu0 0
    %3522 = vmatpush1.bf16.msra.mxu0 0
    %3523 = vmatprep.subr.bf16.mxu0 0
    %3524 = vmatpush1.bf16.msra.mxu0 0
    %3525 = vmatprep.subr.bf16.mxu0 0
    %3526 = vmatpush1.bf16.msra.mxu0 0
    %3527 = vmatprep.subr.bf16.mxu0 0
    %3528 = vmatpush1.bf16.msra.mxu0 0
    %3529 = vmatprep.subr.bf16.mxu0 0
    %3530 = vmatpush1.bf16.msra.mxu0 0
    %3531 = vmatprep.subr.bf16.mxu0 0
    %3532 = vmatpush1.bf16.msra.mxu0 0
    %3533 = vmatprep.mubr.bf16.mxu0 0
    %3534 = vmatmul.mubr.bf16.gmra.mrb[0].mxu0 %v3431
    %v3535 = vpop.f32.mrb[0].mxu0
    %v3536 = vadd.f32 0.0, %v3535
    %v3537 = vpop.f32.mrb[0].mxu0
    %v3538 = vpop.f32.mrb[0].mxu0
    %v3539 = vadd.f32 0.0, %v3538
    %v3540 = vpop.f32.mrb[0].mxu0
    %3541 = vmatprep.mubr.bf16.mxu0 0
    %3542 = vmatmul.mubr.bf16.gmra.mrb[0].mxu0 %v3434
    %v3543 = vpop.f32.mrb[0].mxu0
    %v3544 = vadd.f32 0.0, %v3543
    %v3545 = vpop.f32.mrb[0].mxu0
    %v3546 = vpop.f32.mrb[0].mxu0
    %v3547 = vadd.f32 0.0, %v3546
    %v3548 = vpop.f32.mrb[0].mxu0
    %3549 = vdwg.mxu0
    %v3550 = vld [vmem:[%s11] sm:$0xf]
    %v3551 = vld [vmem:[%s11 + $0x4] sm:$0xf]
    %v3552 = vld [vmem:[%s11 + $0x8] sm:$0xf]
    %v3553 = vld [vmem:[%s11 + $0xc] sm:$0xf]
    %v3558 = vunpack.c.l.b16 %v3550
    %v3559 = vunpack.c.l.b16 %v3551
    %v3560 = vunpack.c.l.b16 %v3552
    %v3561 = vunpack.c.l.b16 %v3553
    %v3562 = vpack.c.b16 %v3559, %v3558
    %v3563 = vpack.c.b16 %v3561, %v3560
    %3566 = vmatprep.subr.bf16.mxu0 0
    %3567 = vmatpush1.bf16.msra.mxu0 %v3562
    %3568 = vmatprep.subr.bf16.mxu0 0
    %3569 = vmatpush1.bf16.msra.mxu0 %v3563
    %3570 = vmatprep.subr.bf16.mxu0 0
    %3571 = vmatpush1.bf16.msra.mxu0 0
    %3572 = vmatprep.subr.bf16.mxu0 0
    %3573 = vmatpush1.bf16.msra.mxu0 0
    %3574 = vmatprep.subr.bf16.mxu0 0
    %3575 = vmatpush1.bf16.msra.mxu0 0
    %3576 = vmatprep.subr.bf16.mxu0 0
    %3577 = vmatpush1.bf16.msra.mxu0 0
    %3578 = vmatprep.subr.bf16.mxu0 0
    %3579 = vmatpush1.bf16.msra.mxu0 0
    %3580 = vmatprep.subr.bf16.mxu0 0
    %3581 = vmatpush1.bf16.msra.mxu0 0
    %3582 = vmatprep.subr.bf16.mxu0 0
    %3583 = vmatpush1.bf16.msra.mxu0 0
    %3584 = vmatprep.subr.bf16.mxu0 0
    %3585 = vmatpush1.bf16.msra.mxu0 0
    %3586 = vmatprep.subr.bf16.mxu0 0
    %3587 = vmatpush1.bf16.msra.mxu0 0
    %3588 = vmatprep.subr.bf16.mxu0 0
    %3589 = vmatpush1.bf16.msra.mxu0 0
    %3590 = vmatprep.subr.bf16.mxu0 0
    %3591 = vmatpush1.bf16.msra.mxu0 0
    %3592 = vmatprep.subr.bf16.mxu0 0
    %3593 = vmatpush1.bf16.msra.mxu0 0
    %3594 = vmatprep.subr.bf16.mxu0 0
    %3595 = vmatpush1.bf16.msra.mxu0 0
    %3596 = vmatprep.subr.bf16.mxu0 0
    %3597 = vmatpush1.bf16.msra.mxu0 0
    %3598 = vmatprep.mubr.bf16.mxu0 0
    %3599 = vmatmul.mubr.bf16.gmra.mrb[0].mxu0 %v3431
    %v3600 = vpop.f32.mrb[0].mxu0
    %v3601 = vadd.f32 0.0, %v3600
    %v3602 = vpop.f32.mrb[0].mxu0
    %v3603 = vpop.f32.mrb[0].mxu0
    %v3604 = vadd.f32 0.0, %v3603
    %v3605 = vpop.f32.mrb[0].mxu0
    %3606 = vmatprep.mubr.bf16.mxu0 0
    %3607 = vmatmul.mubr.bf16.gmra.mrb[0].mxu0 %v3434
    %v3608 = vpop.f32.mrb[0].mxu0
    %v3609 = vadd.f32 0.0, %v3608
    %v3610 = vpop.f32.mrb[0].mxu0
    %v3611 = vpop.f32.mrb[0].mxu0
    %v3612 = vadd.f32 0.0, %v3611
    %v3613 = vpop.f32.mrb[0].mxu0
    %3614 = vdwg.mxu0
    %v3615 = vmul.f32 %v3536, %v73
    %v3616 = vmul.f32 %v3539, %v74
    %v3617 = vmul.f32 %v3544, %v75
    %v3618 = vmul.f32 %v3547, %v76
    %v3619 = vmul.f32 %v3536, %v77
    %v3620 = vmul.f32 %v3539, %v78
    %v3621 = vmul.f32 %v3544, %v79
    %v3622 = vmul.f32 %v3547, %v80
    %v3623 = vmul.f32 %v3536, %v81
    %v3624 = vmul.f32 %v3539, %v82
    %v3625 = vmul.f32 %v3544, %v83
    %v3626 = vmul.f32 %v3547, %v84
    %v3627 = vmul.f32 %v3536, %v85
    %v3628 = vmul.f32 %v3539, %v86
    %v3629 = vmul.f32 %v3544, %v87
    %v3630 = vmul.f32 %v3547, %v88
    %v3631 = vmul.f32 %v3601, %v73
    %v3632 = vmul.f32 %v3604, %v74
    %v3633 = vmul.f32 %v3609, %v75
    %v3634 = vmul.f32 %v3612, %v76
    %v3635 = vmul.f32 %v3601, %v77
    %v3636 = vmul.f32 %v3604, %v78
    %v3637 = vmul.f32 %v3609, %v79
    %v3638 = vmul.f32 %v3612, %v80
    %v3639 = vmul.f32 %v3601, %v81
    %v3640 = vmul.f32 %v3604, %v82
    %v3641 = vmul.f32 %v3609, %v83
    %v3642 = vmul.f32 %v3612, %v84
    %v3643 = vmul.f32 %v3601, %v85
    %v3644 = vmul.f32 %v3604, %v86
    %v3645 = vmul.f32 %v3609, %v87
    %v3646 = vmul.f32 %v3612, %v88
    %v3647 = vpack.c.bf16 %v3474, %v3471
    %v3648 = vpack.c.bf16 %v3482, %v3479
    %v3649 = vpack.c.bf16 %v3616, %v3615
    %v3650 = vpack.c.bf16 %v3618, %v3617
    %v3651 = vpack.c.bf16 %v3620, %v3619
    %v3652 = vpack.c.bf16 %v3622, %v3621
    %v3653 = vpack.c.bf16 %v3624, %v3623
    %v3654 = vpack.c.bf16 %v3626, %v3625
    %v3655 = vpack.c.bf16 %v3628, %v3627
    %v3656 = vpack.c.bf16 %v3630, %v3629
    %v3657 = vld [vmem:[%s5] sm:$0xff]
    %v3658 = vld [vmem:[%s5 + $0x8] sm:$0xff]
    %v3659 = vld [vmem:[%s5 + $0x10] sm:$0xff]
    %v3660 = vld [vmem:[%s5 + $0x18] sm:$0xff]
    %v3662 = vsel %vm3338, %v3647, 0
    %v3665 = vsel %vm3338, %v3648, 0
    %v3668 = vsel %vm3338, %v3649, 0
    %v3671 = vsel %vm3338, %v3650, 0
    %v3674 = vsel %vm3338, %v3651, 0
    %v3677 = vsel %vm3338, %v3652, 0
    %v3680 = vsel %vm3338, %v3653, 0
    %v3683 = vsel %vm3338, %v3654, 0
    %v3686 = vsel %vm3338, %v3655, 0
    %v3689 = vsel %vm3338, %v3656, 0
    %3691 = vmatprep.subr.bf16.mxu0 0
    %3692 = vmatpush1.bf16.xpose.msra.mxu0 %v3668
    %3693 = vmatprep.subr.bf16.mxu0 0
    %3694 = vmatpush1.bf16.xpose.msra.mxu0 %v3671
    %3695 = vmatprep.subr.bf16.mxu0 0
    %3696 = vmatpush1.bf16.xpose.msra.mxu0 %v3674
    %3697 = vmatprep.subr.bf16.mxu0 0
    %3698 = vmatpush1.bf16.xpose.msra.mxu0 %v3677
    %3699 = vmatprep.subr.bf16.mxu0 0
    %3700 = vmatpush1.bf16.xpose.msra.mxu0 %v3680
    %3701 = vmatprep.subr.bf16.mxu0 0
    %3702 = vmatpush1.bf16.xpose.msra.mxu0 %v3683
    %3703 = vmatprep.subr.bf16.mxu0 0
    %3704 = vmatpush1.bf16.xpose.msra.mxu0 %v3686
    %3705 = vmatprep.subr.bf16.mxu0 0
    %3706 = vmatpush1.bf16.xpose.msra.mxu0 %v3689
    %3707 = vmatprep.subr.bf16.mxu0 0
    %3708 = vmatpush1.bf16.xpose.msra.mxu0 0
    %3709 = vmatprep.subr.bf16.mxu0 0
    %3710 = vmatpush1.bf16.xpose.msra.mxu0 0
    %3711 = vmatprep.subr.bf16.mxu0 0
    %3712 = vmatpush1.bf16.xpose.msra.mxu0 0
    %3713 = vmatprep.subr.bf16.mxu0 0
    %3714 = vmatpush1.bf16.xpose.msra.mxu0 0
    %3715 = vmatprep.subr.bf16.mxu0 0
    %3716 = vmatpush1.bf16.xpose.msra.mxu0 0
    %3717 = vmatprep.subr.bf16.mxu0 0
    %3718 = vmatpush1.bf16.xpose.msra.mxu0 0
    %3719 = vmatprep.subr.bf16.mxu0 0
    %3720 = vmatpush1.bf16.xpose.msra.mxu0 0
    %3721 = vmatprep.subr.bf16.mxu0 0
    %3722 = vmatpush1.bf16.xpose.msra.mxu0 0
    %3723 = vmatprep.mubr.bf16.mxu0 0
    %3724 = vmatmul.mubr.bf16.gmra.mrb[0].mxu0 %v3662
    %v3725 = vpop.f32.mrb[0].mxu0
    %v3726 = vadd.f32 %v3657, %v3725
    %v3727 = vpop.f32.mrb[0].mxu0
    %v3728 = vpop.f32.mrb[0].mxu0
    %v3729 = vadd.f32 %v3658, %v3728
    %v3730 = vpop.f32.mrb[0].mxu0
    %3731 = vmatprep.mubr.bf16.mxu0 0
    %3732 = vmatmul.mubr.bf16.gmra.mrb[0].mxu0 %v3665
    %v3733 = vpop.f32.mrb[0].mxu0
    %v3734 = vadd.f32 %v3659, %v3733
    %v3735 = vpop.f32.mrb[0].mxu0
    %v3736 = vpop.f32.mrb[0].mxu0
    %v3737 = vadd.f32 %v3660, %v3736
    %v3738 = vpop.f32.mrb[0].mxu0
    %3739 = vdwg.mxu0
    %3740 = vmax.xlane.f32.xlu0 %v3726
    %v3741 = vpop.xlane.xlu0 %3740
    %3742 = vmax.xlane.f32.xlu0 %v3729
    %v3743 = vpop.xlane.xlu0 %3742
    %3744 = vmax.xlane.f32.xlu0 %v3734
    %v3745 = vpop.xlane.xlu0 %3744
    %3746 = vmax.xlane.f32.xlu0 %v3737
    %v3747 = vpop.xlane.xlu0 %3746
    %v3748 = vsub.f32 %v3726, %v3741
    %v3749 = vsub.f32 %v3729, %v3743
    %v3750 = vsub.f32 %v3734, %v3745
    %v3751 = vsub.f32 %v3737, %v3747
    %v3752 = vmul.f32 %v3748, 1.442695
    %v3753 = vpow.pop %v3752
    %v3754 = vmul.f32 %v3749, 1.442695
    %v3755 = vpow.pop %v3754
    %v3756 = vmul.f32 %v3750, 1.442695
    %v3757 = vpow.pop %v3756
    %v3758 = vmul.f32 %v3751, 1.442695
    %v3759 = vpow.pop %v3758
    %3760 = vmatprep.subr.mxu0 0.0
    %3761 = vmatpush1.msra.mxu0 %v89
    %3762 = vmatprep.subr.mxu0 0.0
    %3763 = vmatpush1.msra.mxu0 %v90
    %3764 = vmatprep.subr.mxu0 0.0
    %3765 = vmatpush1.msra.mxu0 %v91
    %3766 = vmatprep.subr.mxu0 0.0
    %3767 = vmatpush1.msra.mxu0 %v92
    %3768 = vmatprep.subr.mxu0 0.0
    %3769 = vmatpush1.msra.mxu0 %v93
    %3770 = vmatprep.subr.mxu0 0.0
    %3771 = vmatpush1.msra.mxu0 %v94
    %3772 = vmatprep.subr.mxu0 0.0
    %3773 = vmatpush1.msra.mxu0 %v95
    %3774 = vmatprep.subr.mxu0 0.0
    %3775 = vmatpush1.msra.mxu0 %v96
    %3776 = vmatprep.subr.mxu0 0.0
    %3777 = vmatpush1.msra.mxu0 %v97
    %3778 = vmatprep.subr.mxu0 0.0
    %3779 = vmatpush1.msra.mxu0 %v98
    %3780 = vmatprep.subr.mxu0 0.0
    %3781 = vmatpush1.msra.mxu0 %v99
    %3782 = vmatprep.subr.mxu0 0.0
    %3783 = vmatpush1.msra.mxu0 %v100
    %3784 = vmatprep.subr.mxu0 0.0
    %3785 = vmatpush1.msra.mxu0 %v101
    %3786 = vmatprep.subr.mxu0 0.0
    %3787 = vmatpush1.msra.mxu0 %v102
    %3788 = vmatprep.subr.mxu0 0.0
    %3789 = vmatpush1.msra.mxu0 %v103
    %3790 = vmatprep.subr.mxu0 0.0
    %3791 = vmatpush1.msra.mxu0 %v104
    %3792 = vmatprep.subr.mxu0 0.0
    %3793 = vmatpush1.msra.mxu0 0.0
    %3794 = vmatprep.subr.mxu0 0.0
    %3795 = vmatpush1.msra.mxu0 0.0
    %3796 = vmatprep.subr.mxu0 0.0
    %3797 = vmatpush1.msra.mxu0 0.0
    %3798 = vmatprep.subr.mxu0 0.0
    %3799 = vmatpush1.msra.mxu0 0.0
    %3800 = vmatprep.subr.mxu0 0.0
    %3801 = vmatpush1.msra.mxu0 0.0
    %3802 = vmatprep.subr.mxu0 0.0
    %3803 = vmatpush1.msra.mxu0 0.0
    %3804 = vmatprep.subr.mxu0 0.0
    %3805 = vmatpush1.msra.mxu0 0.0
    %3806 = vmatprep.subr.mxu0 0.0
    %3807 = vmatpush1.msra.mxu0 0.0
    %3808 = vmatprep.subr.mxu0 0.0
    %3809 = vmatpush1.msra.mxu0 0.0
    %3810 = vmatprep.subr.mxu0 0.0
    %3811 = vmatpush1.msra.mxu0 0.0
    %3812 = vmatprep.subr.mxu0 0.0
    %3813 = vmatpush1.msra.mxu0 0.0
    %3814 = vmatprep.subr.mxu0 0.0
    %3815 = vmatpush1.msra.mxu0 0.0
    %3816 = vmatprep.subr.mxu0 0.0
    %3817 = vmatpush1.msra.mxu0 0.0
    %3818 = vmatprep.subr.mxu0 0.0
    %3819 = vmatpush1.msra.mxu0 0.0
    %3820 = vmatprep.subr.mxu0 0.0
    %3821 = vmatpush1.msra.mxu0 0.0
    %3822 = vmatprep.subr.mxu0 0.0
    %3823 = vmatpush1.msra.mxu0 0.0
    %3824 = vmatprep.mubr.f32.mxu0 0.0
    %3825 = vmatmul.mubr.f32.gmra.mrb[0].mxu0 %v3753
    %v3826 = vpop.f32.mrb[0].mxu0
    %v3827 = vadd.f32 0.0, %v3826
    %v3828 = vpop.f32.mrb[0].mxu0
    %3829 = vmatprep.mubr.f32.mxu0 0.0
    %3830 = vmatmul.mubr.f32.gmra.mrb[0].mxu0 %v3755
    %v3831 = vpop.f32.mrb[0].mxu0
    %v3832 = vadd.f32 0.0, %v3831
    %v3833 = vpop.f32.mrb[0].mxu0
    %3834 = vmatprep.mubr.f32.mxu0 0.0
    %3835 = vmatmul.mubr.f32.gmra.mrb[0].mxu0 %v3757
    %v3836 = vpop.f32.mrb[0].mxu0
    %v3837 = vadd.f32 0.0, %v3836
    %v3838 = vpop.f32.mrb[0].mxu0
    %3839 = vmatprep.mubr.f32.mxu0 0.0
    %3840 = vmatmul.mubr.f32.gmra.mrb[0].mxu0 %v3759
    %v3841 = vpop.f32.mrb[0].mxu0
    %v3842 = vadd.f32 0.0, %v3841
    %v3843 = vpop.f32.mrb[0].mxu0
    %3844 = vdwg.mxu0
    %v3845 = vrcp.pop %v3827
    %v3846 = vrcp.pop %v3832
    %v3847 = vrcp.pop %v3837
    %v3848 = vrcp.pop %v3842
    %v3849 = vmul.f32 %v3753, %v3845
    %v3850 = vmul.f32 %v3755, %v3846
    %v3851 = vmul.f32 %v3757, %v3847
    %v3852 = vmul.f32 %v3759, %v3848
    %v3853 = vpack.c.bf16 %v3850, %v3849
    %v3854 = vpack.c.bf16 %v3852, %v3851
    %v3855 = vpack.c.bf16 %v3632, %v3631
    %v3856 = vpack.c.bf16 %v3634, %v3633
    %v3857 = vpack.c.bf16 %v3636, %v3635
    %v3858 = vpack.c.bf16 %v3638, %v3637
    %v3859 = vpack.c.bf16 %v3640, %v3639
    %v3860 = vpack.c.bf16 %v3642, %v3641
    %v3861 = vpack.c.bf16 %v3644, %v3643
    %v3862 = vpack.c.bf16 %v3646, %v3645
    %3863 = vmatprep.subr.bf16.mxu0 0
    %3864 = vmatpush1.bf16.msra.mxu0 %v3855
    %3865 = vmatprep.subr.bf16.mxu0 0
    %3866 = vmatpush1.bf16.msra.mxu0 %v3856
    %3867 = vmatprep.subr.bf16.mxu0 0
    %3868 = vmatpush1.bf16.msra.mxu0 %v3857
    %3869 = vmatprep.subr.bf16.mxu0 0
    %3870 = vmatpush1.bf16.msra.mxu0 %v3858
    %3871 = vmatprep.subr.bf16.mxu0 0
    %3872 = vmatpush1.bf16.msra.mxu0 %v3859
    %3873 = vmatprep.subr.bf16.mxu0 0
    %3874 = vmatpush1.bf16.msra.mxu0 %v3860
    %3875 = vmatprep.subr.bf16.mxu0 0
    %3876 = vmatpush1.bf16.msra.mxu0 %v3861
    %3877 = vmatprep.subr.bf16.mxu0 0
    %3878 = vmatpush1.bf16.msra.mxu0 %v3862
    %3879 = vmatprep.subr.bf16.mxu0 0
    %3880 = vmatpush1.bf16.msra.mxu0 0
    %3881 = vmatprep.subr.bf16.mxu0 0
    %3882 = vmatpush1.bf16.msra.mxu0 0
    %3883 = vmatprep.subr.bf16.mxu0 0
    %3884 = vmatpush1.bf16.msra.mxu0 0
    %3885 = vmatprep.subr.bf16.mxu0 0
    %3886 = vmatpush1.bf16.msra.mxu0 0
    %3887 = vmatprep.subr.bf16.mxu0 0
    %3888 = vmatpush1.bf16.msra.mxu0 0
    %3889 = vmatprep.subr.bf16.mxu0 0
    %3890 = vmatpush1.bf16.msra.mxu0 0
    %3891 = vmatprep.subr.bf16.mxu0 0
    %3892 = vmatpush1.bf16.msra.mxu0 0
    %3893 = vmatprep.subr.bf16.mxu0 0
    %3894 = vmatpush1.bf16.msra.mxu0 0
    %3895 = vmatprep.mubr.bf16.mxu0 0
    %3896 = vmatmul.mubr.bf16.gmra.mrb[0].mxu0 %v3853
    %v3897 = vpop.f32.mrb[0].mxu0
    %v3898 = vadd.f32 0.0, %v3897
    %v3899 = vpop.f32.mrb[0].mxu0
    %v3900 = vpop.f32.mrb[0].mxu0
    %v3901 = vadd.f32 0.0, %v3900
    %v3902 = vpop.f32.mrb[0].mxu0
    %3903 = vmatprep.mubr.bf16.mxu0 0
    %3904 = vmatmul.mubr.bf16.gmra.mrb[0].mxu0 %v3854
    %v3905 = vpop.f32.mrb[0].mxu0
    %v3906 = vadd.f32 0.0, %v3905
    %v3907 = vpop.f32.mrb[0].mxu0
    %v3908 = vpop.f32.mrb[0].mxu0
    %v3909 = vadd.f32 0.0, %v3908
    %v3910 = vpop.f32.mrb[0].mxu0
    %3911 = vdwg.mxu0
    %v3912 = vld [vmem:[%s12] sm:$0xf]
    %v3913 = vld [vmem:[%s12 + $0x4] sm:$0xf]
    %v3914 = vld [vmem:[%s12 + $0x8] sm:$0xf]
    %v3915 = vld [vmem:[%s12 + $0xc] sm:$0xf]
    %v3916 = vpack.c.bf16 %v3901, %v3898
    %v3917 = vpack.c.bf16 %v3909, %v3906
    %v3922 = vunpack.c.l.b16 %v3912
    %v3923 = vunpack.c.l.b16 %v3913
    %v3924 = vunpack.c.l.b16 %v3914
    %v3925 = vunpack.c.l.b16 %v3915
    %v3926 = vpack.c.b16 %v3923, %v3922
    %v3927 = vpack.c.b16 %v3925, %v3924
    %v3931 = vsel %vm3338, %v3916, 0
    %v3934 = vsel %vm3338, %v3917, 0
    %3936 = vmatprep.subr.bf16.mxu0 0
    %3937 = vmatpush1.bf16.msra.mxu0 %v3926
    %3938 = vmatprep.subr.bf16.mxu0 0
    %3939 = vmatpush1.bf16.msra.mxu0 %v3927
    %3940 = vmatprep.subr.bf16.mxu0 0
    %3941 = vmatpush1.bf16.msra.mxu0 0
    %3942 = vmatprep.subr.bf16.mxu0 0
    %3943 = vmatpush1.bf16.msra.mxu0 0
    %3944 = vmatprep.subr.bf16.mxu0 0
    %3945 = vmatpush1.bf16.msra.mxu0 0
    %3946 = vmatprep.subr.bf16.mxu0 0
    %3947 = vmatpush1.bf16.msra.mxu0 0
    %3948 = vmatprep.subr.bf16.mxu0 0
    %3949 = vmatpush1.bf16.msra.mxu0 0
    %3950 = vmatprep.subr.bf16.mxu0 0
    %3951 = vmatpush1.bf16.msra.mxu0 0
    %3952 = vmatprep.subr.bf16.mxu0 0
    %3953 = vmatpush1.bf16.msra.mxu0 0
    %3954 = vmatprep.subr.bf16.mxu0 0
    %3955 = vmatpush1.bf16.msra.mxu0 0
    %3956 = vmatprep.subr.bf16.mxu0 0
    %3957 = vmatpush1.bf16.msra.mxu0 0
    %3958 = vmatprep.subr.bf16.mxu0 0
    %3959 = vmatpush1.bf16.msra.mxu0 0
    %3960 = vmatprep.subr.bf16.mxu0 0
    %3961 = vmatpush1.bf16.msra.mxu0 0
    %3962 = vmatprep.subr.bf16.mxu0 0
    %3963 = vmatpush1.bf16.msra.mxu0 0
    %3964 = vmatprep.subr.bf16.mxu0 0
    %3965 = vmatpush1.bf16.msra.mxu0 0
    %3966 = vmatprep.subr.bf16.mxu0 0
    %3967 = vmatpush1.bf16.msra.mxu0 0
    %3968 = vmatprep.mubr.bf16.mxu0 0
    %3969 = vmatmul.mubr.bf16.gmra.mrb[0].mxu0 %v3931
    %v3970 = vpop.f32.mrb[0].mxu0
    %v3971 = vadd.f32 0.0, %v3970
    %v3972 = vpop.f32.mrb[0].mxu0
    %v3973 = vpop.f32.mrb[0].mxu0
    %v3974 = vadd.f32 0.0, %v3973
    %v3975 = vpop.f32.mrb[0].mxu0
    %3976 = vmatprep.mubr.bf16.mxu0 0
    %3977 = vmatmul.mubr.bf16.gmra.mrb[0].mxu0 %v3934
    %v3978 = vpop.f32.mrb[0].mxu0
    %v3979 = vadd.f32 0.0, %v3978
    %v3980 = vpop.f32.mrb[0].mxu0
    %v3981 = vpop.f32.mrb[0].mxu0
    %v3982 = vadd.f32 0.0, %v3981
    %v3983 = vpop.f32.mrb[0].mxu0
    %3984 = vdwg.mxu0
    %v3985 = vadd.f32 %v3332, %v3971
    %v3986 = vadd.f32 %v3333, %v3974
    %v3987 = vadd.f32 %v3334, %v3979
    %v3988 = vadd.f32 %v3335, %v3982
    %v3989 = vld [vmem:[%s13] sm:$0x1]
    %v3991 = vlaneseq
    %v3992 = vshrl.u32 %v3991, 7
    %v3993 = vsub.s32 0, %v3992
    %v3994 = vrot.slane %v3989, %v3993
    %v3996 = vadd.f32 %v3985, %v3994
    %v3997 = vadd.f32 %v3986, %v3994
    %v3998 = vadd.f32 %v3987, %v3994
    %v3999 = vadd.f32 %v3988, %v3994
    %v4000 = vld [vmem:[%s14] sm:$0x1]
    %v4001 = vld [vmem:[%s15] sm:$0x1]
    %v4002 = vsel %vm3338, %v3996, 0.0
    %4003 = vadd.xlane.f32.xlu0 %v4002
    %v4004 = vpop.xlane.xlu0 %4003
    %v4005 = vsel %vm3338, %v3997, 0.0
    %4006 = vadd.xlane.f32.xlu0 %v4005
    %v4007 = vpop.xlane.xlu0 %4006
    %v4008 = vsel %vm3338, %v3998, 0.0
    %4009 = vadd.xlane.f32.xlu0 %v4008
    %v4010 = vpop.xlane.xlu0 %4009
    %v4011 = vsel %vm3338, %v3999, 0.0
    %4012 = vadd.xlane.f32.xlu0 %v4011
    %v4013 = vpop.xlane.xlu0 %4012
    %v4014 = vmul.f32 %v4004, %v3351
    %v4015 = vmul.f32 %v4007, %v3351
    %v4016 = vmul.f32 %v4010, %v3351
    %v4017 = vmul.f32 %v4013, %v3351
    %v4018 = vsub.f32 %v3996, %v4014
    %v4019 = vsub.f32 %v3997, %v4015
    %v4020 = vsub.f32 %v3998, %v4016
    %v4021 = vsub.f32 %v3999, %v4017
    %v4022 = vmul.f32 %v4018, %v4018
    %v4023 = vmul.f32 %v4019, %v4019
    %v4024 = vmul.f32 %v4020, %v4020
    %v4025 = vmul.f32 %v4021, %v4021
    %v4026 = vsel %vm3338, %v4022, 0.0
    %4027 = vadd.xlane.f32.xlu0 %v4026
    %v4028 = vpop.xlane.xlu0 %4027
    %v4029 = vsel %vm3338, %v4023, 0.0
    %4030 = vadd.xlane.f32.xlu0 %v4029
    %v4031 = vpop.xlane.xlu0 %4030
    %v4032 = vsel %vm3338, %v4024, 0.0
    %4033 = vadd.xlane.f32.xlu0 %v4032
    %v4034 = vpop.xlane.xlu0 %4033
    %v4035 = vsel %vm3338, %v4025, 0.0
    %4036 = vadd.xlane.f32.xlu0 %v4035
    %v4037 = vpop.xlane.xlu0 %4036
    %v4038 = vmul.f32 %v4028, %v3351
    %v4039 = vmul.f32 %v4031, %v3351
    %v4040 = vmul.f32 %v4034, %v3351
    %v4041 = vmul.f32 %v4037, %v3351
    %v4042 = vadd.f32 %v4038, 1e-05
    %v4043 = vadd.f32 %v4039, 1e-05
    %v4044 = vadd.f32 %v4040, 1e-05
    %v4045 = vadd.f32 %v4041, 1e-05
    %v4046 = vrsqrt.pop %v4042
    %v4047 = vrsqrt.pop %v4043
    %v4048 = vrsqrt.pop %v4044
    %v4049 = vrsqrt.pop %v4045
    %v4050 = vmul.f32 %v4018, %v4046
    %v4051 = vmul.f32 %v4019, %v4047
    %v4052 = vmul.f32 %v4020, %v4048
    %v4053 = vmul.f32 %v4021, %v4049
    %v4055 = vlaneseq
    %v4056 = vshrl.u32 %v4055, 7
    %v4057 = vsub.s32 0, %v4056
    %v4058 = vrot.slane %v4000, %v4057
    %v4060 = vmul.f32 %v4050, %v4058
    %v4061 = vmul.f32 %v4051, %v4058
    %v4062 = vmul.f32 %v4052, %v4058
    %v4063 = vmul.f32 %v4053, %v4058
    %v4065 = vlaneseq
    %v4066 = vshrl.u32 %v4065, 7
    %v4067 = vsub.s32 0, %v4066
    %v4068 = vrot.slane %v4001, %v4067
    %v4070 = vadd.f32 %v4060, %v4068
    %v4071 = vadd.f32 %v4061, %v4068
    %v4072 = vadd.f32 %v4062, %v4068
    %v4073 = vadd.f32 %v4063, %v4068
    %v4074 = vld [vmem:[%s16] sm:$0xf]
    %v4075 = vld [vmem:[%s16 + $0x4] sm:$0xf]
    %v4076 = vld [vmem:[%s16 + $0x8] sm:$0xf]
    %v4077 = vld [vmem:[%s16 + $0xc] sm:$0xf]
    %v4078 = vpack.c.bf16 %v4071, %v4070
    %v4079 = vpack.c.bf16 %v4073, %v4072
    %v4080 = vld [vmem:[%s17] sm:$0x1]
    %v4082 = vlaneseq
    %v4083 = vshrl.u32 %v4082, 7
    %v4084 = vsub.s32 0, %v4083
    %v4085 = vrot.slane %v4080, %v4084
    %v4091 = vunpack.c.l.b16 %v4074
    %v4092 = vunpack.c.l.b16 %v4075
    %v4093 = vunpack.c.l.b16 %v4076
    %v4094 = vunpack.c.l.b16 %v4077
    %v4095 = vpack.c.b16 %v4092, %v4091
    %v4096 = vpack.c.b16 %v4094, %v4093
    %v4100 = vsel %vm3338, %v4078, 0
    %v4103 = vsel %vm3338, %v4079, 0
    %4105 = vmatprep.subr.bf16.mxu0 0
    %4106 = vmatpush1.bf16.msra.mxu0 %v4095
    %4107 = vmatprep.subr.bf16.mxu0 0
    %4108 = vmatpush1.bf16.msra.mxu0 %v4096
    %4109 = vmatprep.subr.bf16.mxu0 0
    %4110 = vmatpush1.bf16.msra.mxu0 0
    %4111 = vmatprep.subr.bf16.mxu0 0
    %4112 = vmatpush1.bf16.msra.mxu0 0
    %4113 = vmatprep.subr.bf16.mxu0 0
    %4114 = vmatpush1.bf16.msra.mxu0 0
    %4115 = vmatprep.subr.bf16.mxu0 0
    %4116 = vmatpush1.bf16.msra.mxu0 0
    %4117 = vmatprep.subr.bf16.mxu0 0
    %4118 = vmatpush1.bf16.msra.mxu0 0
    %4119 = vmatprep.subr.bf16.mxu0 0
    %4120 = vmatpush1.bf16.msra.mxu0 0
    %4121 = vmatprep.subr.bf16.mxu0 0
    %4122 = vmatpush1.bf16.msra.mxu0 0
    %4123 = vmatprep.subr.bf16.mxu0 0
    %4124 = vmatpush1.bf16.msra.mxu0 0
    %4125 = vmatprep.subr.bf16.mxu0 0
    %4126 = vmatpush1.bf16.msra.mxu0 0
    %4127 = vmatprep.subr.bf16.mxu0 0
    %4128 = vmatpush1.bf16.msra.mxu0 0
    %4129 = vmatprep.subr.bf16.mxu0 0
    %4130 = vmatpush1.bf16.msra.mxu0 0
    %4131 = vmatprep.subr.bf16.mxu0 0
    %4132 = vmatpush1.bf16.msra.mxu0 0
    %4133 = vmatprep.subr.bf16.mxu0 0
    %4134 = vmatpush1.bf16.msra.mxu0 0
    %4135 = vmatprep.subr.bf16.mxu0 0
    %4136 = vmatpush1.bf16.msra.mxu0 0
    %4137 = vmatprep.mubr.bf16.mxu0 0
    %4138 = vmatmul.mubr.bf16.gmra.mrb[0].mxu0 %v4100
    %v4139 = vpop.f32.mrb[0].mxu0
    %v4140 = vadd.f32 %v4085, %v4139
    %v4141 = vpop.f32.mrb[0].mxu0
    %v4142 = vpop.f32.mrb[0].mxu0
    %v4143 = vadd.f32 %v4085, %v4142
    %v4144 = vpop.f32.mrb[0].mxu0
    %4145 = vmatprep.mubr.bf16.mxu0 0
    %4146 = vmatmul.mubr.bf16.gmra.mrb[0].mxu0 %v4103
    %v4147 = vpop.f32.mrb[0].mxu0
    %v4148 = vadd.f32 %v4085, %v4147
    %v4149 = vpop.f32.mrb[0].mxu0
    %v4150 = vpop.f32.mrb[0].mxu0
    %v4151 = vadd.f32 %v4085, %v4150
    %v4152 = vpop.f32.mrb[0].mxu0
    %4153 = vdwg.mxu0
    %v4154 = vmax.f32 %v4140, 0.0
    %v4155 = vmax.f32 %v4143, 0.0
    %v4156 = vmax.f32 %v4148, 0.0
    %v4157 = vmax.f32 %v4151, 0.0
    %v4158 = vld [vmem:[%s18] sm:$0xf]
    %v4159 = vld [vmem:[%s18 + $0x4] sm:$0xf]
    %v4160 = vld [vmem:[%s18 + $0x8] sm:$0xf]
    %v4161 = vld [vmem:[%s18 + $0xc] sm:$0xf]
    %v4162 = vld [vmem:[%s18 + $0x10] sm:$0xf]
    %v4163 = vld [vmem:[%s18 + $0x14] sm:$0xf]
    %v4164 = vld [vmem:[%s18 + $0x18] sm:$0xf]
    %v4165 = vld [vmem:[%s18 + $0x1c] sm:$0xf]
    %v4166 = vld [vmem:[%s18 + $0x20] sm:$0xf]
    %v4167 = vld [vmem:[%s18 + $0x24] sm:$0xf]
    %v4168 = vld [vmem:[%s18 + $0x28] sm:$0xf]
    %v4169 = vld [vmem:[%s18 + $0x2c] sm:$0xf]
    %v4170 = vld [vmem:[%s18 + $0x30] sm:$0xf]
    %v4171 = vld [vmem:[%s18 + $0x34] sm:$0xf]
    %v4172 = vld [vmem:[%s18 + $0x38] sm:$0xf]
    %v4173 = vld [vmem:[%s18 + $0x3c] sm:$0xf]
    %v4174 = vpack.c.bf16 %v4155, %v4154
    %v4175 = vpack.c.bf16 %v4157, %v4156
    %v4192 = vunpack.c.l.b16 %v4158
    %v4193 = vunpack.c.l.b16 %v4159
    %v4194 = vunpack.c.l.b16 %v4160
    %v4195 = vunpack.c.l.b16 %v4161
    %v4196 = vunpack.c.l.b16 %v4162
    %v4197 = vunpack.c.l.b16 %v4163
    %v4198 = vunpack.c.l.b16 %v4164
    %v4199 = vunpack.c.l.b16 %v4165
    %v4200 = vunpack.c.l.b16 %v4166
    %v4201 = vunpack.c.l.b16 %v4167
    %v4202 = vunpack.c.l.b16 %v4168
    %v4203 = vunpack.c.l.b16 %v4169
    %v4204 = vunpack.c.l.b16 %v4170
    %v4205 = vunpack.c.l.b16 %v4171
    %v4206 = vunpack.c.l.b16 %v4172
    %v4207 = vunpack.c.l.b16 %v4173
    %v4208 = vpack.c.b16 %v4193, %v4192
    %v4209 = vpack.c.b16 %v4195, %v4194
    %v4210 = vpack.c.b16 %v4197, %v4196
    %v4211 = vpack.c.b16 %v4199, %v4198
    %v4212 = vpack.c.b16 %v4201, %v4200
    %v4213 = vpack.c.b16 %v4203, %v4202
    %v4214 = vpack.c.b16 %v4205, %v4204
    %v4215 = vpack.c.b16 %v4207, %v4206
    %4224 = vmatprep.subr.bf16.mxu0 0
    %4225 = vmatpush1.bf16.msra.mxu0 %v4208
    %4226 = vmatprep.subr.bf16.mxu0 0
    %4227 = vmatpush1.bf16.msra.mxu0 %v4209
    %4228 = vmatprep.subr.bf16.mxu0 0
    %4229 = vmatpush1.bf16.msra.mxu0 %v4210
    %4230 = vmatprep.subr.bf16.mxu0 0
    %4231 = vmatpush1.bf16.msra.mxu0 %v4211
    %4232 = vmatprep.subr.bf16.mxu0 0
    %4233 = vmatpush1.bf16.msra.mxu0 %v4212
    %4234 = vmatprep.subr.bf16.mxu0 0
    %4235 = vmatpush1.bf16.msra.mxu0 %v4213
    %4236 = vmatprep.subr.bf16.mxu0 0
    %4237 = vmatpush1.bf16.msra.mxu0 %v4214
    %4238 = vmatprep.subr.bf16.mxu0 0
    %4239 = vmatpush1.bf16.msra.mxu0 %v4215
    %4240 = vmatprep.subr.bf16.mxu0 0
    %4241 = vmatpush1.bf16.msra.mxu0 0
    %4242 = vmatprep.subr.bf16.mxu0 0
    %4243 = vmatpush1.bf16.msra.mxu0 0
    %4244 = vmatprep.subr.bf16.mxu0 0
    %4245 = vmatpush1.bf16.msra.mxu0 0
    %4246 = vmatprep.subr.bf16.mxu0 0
    %4247 = vmatpush1.bf16.msra.mxu0 0
    %4248 = vmatprep.subr.bf16.mxu0 0
    %4249 = vmatpush1.bf16.msra.mxu0 0
    %4250 = vmatprep.subr.bf16.mxu0 0
    %4251 = vmatpush1.bf16.msra.mxu0 0
    %4252 = vmatprep.subr.bf16.mxu0 0
    %4253 = vmatpush1.bf16.msra.mxu0 0
    %4254 = vmatprep.subr.bf16.mxu0 0
    %4255 = vmatpush1.bf16.msra.mxu0 0
    %4256 = vmatprep.mubr.bf16.mxu0 0
    %4257 = vmatmul.mubr.bf16.gmra.mrb[0].mxu0 %v4174
    %v4258 = vpop.f32.mrb[0].mxu0
    %v4259 = vadd.f32 0.0, %v4258
    %v4260 = vpop.f32.mrb[0].mxu0
    %v4261 = vpop.f32.mrb[0].mxu0
    %v4262 = vadd.f32 0.0, %v4261
    %v4263 = vpop.f32.mrb[0].mxu0
    %4264 = vmatprep.mubr.bf16.mxu0 0
    %4265 = vmatmul.mubr.bf16.gmra.mrb[0].mxu0 %v4175
    %v4266 = vpop.f32.mrb[0].mxu0
    %v4267 = vadd.f32 0.0, %v4266
    %v4268 = vpop.f32.mrb[0].mxu0
    %v4269 = vpop.f32.mrb[0].mxu0
    %v4270 = vadd.f32 0.0, %v4269
    %v4271 = vpop.f32.mrb[0].mxu0
    %4272 = vdwg.mxu0
    %v4273 = vadd.f32 %v4070, %v4259
    %v4274 = vadd.f32 %v4071, %v4262
    %v4275 = vadd.f32 %v4072, %v4267
    %v4276 = vadd.f32 %v4073, %v4270
    %v4277 = vld [vmem:[%s19] sm:$0x1]
    %v4279 = vlaneseq
    %v4280 = vshrl.u32 %v4279, 7
    %v4281 = vsub.s32 0, %v4280
    %v4282 = vrot.slane %v4277, %v4281
    %v4284 = vadd.f32 %v4273, %v4282
    %v4285 = vadd.f32 %v4274, %v4282
    %v4286 = vadd.f32 %v4275, %v4282
    %v4287 = vadd.f32 %v4276, %v4282
    %s4288 = scalar_lea.vmem %s7, 1
    %v4289 = vld [vmem:[%s4288] sm:$0x1]
    %s4290 = scalar_lea.vmem %s8, 1
    %v4291 = vld [vmem:[%s4290] sm:$0x1]
    %v4292 = vsel %vm3338, %v4284, 0.0
    %4293 = vadd.xlane.f32.xlu0 %v4292
    %v4294 = vpop.xlane.xlu0 %4293
    %v4295 = vsel %vm3338, %v4285, 0.0
    %4296 = vadd.xlane.f32.xlu0 %v4295
    %v4297 = vpop.xlane.xlu0 %4296
    %v4298 = vsel %vm3338, %v4286, 0.0
    %4299 = vadd.xlane.f32.xlu0 %v4298
    %v4300 = vpop.xlane.xlu0 %4299
    %v4301 = vsel %vm3338, %v4287, 0.0
    %4302 = vadd.xlane.f32.xlu0 %v4301
    %v4303 = vpop.xlane.xlu0 %4302
    %v4304 = vmul.f32 %v4294, %v3351
    %v4305 = vmul.f32 %v4297, %v3351
    %v4306 = vmul.f32 %v4300, %v3351
    %v4307 = vmul.f32 %v4303, %v3351
    %v4308 = vsub.f32 %v4284, %v4304
    %v4309 = vsub.f32 %v4285, %v4305
    %v4310 = vsub.f32 %v4286, %v4306
    %v4311 = vsub.f32 %v4287, %v4307
    %v4312 = vmul.f32 %v4308, %v4308
    %v4313 = vmul.f32 %v4309, %v4309
    %v4314 = vmul.f32 %v4310, %v4310
    %v4315 = vmul.f32 %v4311, %v4311
    %v4316 = vsel %vm3338, %v4312, 0.0
    %4317 = vadd.xlane.f32.xlu0 %v4316
    %v4318 = vpop.xlane.xlu0 %4317
    %v4319 = vsel %vm3338, %v4313, 0.0
    %4320 = vadd.xlane.f32.xlu0 %v4319
    %v4321 = vpop.xlane.xlu0 %4320
    %v4322 = vsel %vm3338, %v4314, 0.0
    %4323 = vadd.xlane.f32.xlu0 %v4322
    %v4324 = vpop.xlane.xlu0 %4323
    %v4325 = vsel %vm3338, %v4315, 0.0
    %4326 = vadd.xlane.f32.xlu0 %v4325
    %v4327 = vpop.xlane.xlu0 %4326
    %v4328 = vmul.f32 %v4318, %v3351
    %v4329 = vmul.f32 %v4321, %v3351
    %v4330 = vmul.f32 %v4324, %v3351
    %v4331 = vmul.f32 %v4327, %v3351
    %v4332 = vadd.f32 %v4328, 1e-05
    %v4333 = vadd.f32 %v4329, 1e-05
    %v4334 = vadd.f32 %v4330, 1e-05
    %v4335 = vadd.f32 %v4331, 1e-05
    %v4336 = vrsqrt.pop %v4332
    %v4337 = vrsqrt.pop %v4333
    %v4338 = vrsqrt.pop %v4334
    %v4339 = vrsqrt.pop %v4335
    %v4340 = vmul.f32 %v4308, %v4336
    %v4341 = vmul.f32 %v4309, %v4337
    %v4342 = vmul.f32 %v4310, %v4338
    %v4343 = vmul.f32 %v4311, %v4339
    %v4345 = vlaneseq
    %v4346 = vshrl.u32 %v4345, 7
    %v4347 = vsub.s32 0, %v4346
    %v4348 = vrot.slane %v4289, %v4347
    %v4350 = vmul.f32 %v4340, %v4348
    %v4351 = vmul.f32 %v4341, %v4348
    %v4352 = vmul.f32 %v4342, %v4348
    %v4353 = vmul.f32 %v4343, %v4348
    %v4355 = vlaneseq
    %v4356 = vshrl.u32 %v4355, 7
    %v4357 = vsub.s32 0, %v4356
    %v4358 = vrot.slane %v4291, %v4357
    %v4360 = vadd.f32 %v4350, %v4358
    %v4361 = vadd.f32 %v4351, %v4358
    %v4362 = vadd.f32 %v4352, %v4358
    %v4363 = vadd.f32 %v4353, %v4358
    %s4364 = scalar_lea.vmem %s9, 16
    %v4365 = vld [vmem:[%s4364] sm:$0xf]
    %v4366 = vld [vmem:[%s4364 + $0x4] sm:$0xf]
    %v4367 = vld [vmem:[%s4364 + $0x8] sm:$0xf]
    %v4368 = vld [vmem:[%s4364 + $0xc] sm:$0xf]
    %v4369 = vpack.c.bf16 %v4361, %v4360
    %v4370 = vpack.c.bf16 %v4363, %v4362
    %v4375 = vunpack.c.l.b16 %v4365
    %v4376 = vunpack.c.l.b16 %v4366
    %v4377 = vunpack.c.l.b16 %v4367
    %v4378 = vunpack.c.l.b16 %v4368
    %v4379 = vpack.c.b16 %v4376, %v4375
    %v4380 = vpack.c.b16 %v4378, %v4377
    %v4384 = vsel %vm3338, %v4369, 0
    %v4387 = vsel %vm3338, %v4370, 0
    %4389 = vmatprep.subr.bf16.mxu0 0
    %4390 = vmatpush1.bf16.msra.mxu0 %v4379
    %4391 = vmatprep.subr.bf16.mxu0 0
    %4392 = vmatpush1.bf16.msra.mxu0 %v4380
    %4393 = vmatprep.subr.bf16.mxu0 0
    %4394 = vmatpush1.bf16.msra.mxu0 0
    %4395 = vmatprep.subr.bf16.mxu0 0
    %4396 = vmatpush1.bf16.msra.mxu0 0
    %4397 = vmatprep.subr.bf16.mxu0 0
    %4398 = vmatpush1.bf16.msra.mxu0 0
    %4399 = vmatprep.subr.bf16.mxu0 0
    %4400 = vmatpush1.bf16.msra.mxu0 0
    %4401 = vmatprep.subr.bf16.mxu0 0
    %4402 = vmatpush1.bf16.msra.mxu0 0
    %4403 = vmatprep.subr.bf16.mxu0 0
    %4404 = vmatpush1.bf16.msra.mxu0 0
    %4405 = vmatprep.subr.bf16.mxu0 0
    %4406 = vmatpush1.bf16.msra.mxu0 0
    %4407 = vmatprep.subr.bf16.mxu0 0
    %4408 = vmatpush1.bf16.msra.mxu0 0
    %4409 = vmatprep.subr.bf16.mxu0 0
    %4410 = vmatpush1.bf16.msra.mxu0 0
    %4411 = vmatprep.subr.bf16.mxu0 0
    %4412 = vmatpush1.bf16.msra.mxu0 0
    %4413 = vmatprep.subr.bf16.mxu0 0
    %4414 = vmatpush1.bf16.msra.mxu0 0
    %4415 = vmatprep.subr.bf16.mxu0 0
    %4416 = vmatpush1.bf16.msra.mxu0 0
    %4417 = vmatprep.subr.bf16.mxu0 0
    %4418 = vmatpush1.bf16.msra.mxu0 0
    %4419 = vmatprep.subr.bf16.mxu0 0
    %4420 = vmatpush1.bf16.msra.mxu0 0
    %4421 = vmatprep.mubr.bf16.mxu0 0
    %4422 = vmatmul.mubr.bf16.gmra.mrb[0].mxu0 %v4384
    %v4423 = vpop.f32.mrb[0].mxu0
    %v4424 = vadd.f32 0.0, %v4423
    %v4425 = vpop.f32.mrb[0].mxu0
    %v4426 = vpop.f32.mrb[0].mxu0
    %v4427 = vadd.f32 0.0, %v4426
    %v4428 = vpop.f32.mrb[0].mxu0
    %4429 = vmatprep.mubr.bf16.mxu0 0
    %4430 = vmatmul.mubr.bf16.gmra.mrb[0].mxu0 %v4387
    %v4431 = vpop.f32.mrb[0].mxu0
    %v4432 = vadd.f32 0.0, %v4431
    %v4433 = vpop.f32.mrb[0].mxu0
    %v4434 = vpop.f32.mrb[0].mxu0
    %v4435 = vadd.f32 0.0, %v4434
    %v4436 = vpop.f32.mrb[0].mxu0
    %4437 = vdwg.mxu0
    %s4438 = scalar_lea.vmem %s10, 16
    %v4439 = vld [vmem:[%s4438] sm:$0xf]
    %v4440 = vld [vmem:[%s4438 + $0x4] sm:$0xf]
    %v4441 = vld [vmem:[%s4438 + $0x8] sm:$0xf]
    %v4442 = vld [vmem:[%s4438 + $0xc] sm:$0xf]
    %v4447 = vunpack.c.l.b16 %v4439
    %v4448 = vunpack.c.l.b16 %v4440
    %v4449 = vunpack.c.l.b16 %v4441
    %v4450 = vunpack.c.l.b16 %v4442
    %v4451 = vpack.c.b16 %v4448, %v4447
    %v4452 = vpack.c.b16 %v4450, %v4449
    %4455 = vmatprep.subr.bf16.mxu0 0
    %4456 = vmatpush1.bf16.msra.mxu0 %v4451
    %4457 = vmatprep.subr.bf16.mxu0 0
    %4458 = vmatpush1.bf16.msra.mxu0 %v4452
    %4459 = vmatprep.subr.bf16.mxu0 0
    %4460 = vmatpush1.bf16.msra.mxu0 0
    %4461 = vmatprep.subr.bf16.mxu0 0
    %4462 = vmatpush1.bf16.msra.mxu0 0
    %4463 = vmatprep.subr.bf16.mxu0 0
    %4464 = vmatpush1.bf16.msra.mxu0 0
    %4465 = vmatprep.subr.bf16.mxu0 0
    %4466 = vmatpush1.bf16.msra.mxu0 0
    %4467 = vmatprep.subr.bf16.mxu0 0
    %4468 = vmatpush1.bf16.msra.mxu0 0
    %4469 = vmatprep.subr.bf16.mxu0 0
    %4470 = vmatpush1.bf16.msra.mxu0 0
    %4471 = vmatprep.subr.bf16.mxu0 0
    %4472 = vmatpush1.bf16.msra.mxu0 0
    %4473 = vmatprep.subr.bf16.mxu0 0
    %4474 = vmatpush1.bf16.msra.mxu0 0
    %4475 = vmatprep.subr.bf16.mxu0 0
    %4476 = vmatpush1.bf16.msra.mxu0 0
    %4477 = vmatprep.subr.bf16.mxu0 0
    %4478 = vmatpush1.bf16.msra.mxu0 0
    %4479 = vmatprep.subr.bf16.mxu0 0
    %4480 = vmatpush1.bf16.msra.mxu0 0
    %4481 = vmatprep.subr.bf16.mxu0 0
    %4482 = vmatpush1.bf16.msra.mxu0 0
    %4483 = vmatprep.subr.bf16.mxu0 0
    %4484 = vmatpush1.bf16.msra.mxu0 0
    %4485 = vmatprep.subr.bf16.mxu0 0
    %4486 = vmatpush1.bf16.msra.mxu0 0
    %4487 = vmatprep.mubr.bf16.mxu0 0
    %4488 = vmatmul.mubr.bf16.gmra.mrb[0].mxu0 %v4384
    %v4489 = vpop.f32.mrb[0].mxu0
    %v4490 = vadd.f32 0.0, %v4489
    %v4491 = vpop.f32.mrb[0].mxu0
    %v4492 = vpop.f32.mrb[0].mxu0
    %v4493 = vadd.f32 0.0, %v4492
    %v4494 = vpop.f32.mrb[0].mxu0
    %4495 = vmatprep.mubr.bf16.mxu0 0
    %4496 = vmatmul.mubr.bf16.gmra.mrb[0].mxu0 %v4387
    %v4497 = vpop.f32.mrb[0].mxu0
    %v4498 = vadd.f32 0.0, %v4497
    %v4499 = vpop.f32.mrb[0].mxu0
    %v4500 = vpop.f32.mrb[0].mxu0
    %v4501 = vadd.f32 0.0, %v4500
    %v4502 = vpop.f32.mrb[0].mxu0
    %4503 = vdwg.mxu0
    %s4504 = scalar_lea.vmem %s11, 16
    %v4505 = vld [vmem:[%s4504] sm:$0xf]
    %v4506 = vld [vmem:[%s4504 + $0x4] sm:$0xf]
    %v4507 = vld [vmem:[%s4504 + $0x8] sm:$0xf]
    %v4508 = vld [vmem:[%s4504 + $0xc] sm:$0xf]
    %v4513 = vunpack.c.l.b16 %v4505
    %v4514 = vunpack.c.l.b16 %v4506
    %v4515 = vunpack.c.l.b16 %v4507
    %v4516 = vunpack.c.l.b16 %v4508
    %v4517 = vpack.c.b16 %v4514, %v4513
    %v4518 = vpack.c.b16 %v4516, %v4515
    %4521 = vmatprep.subr.bf16.mxu0 0
    %4522 = vmatpush1.bf16.msra.mxu0 %v4517
    %4523 = vmatprep.subr.bf16.mxu0 0
    %4524 = vmatpush1.bf16.msra.mxu0 %v4518
    %4525 = vmatprep.subr.bf16.mxu0 0
    %4526 = vmatpush1.bf16.msra.mxu0 0
    %4527 = vmatprep.subr.bf16.mxu0 0
    %4528 = vmatpush1.bf16.msra.mxu0 0
    %4529 = vmatprep.subr.bf16.mxu0 0
    %4530 = vmatpush1.bf16.msra.mxu0 0
    %4531 = vmatprep.subr.bf16.mxu0 0
    %4532 = vmatpush1.bf16.msra.mxu0 0
    %4533 = vmatprep.subr.bf16.mxu0 0
    %4534 = vmatpush1.bf16.msra.mxu0 0
    %4535 = vmatprep.subr.bf16.mxu0 0
    %4536 = vmatpush1.bf16.msra.mxu0 0
    %4537 = vmatprep.subr.bf16.mxu0 0
    %4538 = vmatpush1.bf16.msra.mxu0 0
    %4539 = vmatprep.subr.bf16.mxu0 0
    %4540 = vmatpush1.bf16.msra.mxu0 0
    %4541 = vmatprep.subr.bf16.mxu0 0
    %4542 = vmatpush1.bf16.msra.mxu0 0
    %4543 = vmatprep.subr.bf16.mxu0 0
    %4544 = vmatpush1.bf16.msra.mxu0 0
    %4545 = vmatprep.subr.bf16.mxu0 0
    %4546 = vmatpush1.bf16.msra.mxu0 0
    %4547 = vmatprep.subr.bf16.mxu0 0
    %4548 = vmatpush1.bf16.msra.mxu0 0
    %4549 = vmatprep.subr.bf16.mxu0 0
    %4550 = vmatpush1.bf16.msra.mxu0 0
    %4551 = vmatprep.subr.bf16.mxu0 0
    %4552 = vmatpush1.bf16.msra.mxu0 0
    %4553 = vmatprep.mubr.bf16.mxu0 0
    %4554 = vmatmul.mubr.bf16.gmra.mrb[0].mxu0 %v4384
    %v4555 = vpop.f32.mrb[0].mxu0
    %v4556 = vadd.f32 0.0, %v4555
    %v4557 = vpop.f32.mrb[0].mxu0
    %v4558 = vpop.f32.mrb[0].mxu0
    %v4559 = vadd.f32 0.0, %v4558
    %v4560 = vpop.f32.mrb[0].mxu0
    %4561 = vmatprep.mubr.bf16.mxu0 0
    %4562 = vmatmul.mubr.bf16.gmra.mrb[0].mxu0 %v4387
    %v4563 = vpop.f32.mrb[0].mxu0
    %v4564 = vadd.f32 0.0, %v4563
    %v4565 = vpop.f32.mrb[0].mxu0
    %v4566 = vpop.f32.mrb[0].mxu0
    %v4567 = vadd.f32 0.0, %v4566
    %v4568 = vpop.f32.mrb[0].mxu0
    %4569 = vdwg.mxu0
    %v4570 = vmul.f32 %v4490, %v73
    %v4571 = vmul.f32 %v4493, %v74
    %v4572 = vmul.f32 %v4498, %v75
    %v4573 = vmul.f32 %v4501, %v76
    %v4574 = vmul.f32 %v4490, %v77
    %v4575 = vmul.f32 %v4493, %v78
    %v4576 = vmul.f32 %v4498, %v79
    %v4577 = vmul.f32 %v4501, %v80
    %v4578 = vmul.f32 %v4490, %v81
    %v4579 = vmul.f32 %v4493, %v82
    %v4580 = vmul.f32 %v4498, %v83
    %v4581 = vmul.f32 %v4501, %v84
    %v4582 = vmul.f32 %v4490, %v85
    %v4583 = vmul.f32 %v4493, %v86
    %v4584 = vmul.f32 %v4498, %v87
    %v4585 = vmul.f32 %v4501, %v88
    %v4586 = vmul.f32 %v4556, %v73
    %v4587 = vmul.f32 %v4559, %v74
    %v4588 = vmul.f32 %v4564, %v75
    %v4589 = vmul.f32 %v4567, %v76
    %v4590 = vmul.f32 %v4556, %v77
    %v4591 = vmul.f32 %v4559, %v78
    %v4592 = vmul.f32 %v4564, %v79
    %v4593 = vmul.f32 %v4567, %v80
    %v4594 = vmul.f32 %v4556, %v81
    %v4595 = vmul.f32 %v4559, %v82
    %v4596 = vmul.f32 %v4564, %v83
    %v4597 = vmul.f32 %v4567, %v84
    %v4598 = vmul.f32 %v4556, %v85
    %v4599 = vmul.f32 %v4559, %v86
    %v4600 = vmul.f32 %v4564, %v87
    %v4601 = vmul.f32 %v4567, %v88
    %v4602 = vpack.c.bf16 %v4427, %v4424
    %v4603 = vpack.c.bf16 %v4435, %v4432
    %v4604 = vpack.c.bf16 %v4571, %v4570
    %v4605 = vpack.c.bf16 %v4573, %v4572
    %v4606 = vpack.c.bf16 %v4575, %v4574
    %v4607 = vpack.c.bf16 %v4577, %v4576
    %v4608 = vpack.c.bf16 %v4579, %v4578
    %v4609 = vpack.c.bf16 %v4581, %v4580
    %v4610 = vpack.c.bf16 %v4583, %v4582
    %v4611 = vpack.c.bf16 %v4585, %v4584
    %s4612 = scalar_lea.vmem %s5, 32
    %v4613 = vld [vmem:[%s4612] sm:$0xff]
    %v4614 = vld [vmem:[%s4612 + $0x8] sm:$0xff]
    %v4615 = vld [vmem:[%s4612 + $0x10] sm:$0xff]
    %v4616 = vld [vmem:[%s4612 + $0x18] sm:$0xff]
    %v4618 = vsel %vm3338, %v4602, 0
    %v4621 = vsel %vm3338, %v4603, 0
    %v4624 = vsel %vm3338, %v4604, 0
    %v4627 = vsel %vm3338, %v4605, 0
    %v4630 = vsel %vm3338, %v4606, 0
    %v4633 = vsel %vm3338, %v4607, 0
    %v4636 = vsel %vm3338, %v4608, 0
    %v4639 = vsel %vm3338, %v4609, 0
    %v4642 = vsel %vm3338, %v4610, 0
    %v4645 = vsel %vm3338, %v4611, 0
    %4647 = vmatprep.subr.bf16.mxu0 0
    %4648 = vmatpush1.bf16.xpose.msra.mxu0 %v4624
    %4649 = vmatprep.subr.bf16.mxu0 0
    %4650 = vmatpush1.bf16.xpose.msra.mxu0 %v4627
    %4651 = vmatprep.subr.bf16.mxu0 0
    %4652 = vmatpush1.bf16.xpose.msra.mxu0 %v4630
    %4653 = vmatprep.subr.bf16.mxu0 0
    %4654 = vmatpush1.bf16.xpose.msra.mxu0 %v4633
    %4655 = vmatprep.subr.bf16.mxu0 0
    %4656 = vmatpush1.bf16.xpose.msra.mxu0 %v4636
    %4657 = vmatprep.subr.bf16.mxu0 0
    %4658 = vmatpush1.bf16.xpose.msra.mxu0 %v4639
    %4659 = vmatprep.subr.bf16.mxu0 0
    %4660 = vmatpush1.bf16.xpose.msra.mxu0 %v4642
    %4661 = vmatprep.subr.bf16.mxu0 0
    %4662 = vmatpush1.bf16.xpose.msra.mxu0 %v4645
    %4663 = vmatprep.subr.bf16.mxu0 0
    %4664 = vmatpush1.bf16.xpose.msra.mxu0 0
    %4665 = vmatprep.subr.bf16.mxu0 0
    %4666 = vmatpush1.bf16.xpose.msra.mxu0 0
    %4667 = vmatprep.subr.bf16.mxu0 0
    %4668 = vmatpush1.bf16.xpose.msra.mxu0 0
    %4669 = vmatprep.subr.bf16.mxu0 0
    %4670 = vmatpush1.bf16.xpose.msra.mxu0 0
    %4671 = vmatprep.subr.bf16.mxu0 0
    %4672 = vmatpush1.bf16.xpose.msra.mxu0 0
    %4673 = vmatprep.subr.bf16.mxu0 0
    %4674 = vmatpush1.bf16.xpose.msra.mxu0 0
    %4675 = vmatprep.subr.bf16.mxu0 0
    %4676 = vmatpush1.bf16.xpose.msra.mxu0 0
    %4677 = vmatprep.subr.bf16.mxu0 0
    %4678 = vmatpush1.bf16.xpose.msra.mxu0 0
    %4679 = vmatprep.mubr.bf16.mxu0 0
    %4680 = vmatmul.mubr.bf16.gmra.mrb[0].mxu0 %v4618
    %v4681 = vpop.f32.mrb[0].mxu0
    %v4682 = vadd.f32 %v4613, %v4681
    %v4683 = vpop.f32.mrb[0].mxu0
    %v4684 = vpop.f32.mrb[0].mxu0
    %v4685 = vadd.f32 %v4614, %v4684
    %v4686 = vpop.f32.mrb[0].mxu0
    %4687 = vmatprep.mubr.bf16.mxu0 0
    %4688 = vmatmul.mubr.bf16.gmra.mrb[0].mxu0 %v4621
    %v4689 = vpop.f32.mrb[0].mxu0
    %v4690 = vadd.f32 %v4615, %v4689
    %v4691 = vpop.f32.mrb[0].mxu0
    %v4692 = vpop.f32.mrb[0].mxu0
    %v4693 = vadd.f32 %v4616, %v4692
    %v4694 = vpop.f32.mrb[0].mxu0
    %4695 = vdwg.mxu0
    %4696 = vmax.xlane.f32.xlu0 %v4682
    %v4697 = vpop.xlane.xlu0 %4696
    %4698 = vmax.xlane.f32.xlu0 %v4685
    %v4699 = vpop.xlane.xlu0 %4698
    %4700 = vmax.xlane.f32.xlu0 %v4690
    %v4701 = vpop.xlane.xlu0 %4700
    %4702 = vmax.xlane.f32.xlu0 %v4693
    %v4703 = vpop.xlane.xlu0 %4702
    %v4704 = vsub.f32 %v4682, %v4697
    %v4705 = vsub.f32 %v4685, %v4699
    %v4706 = vsub.f32 %v4690, %v4701
    %v4707 = vsub.f32 %v4693, %v4703
    %v4708 = vmul.f32 %v4704, 1.442695
    %v4709 = vpow.pop %v4708
    %v4710 = vmul.f32 %v4705, 1.442695
    %v4711 = vpow.pop %v4710
    %v4712 = vmul.f32 %v4706, 1.442695
    %v4713 = vpow.pop %v4712
    %v4714 = vmul.f32 %v4707, 1.442695
    %v4715 = vpow.pop %v4714
    %4716 = vmatprep.subr.mxu0 0.0
    %4717 = vmatpush1.msra.mxu0 %v89
    %4718 = vmatprep.subr.mxu0 0.0
    %4719 = vmatpush1.msra.mxu0 %v90
    %4720 = vmatprep.subr.mxu0 0.0
    %4721 = vmatpush1.msra.mxu0 %v91
    %4722 = vmatprep.subr.mxu0 0.0
    %4723 = vmatpush1.msra.mxu0 %v92
    %4724 = vmatprep.subr.mxu0 0.0
    %4725 = vmatpush1.msra.mxu0 %v93
    %4726 = vmatprep.subr.mxu0 0.0
    %4727 = vmatpush1.msra.mxu0 %v94
    %4728 = vmatprep.subr.mxu0 0.0
    %4729 = vmatpush1.msra.mxu0 %v95
    %4730 = vmatprep.subr.mxu0 0.0
    %4731 = vmatpush1.msra.mxu0 %v96
    %4732 = vmatprep.subr.mxu0 0.0
    %4733 = vmatpush1.msra.mxu0 %v97
    %4734 = vmatprep.subr.mxu0 0.0
    %4735 = vmatpush1.msra.mxu0 %v98
    %4736 = vmatprep.subr.mxu0 0.0
    %4737 = vmatpush1.msra.mxu0 %v99
    %4738 = vmatprep.subr.mxu0 0.0
    %4739 = vmatpush1.msra.mxu0 %v100
    %4740 = vmatprep.subr.mxu0 0.0
    %4741 = vmatpush1.msra.mxu0 %v101
    %4742 = vmatprep.subr.mxu0 0.0
    %4743 = vmatpush1.msra.mxu0 %v102
    %4744 = vmatprep.subr.mxu0 0.0
    %4745 = vmatpush1.msra.mxu0 %v103
    %4746 = vmatprep.subr.mxu0 0.0
    %4747 = vmatpush1.msra.mxu0 %v104
    %4748 = vmatprep.subr.mxu0 0.0
    %4749 = vmatpush1.msra.mxu0 0.0
    %4750 = vmatprep.subr.mxu0 0.0
    %4751 = vmatpush1.msra.mxu0 0.0
    %4752 = vmatprep.subr.mxu0 0.0
    %4753 = vmatpush1.msra.mxu0 0.0
    %4754 = vmatprep.subr.mxu0 0.0
    %4755 = vmatpush1.msra.mxu0 0.0
    %4756 = vmatprep.subr.mxu0 0.0
    %4757 = vmatpush1.msra.mxu0 0.0
    %4758 = vmatprep.subr.mxu0 0.0
    %4759 = vmatpush1.msra.mxu0 0.0
    %4760 = vmatprep.subr.mxu0 0.0
    %4761 = vmatpush1.msra.mxu0 0.0
    %4762 = vmatprep.subr.mxu0 0.0
    %4763 = vmatpush1.msra.mxu0 0.0
    %4764 = vmatprep.subr.mxu0 0.0
    %4765 = vmatpush1.msra.mxu0 0.0
    %4766 = vmatprep.subr.mxu0 0.0
    %4767 = vmatpush1.msra.mxu0 0.0
    %4768 = vmatprep.subr.mxu0 0.0
    %4769 = vmatpush1.msra.mxu0 0.0
    %4770 = vmatprep.subr.mxu0 0.0
    %4771 = vmatpush1.msra.mxu0 0.0
    %4772 = vmatprep.subr.mxu0 0.0
    %4773 = vmatpush1.msra.mxu0 0.0
    %4774 = vmatprep.subr.mxu0 0.0
    %4775 = vmatpush1.msra.mxu0 0.0
    %4776 = vmatprep.subr.mxu0 0.0
    %4777 = vmatpush1.msra.mxu0 0.0
    %4778 = vmatprep.subr.mxu0 0.0
    %4779 = vmatpush1.msra.mxu0 0.0
    %4780 = vmatprep.mubr.f32.mxu0 0.0
    %4781 = vmatmul.mubr.f32.gmra.mrb[0].mxu0 %v4709
    %v4782 = vpop.f32.mrb[0].mxu0
    %v4783 = vadd.f32 0.0, %v4782
    %v4784 = vpop.f32.mrb[0].mxu0
    %4785 = vmatprep.mubr.f32.mxu0 0.0
    %4786 = vmatmul.mubr.f32.gmra.mrb[0].mxu0 %v4711
    %v4787 = vpop.f32.mrb[0].mxu0
    %v4788 = vadd.f32 0.0, %v4787
    %v4789 = vpop.f32.mrb[0].mxu0
    %4790 = vmatprep.mubr.f32.mxu0 0.0
    %4791 = vmatmul.mubr.f32.gmra.mrb[0].mxu0 %v4713
    %v4792 = vpop.f32.mrb[0].mxu0
    %v4793 = vadd.f32 0.0, %v4792
    %v4794 = vpop.f32.mrb[0].mxu0
    %4795 = vmatprep.mubr.f32.mxu0 0.0
    %4796 = vmatmul.mubr.f32.gmra.mrb[0].mxu0 %v4715
    %v4797 = vpop.f32.mrb[0].mxu0
    %v4798 = vadd.f32 0.0, %v4797
    %v4799 = vpop.f32.mrb[0].mxu0
    %4800 = vdwg.mxu0
    %v4801 = vrcp.pop %v4783
    %v4802 = vrcp.pop %v4788
    %v4803 = vrcp.pop %v4793
    %v4804 = vrcp.pop %v4798
    %v4805 = vmul.f32 %v4709, %v4801
    %v4806 = vmul.f32 %v4711, %v4802
    %v4807 = vmul.f32 %v4713, %v4803
    %v4808 = vmul.f32 %v4715, %v4804
    %v4809 = vpack.c.bf16 %v4806, %v4805
    %v4810 = vpack.c.bf16 %v4808, %v4807
    %v4811 = vpack.c.bf16 %v4587, %v4586
    %v4812 = vpack.c.bf16 %v4589, %v4588
    %v4813 = vpack.c.bf16 %v4591, %v4590
    %v4814 = vpack.c.bf16 %v4593, %v4592
    %v4815 = vpack.c.bf16 %v4595, %v4594
    %v4816 = vpack.c.bf16 %v4597, %v4596
    %v4817 = vpack.c.bf16 %v4599, %v4598
    %v4818 = vpack.c.bf16 %v4601, %v4600
    %4819 = vmatprep.subr.bf16.mxu0 0
    %4820 = vmatpush1.bf16.msra.mxu0 %v4811
    %4821 = vmatprep.subr.bf16.mxu0 0
    %4822 = vmatpush1.bf16.msra.mxu0 %v4812
    %4823 = vmatprep.subr.bf16.mxu0 0
    %4824 = vmatpush1.bf16.msra.mxu0 %v4813
    %4825 = vmatprep.subr.bf16.mxu0 0
    %4826 = vmatpush1.bf16.msra.mxu0 %v4814
    %4827 = vmatprep.subr.bf16.mxu0 0
    %4828 = vmatpush1.bf16.msra.mxu0 %v4815
    %4829 = vmatprep.subr.bf16.mxu0 0
    %4830 = vmatpush1.bf16.msra.mxu0 %v4816
    %4831 = vmatprep.subr.bf16.mxu0 0
    %4832 = vmatpush1.bf16.msra.mxu0 %v4817
    %4833 = vmatprep.subr.bf16.mxu0 0
    %4834 = vmatpush1.bf16.msra.mxu0 %v4818
    %4835 = vmatprep.subr.bf16.mxu0 0
    %4836 = vmatpush1.bf16.msra.mxu0 0
    %4837 = vmatprep.subr.bf16.mxu0 0
    %4838 = vmatpush1.bf16.msra.mxu0 0
    %4839 = vmatprep.subr.bf16.mxu0 0
    %4840 = vmatpush1.bf16.msra.mxu0 0
    %4841 = vmatprep.subr.bf16.mxu0 0
    %4842 = vmatpush1.bf16.msra.mxu0 0
    %4843 = vmatprep.subr.bf16.mxu0 0
    %4844 = vmatpush1.bf16.msra.mxu0 0
    %4845 = vmatprep.subr.bf16.mxu0 0
    %4846 = vmatpush1.bf16.msra.mxu0 0
    %4847 = vmatprep.subr.bf16.mxu0 0
    %4848 = vmatpush1.bf16.msra.mxu0 0
    %4849 = vmatprep.subr.bf16.mxu0 0
    %4850 = vmatpush1.bf16.msra.mxu0 0
    %4851 = vmatprep.mubr.bf16.mxu0 0
    %4852 = vmatmul.mubr.bf16.gmra.mrb[0].mxu0 %v4809
    %v4853 = vpop.f32.mrb[0].mxu0
    %v4854 = vadd.f32 0.0, %v4853
    %v4855 = vpop.f32.mrb[0].mxu0
    %v4856 = vpop.f32.mrb[0].mxu0
    %v4857 = vadd.f32 0.0, %v4856
    %v4858 = vpop.f32.mrb[0].mxu0
    %4859 = vmatprep.mubr.bf16.mxu0 0
    %4860 = vmatmul.mubr.bf16.gmra.mrb[0].mxu0 %v4810
    %v4861 = vpop.f32.mrb[0].mxu0
    %v4862 = vadd.f32 0.0, %v4861
    %v4863 = vpop.f32.mrb[0].mxu0
    %v4864 = vpop.f32.mrb[0].mxu0
    %v4865 = vadd.f32 0.0, %v4864
    %v4866 = vpop.f32.mrb[0].mxu0
    %4867 = vdwg.mxu0
    %s4868 = scalar_lea.vmem %s12, 16
    %v4869 = vld [vmem:[%s4868] sm:$0xf]
    %v4870 = vld [vmem:[%s4868 + $0x4] sm:$0xf]
    %v4871 = vld [vmem:[%s4868 + $0x8] sm:$0xf]
    %v4872 = vld [vmem:[%s4868 + $0xc] sm:$0xf]
    %v4873 = vpack.c.bf16 %v4857, %v4854
    %v4874 = vpack.c.bf16 %v4865, %v4862
    %v4879 = vunpack.c.l.b16 %v4869
    %v4880 = vunpack.c.l.b16 %v4870
    %v4881 = vunpack.c.l.b16 %v4871
    %v4882 = vunpack.c.l.b16 %v4872
    %v4883 = vpack.c.b16 %v4880, %v4879
    %v4884 = vpack.c.b16 %v4882, %v4881
    %v4888 = vsel %vm3338, %v4873, 0
    %v4891 = vsel %vm3338, %v4874, 0
    %4893 = vmatprep.subr.bf16.mxu0 0
    %4894 = vmatpush1.bf16.msra.mxu0 %v4883
    %4895 = vmatprep.subr.bf16.mxu0 0
    %4896 = vmatpush1.bf16.msra.mxu0 %v4884
    %4897 = vmatprep.subr.bf16.mxu0 0
    %4898 = vmatpush1.bf16.msra.mxu0 0
    %4899 = vmatprep.subr.bf16.mxu0 0
    %4900 = vmatpush1.bf16.msra.mxu0 0
    %4901 = vmatprep.subr.bf16.mxu0 0
    %4902 = vmatpush1.bf16.msra.mxu0 0
    %4903 = vmatprep.subr.bf16.mxu0 0
    %4904 = vmatpush1.bf16.msra.mxu0 0
    %4905 = vmatprep.subr.bf16.mxu0 0
    %4906 = vmatpush1.bf16.msra.mxu0 0
    %4907 = vmatprep.subr.bf16.mxu0 0
    %4908 = vmatpush1.bf16.msra.mxu0 0
    %4909 = vmatprep.subr.bf16.mxu0 0
    %4910 = vmatpush1.bf16.msra.mxu0 0
    %4911 = vmatprep.subr.bf16.mxu0 0
    %4912 = vmatpush1.bf16.msra.mxu0 0
    %4913 = vmatprep.subr.bf16.mxu0 0
    %4914 = vmatpush1.bf16.msra.mxu0 0
    %4915 = vmatprep.subr.bf16.mxu0 0
    %4916 = vmatpush1.bf16.msra.mxu0 0
    %4917 = vmatprep.subr.bf16.mxu0 0
    %4918 = vmatpush1.bf16.msra.mxu0 0
    %4919 = vmatprep.subr.bf16.mxu0 0
    %4920 = vmatpush1.bf16.msra.mxu0 0
    %4921 = vmatprep.subr.bf16.mxu0 0
    %4922 = vmatpush1.bf16.msra.mxu0 0
    %4923 = vmatprep.subr.bf16.mxu0 0
    %4924 = vmatpush1.bf16.msra.mxu0 0
    %4925 = vmatprep.mubr.bf16.mxu0 0
    %4926 = vmatmul.mubr.bf16.gmra.mrb[0].mxu0 %v4888
    %v4927 = vpop.f32.mrb[0].mxu0
    %v4928 = vadd.f32 0.0, %v4927
    %v4929 = vpop.f32.mrb[0].mxu0
    %v4930 = vpop.f32.mrb[0].mxu0
    %v4931 = vadd.f32 0.0, %v4930
    %v4932 = vpop.f32.mrb[0].mxu0
    %4933 = vmatprep.mubr.bf16.mxu0 0
    %4934 = vmatmul.mubr.bf16.gmra.mrb[0].mxu0 %v4891
    %v4935 = vpop.f32.mrb[0].mxu0
    %v4936 = vadd.f32 0.0, %v4935
    %v4937 = vpop.f32.mrb[0].mxu0
    %v4938 = vpop.f32.mrb[0].mxu0
    %v4939 = vadd.f32 0.0, %v4938
    %v4940 = vpop.f32.mrb[0].mxu0
    %4941 = vdwg.mxu0
    %v4942 = vadd.f32 %v4284, %v4928
    %v4943 = vadd.f32 %v4285, %v4931
    %v4944 = vadd.f32 %v4286, %v4936
    %v4945 = vadd.f32 %v4287, %v4939
    %s4946 = scalar_lea.vmem %s13, 1
    %v4947 = vld [vmem:[%s4946] sm:$0x1]
    %v4949 = vlaneseq
    %v4950 = vshrl.u32 %v4949, 7
    %v4951 = vsub.s32 0, %v4950
    %v4952 = vrot.slane %v4947, %v4951
    %v4954 = vadd.f32 %v4942, %v4952
    %v4955 = vadd.f32 %v4943, %v4952
    %v4956 = vadd.f32 %v4944, %v4952
    %v4957 = vadd.f32 %v4945, %v4952
    %s4958 = scalar_lea.vmem %s14, 1
    %v4959 = vld [vmem:[%s4958] sm:$0x1]
    %s4960 = scalar_lea.vmem %s15, 1
    %v4961 = vld [vmem:[%s4960] sm:$0x1]
    %v4962 = vsel %vm3338, %v4954, 0.0
    %4963 = vadd.xlane.f32.xlu0 %v4962
    %v4964 = vpop.xlane.xlu0 %4963
    %v4965 = vsel %vm3338, %v4955, 0.0
    %4966 = vadd.xlane.f32.xlu0 %v4965
    %v4967 = vpop.xlane.xlu0 %4966
    %v4968 = vsel %vm3338, %v4956, 0.0
    %4969 = vadd.xlane.f32.xlu0 %v4968
    %v4970 = vpop.xlane.xlu0 %4969
    %v4971 = vsel %vm3338, %v4957, 0.0
    %4972 = vadd.xlane.f32.xlu0 %v4971
    %v4973 = vpop.xlane.xlu0 %4972
    %v4974 = vmul.f32 %v4964, %v3351
    %v4975 = vmul.f32 %v4967, %v3351
    %v4976 = vmul.f32 %v4970, %v3351
    %v4977 = vmul.f32 %v4973, %v3351
    %v4978 = vsub.f32 %v4954, %v4974
    %v4979 = vsub.f32 %v4955, %v4975
    %v4980 = vsub.f32 %v4956, %v4976
    %v4981 = vsub.f32 %v4957, %v4977
    %v4982 = vmul.f32 %v4978, %v4978
    %v4983 = vmul.f32 %v4979, %v4979
    %v4984 = vmul.f32 %v4980, %v4980
    %v4985 = vmul.f32 %v4981, %v4981
    %v4986 = vsel %vm3338, %v4982, 0.0
    %4987 = vadd.xlane.f32.xlu0 %v4986
    %v4988 = vpop.xlane.xlu0 %4987
    %v4989 = vsel %vm3338, %v4983, 0.0
    %4990 = vadd.xlane.f32.xlu0 %v4989
    %v4991 = vpop.xlane.xlu0 %4990
    %v4992 = vsel %vm3338, %v4984, 0.0
    %4993 = vadd.xlane.f32.xlu0 %v4992
    %v4994 = vpop.xlane.xlu0 %4993
    %v4995 = vsel %vm3338, %v4985, 0.0
    %4996 = vadd.xlane.f32.xlu0 %v4995
    %v4997 = vpop.xlane.xlu0 %4996
    %v4998 = vmul.f32 %v4988, %v3351
    %v4999 = vmul.f32 %v4991, %v3351
    %v5000 = vmul.f32 %v4994, %v3351
    %v5001 = vmul.f32 %v4997, %v3351
    %v5002 = vadd.f32 %v4998, 1e-05
    %v5003 = vadd.f32 %v4999, 1e-05
    %v5004 = vadd.f32 %v5000, 1e-05
    %v5005 = vadd.f32 %v5001, 1e-05
    %v5006 = vrsqrt.pop %v5002
    %v5007 = vrsqrt.pop %v5003
    %v5008 = vrsqrt.pop %v5004
    %v5009 = vrsqrt.pop %v5005
    %v5010 = vmul.f32 %v4978, %v5006
    %v5011 = vmul.f32 %v4979, %v5007
    %v5012 = vmul.f32 %v4980, %v5008
    %v5013 = vmul.f32 %v4981, %v5009
    %v5015 = vlaneseq
    %v5016 = vshrl.u32 %v5015, 7
    %v5017 = vsub.s32 0, %v5016
    %v5018 = vrot.slane %v4959, %v5017
    %v5020 = vmul.f32 %v5010, %v5018
    %v5021 = vmul.f32 %v5011, %v5018
    %v5022 = vmul.f32 %v5012, %v5018
    %v5023 = vmul.f32 %v5013, %v5018
    %v5025 = vlaneseq
    %v5026 = vshrl.u32 %v5025, 7
    %v5027 = vsub.s32 0, %v5026
    %v5028 = vrot.slane %v4961, %v5027
    %v5030 = vadd.f32 %v5020, %v5028
    %v5031 = vadd.f32 %v5021, %v5028
    %v5032 = vadd.f32 %v5022, %v5028
    %v5033 = vadd.f32 %v5023, %v5028
    %s5034 = scalar_lea.vmem %s16, 16
    %v5035 = vld [vmem:[%s5034] sm:$0xf]
    %v5036 = vld [vmem:[%s5034 + $0x4] sm:$0xf]
    %v5037 = vld [vmem:[%s5034 + $0x8] sm:$0xf]
    %v5038 = vld [vmem:[%s5034 + $0xc] sm:$0xf]
    %v5039 = vpack.c.bf16 %v5031, %v5030
    %v5040 = vpack.c.bf16 %v5033, %v5032
    %s5041 = scalar_lea.vmem %s17, 1
    %v5042 = vld [vmem:[%s5041] sm:$0x1]
    %v5044 = vlaneseq
    %v5045 = vshrl.u32 %v5044, 7
    %v5046 = vsub.s32 0, %v5045
    %v5047 = vrot.slane %v5042, %v5046
    %v5053 = vunpack.c.l.b16 %v5035
    %v5054 = vunpack.c.l.b16 %v5036
    %v5055 = vunpack.c.l.b16 %v5037
    %v5056 = vunpack.c.l.b16 %v5038
    %v5057 = vpack.c.b16 %v5054, %v5053
    %v5058 = vpack.c.b16 %v5056, %v5055
    %v5062 = vsel %vm3338, %v5039, 0
    %v5065 = vsel %vm3338, %v5040, 0
    %5067 = vmatprep.subr.bf16.mxu0 0
    %5068 = vmatpush1.bf16.msra.mxu0 %v5057
    %5069 = vmatprep.subr.bf16.mxu0 0
    %5070 = vmatpush1.bf16.msra.mxu0 %v5058
    %5071 = vmatprep.subr.bf16.mxu0 0
    %5072 = vmatpush1.bf16.msra.mxu0 0
    %5073 = vmatprep.subr.bf16.mxu0 0
    %5074 = vmatpush1.bf16.msra.mxu0 0
    %5075 = vmatprep.subr.bf16.mxu0 0
    %5076 = vmatpush1.bf16.msra.mxu0 0
    %5077 = vmatprep.subr.bf16.mxu0 0
    %5078 = vmatpush1.bf16.msra.mxu0 0
    %5079 = vmatprep.subr.bf16.mxu0 0
    %5080 = vmatpush1.bf16.msra.mxu0 0
    %5081 = vmatprep.subr.bf16.mxu0 0
    %5082 = vmatpush1.bf16.msra.mxu0 0
    %5083 = vmatprep.subr.bf16.mxu0 0
    %5084 = vmatpush1.bf16.msra.mxu0 0
    %5085 = vmatprep.subr.bf16.mxu0 0
    %5086 = vmatpush1.bf16.msra.mxu0 0
    %5087 = vmatprep.subr.bf16.mxu0 0
    %5088 = vmatpush1.bf16.msra.mxu0 0
    %5089 = vmatprep.subr.bf16.mxu0 0
    %5090 = vmatpush1.bf16.msra.mxu0 0
    %5091 = vmatprep.subr.bf16.mxu0 0
    %5092 = vmatpush1.bf16.msra.mxu0 0
    %5093 = vmatprep.subr.bf16.mxu0 0
    %5094 = vmatpush1.bf16.msra.mxu0 0
    %5095 = vmatprep.subr.bf16.mxu0 0
    %5096 = vmatpush1.bf16.msra.mxu0 0
    %5097 = vmatprep.subr.bf16.mxu0 0
    %5098 = vmatpush1.bf16.msra.mxu0 0
    %5099 = vmatprep.mubr.bf16.mxu0 0
    %5100 = vmatmul.mubr.bf16.gmra.mrb[0].mxu0 %v5062
    %v5101 = vpop.f32.mrb[0].mxu0
    %v5102 = vadd.f32 %v5047, %v5101
    %v5103 = vpop.f32.mrb[0].mxu0
    %v5104 = vpop.f32.mrb[0].mxu0
    %v5105 = vadd.f32 %v5047, %v5104
    %v5106 = vpop.f32.mrb[0].mxu0
    %5107 = vmatprep.mubr.bf16.mxu0 0
    %5108 = vmatmul.mubr.bf16.gmra.mrb[0].mxu0 %v5065
    %v5109 = vpop.f32.mrb[0].mxu0
    %v5110 = vadd.f32 %v5047, %v5109
    %v5111 = vpop.f32.mrb[0].mxu0
    %v5112 = vpop.f32.mrb[0].mxu0
    %v5113 = vadd.f32 %v5047, %v5112
    %v5114 = vpop.f32.mrb[0].mxu0
    %5115 = vdwg.mxu0
    %v5116 = vmax.f32 %v5102, 0.0
    %v5117 = vmax.f32 %v5105, 0.0
    %v5118 = vmax.f32 %v5110, 0.0
    %v5119 = vmax.f32 %v5113, 0.0
    %s5120 = scalar_lea.vmem %s18, 64
    %v5121 = vld [vmem:[%s5120] sm:$0xf]
    %v5122 = vld [vmem:[%s5120 + $0x4] sm:$0xf]
    %v5123 = vld [vmem:[%s5120 + $0x8] sm:$0xf]
    %v5124 = vld [vmem:[%s5120 + $0xc] sm:$0xf]
    %v5125 = vld [vmem:[%s5120 + $0x10] sm:$0xf]
    %v5126 = vld [vmem:[%s5120 + $0x14] sm:$0xf]
    %v5127 = vld [vmem:[%s5120 + $0x18] sm:$0xf]
    %v5128 = vld [vmem:[%s5120 + $0x1c] sm:$0xf]
    %v5129 = vld [vmem:[%s5120 + $0x20] sm:$0xf]
    %v5130 = vld [vmem:[%s5120 + $0x24] sm:$0xf]
    %v5131 = vld [vmem:[%s5120 + $0x28] sm:$0xf]
    %v5132 = vld [vmem:[%s5120 + $0x2c] sm:$0xf]
    %v5133 = vld [vmem:[%s5120 + $0x30] sm:$0xf]
    %v5134 = vld [vmem:[%s5120 + $0x34] sm:$0xf]
    %v5135 = vld [vmem:[%s5120 + $0x38] sm:$0xf]
    %v5136 = vld [vmem:[%s5120 + $0x3c] sm:$0xf]
    %v5137 = vpack.c.bf16 %v5117, %v5116
    %v5138 = vpack.c.bf16 %v5119, %v5118
    %v5155 = vunpack.c.l.b16 %v5121
    %v5156 = vunpack.c.l.b16 %v5122
    %v5157 = vunpack.c.l.b16 %v5123
    %v5158 = vunpack.c.l.b16 %v5124
    %v5159 = vunpack.c.l.b16 %v5125
    %v5160 = vunpack.c.l.b16 %v5126
    %v5161 = vunpack.c.l.b16 %v5127
    %v5162 = vunpack.c.l.b16 %v5128
    %v5163 = vunpack.c.l.b16 %v5129
    %v5164 = vunpack.c.l.b16 %v5130
    %v5165 = vunpack.c.l.b16 %v5131
    %v5166 = vunpack.c.l.b16 %v5132
    %v5167 = vunpack.c.l.b16 %v5133
    %v5168 = vunpack.c.l.b16 %v5134
    %v5169 = vunpack.c.l.b16 %v5135
    %v5170 = vunpack.c.l.b16 %v5136
    %v5171 = vpack.c.b16 %v5156, %v5155
    %v5172 = vpack.c.b16 %v5158, %v5157
    %v5173 = vpack.c.b16 %v5160, %v5159
    %v5174 = vpack.c.b16 %v5162, %v5161
    %v5175 = vpack.c.b16 %v5164, %v5163
    %v5176 = vpack.c.b16 %v5166, %v5165
    %v5177 = vpack.c.b16 %v5168, %v5167
    %v5178 = vpack.c.b16 %v5170, %v5169
    %5187 = vmatprep.subr.bf16.mxu0 0
    %5188 = vmatpush1.bf16.msra.mxu0 %v5171
    %5189 = vmatprep.subr.bf16.mxu0 0
    %5190 = vmatpush1.bf16.msra.mxu0 %v5172
    %5191 = vmatprep.subr.bf16.mxu0 0
    %5192 = vmatpush1.bf16.msra.mxu0 %v5173
    %5193 = vmatprep.subr.bf16.mxu0 0
    %5194 = vmatpush1.bf16.msra.mxu0 %v5174
    %5195 = vmatprep.subr.bf16.mxu0 0
    %5196 = vmatpush1.bf16.msra.mxu0 %v5175
    %5197 = vmatprep.subr.bf16.mxu0 0
    %5198 = vmatpush1.bf16.msra.mxu0 %v5176
    %5199 = vmatprep.subr.bf16.mxu0 0
    %5200 = vmatpush1.bf16.msra.mxu0 %v5177
    %5201 = vmatprep.subr.bf16.mxu0 0
    %5202 = vmatpush1.bf16.msra.mxu0 %v5178
    %5203 = vmatprep.subr.bf16.mxu0 0
    %5204 = vmatpush1.bf16.msra.mxu0 0
    %5205 = vmatprep.subr.bf16.mxu0 0
    %5206 = vmatpush1.bf16.msra.mxu0 0
    %5207 = vmatprep.subr.bf16.mxu0 0
    %5208 = vmatpush1.bf16.msra.mxu0 0
    %5209 = vmatprep.subr.bf16.mxu0 0
    %5210 = vmatpush1.bf16.msra.mxu0 0
    %5211 = vmatprep.subr.bf16.mxu0 0
    %5212 = vmatpush1.bf16.msra.mxu0 0
    %5213 = vmatprep.subr.bf16.mxu0 0
    %5214 = vmatpush1.bf16.msra.mxu0 0
    %5215 = vmatprep.subr.bf16.mxu0 0
    %5216 = vmatpush1.bf16.msra.mxu0 0
    %5217 = vmatprep.subr.bf16.mxu0 0
    %5218 = vmatpush1.bf16.msra.mxu0 0
    %5219 = vmatprep.mubr.bf16.mxu0 0
    %5220 = vmatmul.mubr.bf16.gmra.mrb[0].mxu0 %v5137
    %v5221 = vpop.f32.mrb[0].mxu0
    %v5222 = vadd.f32 0.0, %v5221
    %v5223 = vpop.f32.mrb[0].mxu0
    %v5224 = vpop.f32.mrb[0].mxu0
    %v5225 = vadd.f32 0.0, %v5224
    %v5226 = vpop.f32.mrb[0].mxu0
    %5227 = vmatprep.mubr.bf16.mxu0 0
    %5228 = vmatmul.mubr.bf16.gmra.mrb[0].mxu0 %v5138
    %v5229 = vpop.f32.mrb[0].mxu0
    %v5230 = vadd.f32 0.0, %v5229
    %v5231 = vpop.f32.mrb[0].mxu0
    %v5232 = vpop.f32.mrb[0].mxu0
    %v5233 = vadd.f32 0.0, %v5232
    %v5234 = vpop.f32.mrb[0].mxu0
    %5235 = vdwg.mxu0
    %v5236 = vadd.f32 %v5030, %v5222
    %v5237 = vadd.f32 %v5031, %v5225
    %v5238 = vadd.f32 %v5032, %v5230
    %v5239 = vadd.f32 %v5033, %v5233
    %s5240 = scalar_lea.vmem %s19, 1
    %v5241 = vld [vmem:[%s5240] sm:$0x1]
    %v5243 = vlaneseq
    %v5244 = vshrl.u32 %v5243, 7
    %v5245 = vsub.s32 0, %v5244
    %v5246 = vrot.slane %v5241, %v5245
    %v5248 = vadd.f32 %v5236, %v5246
    %v5249 = vadd.f32 %v5237, %v5246
    %v5250 = vadd.f32 %v5238, %v5246
    %v5251 = vadd.f32 %v5239, %v5246
    %v5252 = vld [vmem:[%s20] sm:$0x1]
    %v5253 = vld [vmem:[%s21] sm:$0x1]
    %v5254 = vsel %vm3338, %v5248, 0.0
    %5255 = vadd.xlane.f32.xlu0 %v5254
    %v5256 = vpop.xlane.xlu0 %5255
    %v5257 = vsel %vm3338, %v5249, 0.0
    %5258 = vadd.xlane.f32.xlu0 %v5257
    %v5259 = vpop.xlane.xlu0 %5258
    %v5260 = vsel %vm3338, %v5250, 0.0
    %5261 = vadd.xlane.f32.xlu0 %v5260
    %v5262 = vpop.xlane.xlu0 %5261
    %v5263 = vsel %vm3338, %v5251, 0.0
    %5264 = vadd.xlane.f32.xlu0 %v5263
    %v5265 = vpop.xlane.xlu0 %5264
    %v5266 = vmul.f32 %v5256, %v3351
    %v5267 = vmul.f32 %v5259, %v3351
    %v5268 = vmul.f32 %v5262, %v3351
    %v5269 = vmul.f32 %v5265, %v3351
    %v5270 = vsub.f32 %v5248, %v5266
    %v5271 = vsub.f32 %v5249, %v5267
    %v5272 = vsub.f32 %v5250, %v5268
    %v5273 = vsub.f32 %v5251, %v5269
    %v5274 = vmul.f32 %v5270, %v5270
    %v5275 = vmul.f32 %v5271, %v5271
    %v5276 = vmul.f32 %v5272, %v5272
    %v5277 = vmul.f32 %v5273, %v5273
    %v5278 = vsel %vm3338, %v5274, 0.0
    %5279 = vadd.xlane.f32.xlu0 %v5278
    %v5280 = vpop.xlane.xlu0 %5279
    %v5281 = vsel %vm3338, %v5275, 0.0
    %5282 = vadd.xlane.f32.xlu0 %v5281
    %v5283 = vpop.xlane.xlu0 %5282
    %v5284 = vsel %vm3338, %v5276, 0.0
    %5285 = vadd.xlane.f32.xlu0 %v5284
    %v5286 = vpop.xlane.xlu0 %5285
    %v5287 = vsel %vm3338, %v5277, 0.0
    %5288 = vadd.xlane.f32.xlu0 %v5287
    %v5289 = vpop.xlane.xlu0 %5288
    %v5290 = vmul.f32 %v5280, %v3351
    %v5291 = vmul.f32 %v5283, %v3351
    %v5292 = vmul.f32 %v5286, %v3351
    %v5293 = vmul.f32 %v5289, %v3351
    %v5294 = vadd.f32 %v5290, 1e-05
    %v5295 = vadd.f32 %v5291, 1e-05
    %v5296 = vadd.f32 %v5292, 1e-05
    %v5297 = vadd.f32 %v5293, 1e-05
    %v5298 = vrsqrt.pop %v5294
    %v5299 = vrsqrt.pop %v5295
    %v5300 = vrsqrt.pop %v5296
    %v5301 = vrsqrt.pop %v5297
    %v5302 = vmul.f32 %v5270, %v5298
    %v5303 = vmul.f32 %v5271, %v5299
    %v5304 = vmul.f32 %v5272, %v5300
    %v5305 = vmul.f32 %v5273, %v5301
    %v5307 = vlaneseq
    %v5308 = vshrl.u32 %v5307, 7
    %v5309 = vsub.s32 0, %v5308
    %v5310 = vrot.slane %v5252, %v5309
    %v5312 = vmul.f32 %v5302, %v5310
    %v5313 = vmul.f32 %v5303, %v5310
    %v5314 = vmul.f32 %v5304, %v5310
    %v5315 = vmul.f32 %v5305, %v5310
    %v5317 = vlaneseq
    %v5318 = vshrl.u32 %v5317, 7
    %v5319 = vsub.s32 0, %v5318
    %v5320 = vrot.slane %v5253, %v5319
    %v5322 = vadd.f32 %v5312, %v5320
    %v5323 = vadd.f32 %v5313, %v5320
    %v5324 = vadd.f32 %v5314, %v5320
    %v5325 = vadd.f32 %v5315, %v5320
    %5326 = vst.msk [vmem:[#allocation2] sm:$0xff] %vm3338, %v5322
    %5327 = vst.msk [vmem:[#allocation2 + $0x8] sm:$0xff] %vm3338, %v5323
    %5328 = vst.msk [vmem:[#allocation2 + $0x10] sm:$0xff] %vm3338, %v5324
    %5329 = vst.msk [vmem:[#allocation2 + $0x18] sm:$0xff] %vm3338, %v5325
    // Predicated region
    $region90: #{vision_transformer.1} parent=1 // pred_check
      _
    $region91: #{vision_transformer.1} parent=1 // pred_check_branch
      %5331 = sbr.rel (0) target = $region93
    $region92: #{vision_transformer.1} parent=1 // pred_region
      %s5333 = ssub.s32 512, 512
      %5334 = vsyncadd [#allocation3], %s5333
      %s5335 = sshll.u32 [#allocation2], 4
      %s5336 = int_to_ptr.vmem [resolvable:$true] %s5335
      %5341 = dma.vmem_to_hbm [thread:$0]  %s5336, 512, %s22, [#allocation3], 128, 128, 8
    $region93: #{vision_transformer.1} parent=1 // pred_fallthru
      _
    // Predicated region
    $region94: #{vision_transformer.1} parent=1 // pred_check
      _
    $region95: #{vision_transformer.1} parent=1 // pred_check_branch
      %5343 = sbr.rel (0) target = $region97
    $region96: #{vision_transformer.1} parent=1 // pred_region
      %5344 = dma.done [#allocation3], 512
    $region97: #{vision_transformer.1} parent=1 // pred_fallthru
      _
    %5345 = vsyncpa [#allocation3], 1

</llo_original>
